<compile_context>
chip_gen: v6e
topology: v6e:2x2x1
jax: 0.10.0
libtpu: 0.0.40
codegen_flags: <defaults>
</compile_context>

<pallas_src>
import functools

import jax
import jax.numpy as jnp
import numpy as np
from jax.experimental import pallas as pl
from jax.experimental.pallas import tpu as pltpu

# Hidden sizes are hard-coded in the PyTorch module.
_H1, _H2 = 500, 100
_H1P, _H2P = 512, 128  # lane-dense padded sizes


def _round_up(x, m):
    return (x + m - 1) // m * m


# ----------------------------------------------------------------------------
# Kernel body: one batch tile per grid step; all weights VMEM-resident.
# ----------------------------------------------------------------------------
def _vae_kernel(
    x_ref, eps_ref,
    w1_ref, b1_ref,            # encfc1:  Lp -> 512            (bf16 weight / f32 bias)
    w2_ref, b2_ref,            # encfc2:  512 -> 128
    w3_ref, b3_ref,            # encfc31|encfc32 fused: 128 -> 2*d_pad
    wd3_ref, bd3_ref,          # decfc3:  d_pad -> 128
    wd2_ref, bd2_ref,          # decfc2:  128 -> 512
    wd1_ref, bd1_ref,          # decfc1:  512 -> Lp
    recon_ref, mulv_ref,
    *, d_pad,
):
    bf16 = jnp.bfloat16
    f32 = jnp.float32

    x = x_ref[...]  # already bf16

    # ---- encode ----
    h = jnp.dot(x, w1_ref[...], preferred_element_type=f32) + b1_ref[...]
    h = jnp.maximum(h, 0.0)                                              # F.relu
    h = jnp.dot(h.astype(bf16), w2_ref[...], preferred_element_type=f32) + b2_ref[...]
    h = jnp.maximum(h, 0.0)                                              # F.relu

    # Fused mu/logvar head: single (128, 2*d_pad) matmul; lane-aligned halves.
    mulv = jnp.dot(h.astype(bf16), w3_ref[...], preferred_element_type=f32) + b3_ref[...]
    mu = mulv[:, :d_pad]
    logvar = mulv[:, d_pad:]

    # ---- reparameterize: z = mu + eps * exp(0.5 * logvar) ----
    # Padded lanes: mu=0, logvar=0, eps=0  ->  z padded lanes are exactly 0.
    z = mu + eps_ref[...] * jnp.exp(0.5 * logvar)

    # ---- decode ----
    d = jnp.dot(z.astype(bf16), wd3_ref[...], preferred_element_type=f32) + bd3_ref[...]
    d = jnp.maximum(d, 0.0)
    d = jnp.dot(d.astype(bf16), wd2_ref[...], preferred_element_type=f32) + bd2_ref[...]
    d = jnp.maximum(d, 0.0)
    logits = jnp.dot(d.astype(bf16), wd1_ref[...], preferred_element_type=f32) + bd1_ref[...]

    recon_ref[...] = jax.nn.sigmoid(logits)                              # torch.sigmoid
    mulv_ref[...] = mulv


# ----------------------------------------------------------------------------
# Parameter prep: zero-pad to lane-dense shapes, fuse the two latent heads,
# cast weight matrices to bf16 (biases kept f32).
# ----------------------------------------------------------------------------
def _prepare_params(params, *, len_vector, d_latent, d_pad):
    (w1, b1, w2, b2, w31, b31, w32, b32, wd3, bd3, wd2, bd2, wd1, bd1) = params
    Lp = _round_up(len_vector, 128)
    bf16 = jnp.bfloat16
    f32 = jnp.float32

    def pad_w(w, rp, cp):
        r, c = w.shape
        return jnp.pad(w, ((0, rp - r), (0, cp - c)))

    def pad_b(b, cp):
        return jnp.pad(b, ((0, 0), (0, cp - b.shape[1])))

    # Each latent head padded to d_pad lanes, then concatenated -> (H2P, 2*d_pad).
    w3 = jnp.concatenate([pad_w(w31, _H2P, d_pad), pad_w(w32, _H2P, d_pad)], axis=1)
    b3 = jnp.concatenate([pad_b(b31, d_pad), pad_b(b32, d_pad)], axis=1)

    return (
        pad_w(w1, Lp, _H1P).astype(bf16),        pad_b(b1, _H1P).astype(f32),
        pad_w(w2, _H1P, _H2P).astype(bf16),      pad_b(b2, _H2P).astype(f32),
        w3.astype(bf16),                         b3.astype(f32),
        pad_w(wd3, d_pad, _H2P).astype(bf16),    pad_b(bd3, _H2P).astype(f32),
        pad_w(wd2, _H2P, _H1P).astype(bf16),     pad_b(bd2, _H1P).astype(f32),
        pad_w(wd1, _H1P, Lp).astype(bf16),       pad_b(bd1, Lp).astype(f32),
    )


def vae_forward(x, eps, params, *, len_vector, d_latent, batch_tile=256):
    """Pallas-backed equivalent of VAE.forward(x) -> (recon, mu, logvar)."""
    L = len_vector
    Lp = _round_up(L, 128)
    d_pad = _round_up(d_latent, 128)

    # Glue: x.view(-1, len_vector); cast to bf16 (only consumed by bf16 matmuls).
    x2d = x.reshape(-1, L).astype(jnp.bfloat16)
    B = x2d.shape[0]
    eps = eps.astype(jnp.float32)

    padded = _prepare_params(params, len_vector=L, d_latent=d_latent, d_pad=d_pad)
    weight_bytes = sum(int(p.size) * p.dtype.itemsize for p in padded)

    # Batch tile: multiple of 8 sublanes; auto-shrink until resident weights +
    # double-buffered IO tiles fit a v7x-safe VMEM budget.
    def footprint(tb):
        io = (tb * Lp * 2            # x tile (bf16)
              + tb * d_pad * 4       # eps tile (f32)
              + tb * Lp * 4          # recon tile (f32)
              + tb * 2 * d_pad * 4)  # mulv tile (f32)
        return weight_bytes + 2 * io  # double-buffered IO

    tb = max(8, min(_round_up(batch_tile, 8), _round_up(B, 8)))
    budget = 48 << 20
    while tb > 8 and footprint(tb) > budget:
        tb = max(8, _round_up(tb // 2, 8))

    Bp = _round_up(B, tb)
    grid = (Bp // tb,)

    xp = jnp.pad(x2d, ((0, Bp - B), (0, Lp - L)))
    epsp = jnp.pad(eps, ((0, Bp - B), (0, d_pad - d_latent)))

    # Weights: whole-array, VMEM-resident, loaded once for all tiles.
    weight_spec = pl.BlockSpec(memory_space=pltpu.MemorySpace.VMEM)
    in_specs = [
        pl.BlockSpec((tb, Lp), lambda i: (i, 0)),        # x tile (pipelined)
        pl.BlockSpec((tb, d_pad), lambda i: (i, 0)),     # eps tile (pipelined)
    ] + [weight_spec] * len(padded)

    out_specs = (
        pl.BlockSpec((tb, Lp), lambda i: (i, 0)),        # recon tile (lane-dense)
        pl.BlockSpec((tb, 2 * d_pad), lambda i: (i, 0)), # [mu | logvar] tile (lane-dense)
    )
    out_shape = (
        jax.ShapeDtypeStruct((Bp, Lp), jnp.float32),
        jax.ShapeDtypeStruct((Bp, 2 * d_pad), jnp.float32),
    )

    # VMEM budget: resident weights + double-buffered IO tiles + intermediate margin.
    vmem_limit = int(min(max(footprint(tb) + (8 << 20), 32 << 20), 56 << 20))

    flops = 2 * Bp * (Lp * _H1P + _H1P * _H2P + _H2P * 2 * d_pad
                      + d_pad * _H2P + _H2P * _H1P + _H1P * Lp)
    transcendentals = Bp * (Lp + d_pad)
    bytes_accessed = (int(xp.size) * 2 + int(epsp.size) * 4 + weight_bytes
                      + (Bp * Lp + Bp * 2 * d_pad) * 4)

    kernel = functools.partial(_vae_kernel, d_pad=d_pad)
    recon_p, mulv = pl.pallas_call(
        kernel,
        grid=grid,
        in_specs=in_specs,
        out_specs=out_specs,
        out_shape=out_shape,
        compiler_params=pltpu.CompilerParams(
            dimension_semantics=("parallel",),
            vmem_limit_bytes=vmem_limit,
        ),
        cost_estimate=pl.CostEstimate(
            flops=flops, transcendentals=transcendentals, bytes_accessed=bytes_accessed
        ),
    )(xp, epsp, *padded)

    recon = recon_p[:B, :L]
    mu = mulv[:B, :d_latent]
    logvar = mulv[:B, d_pad:d_pad + d_latent]
    return recon, mu, logvar


# ----------------------------------------------------------------------------
# Deterministic parameter initialization (PyTorch nn.Linear-style uniform).
# Weights are stored transposed relative to torch: shape (in_features, out_features).
# ----------------------------------------------------------------------------
def _init_linear(key, fan_in, fan_out):
    kw, kb = jax.random.split(key)
    bound = 1.0 / np.sqrt(fan_in)
    w = jax.random.uniform(kw, (fan_in, fan_out), jnp.float32, -bound, bound)
    b = jax.random.uniform(kb, (1, fan_out), jnp.float32, -bound, bound)
    return w, b


def init_vae_params(key, len_vector, d_latent):
    keys = jax.random.split(key, 7)
    w1, b1 = _init_linear(keys[0], len_vector, _H1)    # encfc1
    w2, b2 = _init_linear(keys[1], _H1, _H2)           # encfc2
    w31, b31 = _init_linear(keys[2], _H2, d_latent)    # encfc31
    w32, b32 = _init_linear(keys[3], _H2, d_latent)    # encfc32
    wd3, bd3 = _init_linear(keys[4], d_latent, _H2)    # decfc3
    wd2, bd2 = _init_linear(keys[5], _H2, _H1)         # decfc2
    wd1, bd1 = _init_linear(keys[6], _H1, len_vector)  # decfc1
    return (w1, b1, w2, b2, w31, b31, w32, b32, wd3, bd3, wd2, bd2, wd1, bd1)


# Pure-JAX reference (same bf16-weight / f32-accumulate recipe as the kernel).
def vae_forward_ref(x, eps, params, *, len_vector, d_latent):
    (w1, b1, w2, b2, w31, b31, w32, b32, wd3, bd3, wd2, bd2, wd1, bd1) = params
    bf16 = jnp.bfloat16

    def lin(h, w, b):
        return jnp.dot(h.astype(bf16), w.astype(bf16),
                       preferred_element_type=jnp.float32) + b

    h = x.reshape(-1, len_vector).astype(jnp.float32)
    h = jax.nn.relu(lin(h, w1, b1))
    h = jax.nn.relu(lin(h, w2, b2))
    mu = lin(h, w31, b31)
    logvar = lin(h, w32, b32)
    z = mu + eps * jnp.exp(0.5 * logvar)
    d = jax.nn.relu(lin(z, wd3, bd3))
    d = jax.nn.relu(lin(d, wd2, bd2))
    recon = jax.nn.sigmoid(lin(d, wd1, bd1))
    return recon, mu, logvar


if __name__ == "__main__":
    # Small demo sizes consistent with the module structure (full model uses len_vector=7500).
    # len_vector = 3*10*25 = 750 exercises the lane-padding path (750 -> 768); hidden sizes
    # 500/100 are hard-coded in the PyTorch module, d_latent = 2.
    d_latent = 2
    len_vector = 3 * 10 * 25  # 750

    key = jax.random.PRNGKey(0)
    k_params, k_x, k_eps = jax.random.split(key, 3)

    params = init_vae_params(k_params, len_vector, d_latent)

    # Example input in "NCHW-ish" form; the forward flattens it to (-1, len_vector).
    x = jax.random.normal(k_x, (2, 3, 10, 25), dtype=jnp.float32)
    B = x.size // len_vector
    # torch.randn_like(std) equivalent, sampled outside the kernel for determinism.
    eps = jax.random.normal(k_eps, (B, d_latent), dtype=jnp.float32)

    run = jax.jit(functools.partial(vae_forward, len_vector=len_vector, d_latent=d_latent))
    recon, mu, logvar = run(x, eps, params)
    jax.block_until_ready((recon, mu, logvar))

    # Sanity check against the pure-JAX reference (same bf16 weight recipe).
    recon_r, mu_r, logvar_r = vae_forward_ref(
        x, eps, params, len_vector=len_vector, d_latent=d_latent
    )
    np.testing.assert_allclose(np.asarray(recon), np.asarray(recon_r), rtol=2e-3, atol=2e-3)
    np.testing.assert_allclose(np.asarray(mu), np.asarray(mu_r), rtol=2e-3, atol=2e-3)
    np.testing.assert_allclose(np.asarray(logvar), np.asarray(logvar_r), rtol=2e-3, atol=2e-3)

    assert recon.shape == (B, len_vector)
    assert mu.shape == (B, d_latent) and logvar.shape == (B, d_latent)

    print("KERNEL_OK")
</pallas_src>

<mosaic_0001>
module attributes {stable_mosaic.version = 11 : i64} {
  func.func @_vae_kernel(%arg0: i32, %arg1: memref<8x768xbf16, #tpu.memory_space<vmem>>, %arg2: memref<8x128xf32, #tpu.memory_space<vmem>>, %arg3: memref<768x512xbf16, #tpu.memory_space<vmem>>, %arg4: memref<1x512xf32, #tpu.memory_space<vmem>>, %arg5: memref<512x128xbf16, #tpu.memory_space<vmem>>, %arg6: memref<1x128xf32, #tpu.memory_space<vmem>>, %arg7: memref<128x256xbf16, #tpu.memory_space<vmem>>, %arg8: memref<1x256xf32, #tpu.memory_space<vmem>>, %arg9: memref<128x128xbf16, #tpu.memory_space<vmem>>, %arg10: memref<1x128xf32, #tpu.memory_space<vmem>>, %arg11: memref<128x512xbf16, #tpu.memory_space<vmem>>, %arg12: memref<1x512xf32, #tpu.memory_space<vmem>>, %arg13: memref<512x768xbf16, #tpu.memory_space<vmem>>, %arg14: memref<1x768xf32, #tpu.memory_space<vmem>>, %arg15: memref<8x768xf32, #tpu.memory_space<vmem>>, %arg16: memref<8x256xf32, #tpu.memory_space<vmem>>) attributes {dimension_semantics = [#tpu.dimension_semantics<parallel>], iteration_bounds = array<i64: 1>, scalar_prefetch = 0 : i64, scratch_operands = 0 : i64, tpu.core_type = #tpu.core_type<tc>, window_params = [{transform_indices = @transform_0, window_bounds = array<i64: 8, 768>}, {transform_indices = @transform_1, window_bounds = array<i64: 8, 128>}, {pipeline_mode = #tpu.pipeline_mode<synchronous>, transform_indices = @transform_2, window_bounds = array<i64: 768, 512>}, {pipeline_mode = #tpu.pipeline_mode<synchronous>, transform_indices = @transform_3, window_bounds = array<i64: 1, 512>}, {pipeline_mode = #tpu.pipeline_mode<synchronous>, transform_indices = @transform_4, window_bounds = array<i64: 512, 128>}, {pipeline_mode = #tpu.pipeline_mode<synchronous>, transform_indices = @transform_5, window_bounds = array<i64: 1, 128>}, {pipeline_mode = #tpu.pipeline_mode<synchronous>, transform_indices = @transform_6, window_bounds = array<i64: 128, 256>}, {pipeline_mode = #tpu.pipeline_mode<synchronous>, transform_indices = @transform_7, window_bounds = array<i64: 1, 256>}, {pipeline_mode = #tpu.pipeline_mode<synchronous>, transform_indices = @transform_8, window_bounds = array<i64: 128, 128>}, {pipeline_mode = #tpu.pipeline_mode<synchronous>, transform_indices = @transform_9, window_bounds = array<i64: 1, 128>}, {pipeline_mode = #tpu.pipeline_mode<synchronous>, transform_indices = @transform_10, window_bounds = array<i64: 128, 512>}, {pipeline_mode = #tpu.pipeline_mode<synchronous>, transform_indices = @transform_11, window_bounds = array<i64: 1, 512>}, {pipeline_mode = #tpu.pipeline_mode<synchronous>, transform_indices = @transform_12, window_bounds = array<i64: 512, 768>}, {pipeline_mode = #tpu.pipeline_mode<synchronous>, transform_indices = @transform_13, window_bounds = array<i64: 1, 768>}, {transform_indices = @transform_14, window_bounds = array<i64: 8, 768>}, {transform_indices = @transform_15, window_bounds = array<i64: 8, 256>}]} {
    %c0 = arith.constant 0 : index
    %c0_0 = arith.constant 0 : index
    %0 = vector.load %arg1[%c0, %c0_0] : memref<8x768xbf16, #tpu.memory_space<vmem>>, vector<8x768xbf16>
    %c0_1 = arith.constant 0 : index
    %c0_2 = arith.constant 0 : index
    %1 = vector.load %arg3[%c0_1, %c0_2] : memref<768x512xbf16, #tpu.memory_space<vmem>>, vector<768x512xbf16>
    %cst = arith.constant dense<0.000000e+00> : vector<8x512xf32>
    %2 = tpu.matmul %0, %1, %cst {dimension_numbers = #tpu.dot_dimension_numbers<[1], [0], [0], [1], [0, 0, 1, 1], [], []>} : vector<8x768xbf16>, vector<768x512xbf16>, vector<8x512xf32> -> vector<8x512xf32>
    %c0_3 = arith.constant 0 : index
    %c0_4 = arith.constant 0 : index
    %3 = vector.load %arg4[%c0_3, %c0_4] : memref<1x512xf32, #tpu.memory_space<vmem>>, vector<1x512xf32>
    %4 = vector.broadcast %3 : vector<1x512xf32> to vector<8x512xf32>
    %5 = arith.addf %2, %4 : vector<8x512xf32>
    %cst_5 = arith.constant 0.000000e+00 : f32
    %6 = vector.broadcast %cst_5 : f32 to vector<8x512xf32>
    %7 = arith.maximumf %5, %6 : vector<8x512xf32>
    %8 = arith.truncf %7 : vector<8x512xf32> to vector<8x512xbf16>
    %c0_6 = arith.constant 0 : index
    %c0_7 = arith.constant 0 : index
    %9 = vector.load %arg5[%c0_6, %c0_7] : memref<512x128xbf16, #tpu.memory_space<vmem>>, vector<512x128xbf16>
    %cst_8 = arith.constant dense<0.000000e+00> : vector<8x128xf32>
    %10 = tpu.matmul %8, %9, %cst_8 {dimension_numbers = #tpu.dot_dimension_numbers<[1], [0], [0], [1], [0, 0, 1, 1], [], []>} : vector<8x512xbf16>, vector<512x128xbf16>, vector<8x128xf32> -> vector<8x128xf32>
    %c0_9 = arith.constant 0 : index
    %c0_10 = arith.constant 0 : index
    %11 = vector.load %arg6[%c0_9, %c0_10] : memref<1x128xf32, #tpu.memory_space<vmem>>, vector<1x128xf32>
    %12 = vector.broadcast %11 : vector<1x128xf32> to vector<8x128xf32>
    %13 = arith.addf %10, %12 : vector<8x128xf32>
    %cst_11 = arith.constant 0.000000e+00 : f32
    %14 = vector.broadcast %cst_11 : f32 to vector<8x128xf32>
    %15 = arith.maximumf %13, %14 : vector<8x128xf32>
    %16 = arith.truncf %15 : vector<8x128xf32> to vector<8x128xbf16>
    %c0_12 = arith.constant 0 : index
    %c0_13 = arith.constant 0 : index
    %17 = vector.load %arg7[%c0_12, %c0_13] : memref<128x256xbf16, #tpu.memory_space<vmem>>, vector<128x256xbf16>
    %cst_14 = arith.constant dense<0.000000e+00> : vector<8x256xf32>
    %18 = tpu.matmul %16, %17, %cst_14 {dimension_numbers = #tpu.dot_dimension_numbers<[1], [0], [0], [1], [0, 0, 1, 1], [], []>} : vector<8x128xbf16>, vector<128x256xbf16>, vector<8x256xf32> -> vector<8x256xf32>
    %c0_15 = arith.constant 0 : index
    %c0_16 = arith.constant 0 : index
    %19 = vector.load %arg8[%c0_15, %c0_16] : memref<1x256xf32, #tpu.memory_space<vmem>>, vector<1x256xf32>
    %20 = vector.broadcast %19 : vector<1x256xf32> to vector<8x256xf32>
    %21 = arith.addf %18, %20 : vector<8x256xf32>
    %22 = vector.extract_strided_slice %21 {offsets = [0, 0], sizes = [8, 128], strides = [1, 1]} : vector<8x256xf32> to vector<8x128xf32>
    %23 = vector.extract_strided_slice %21 {offsets = [0, 128], sizes = [8, 128], strides = [1, 1]} : vector<8x256xf32> to vector<8x128xf32>
    %c0_17 = arith.constant 0 : index
    %c0_18 = arith.constant 0 : index
    %24 = vector.load %arg2[%c0_17, %c0_18] : memref<8x128xf32, #tpu.memory_space<vmem>>, vector<8x128xf32>
    %cst_19 = arith.constant 5.000000e-01 : f32
    %25 = vector.broadcast %cst_19 : f32 to vector<8x128xf32>
    %26 = arith.mulf %25, %23 : vector<8x128xf32>
    %27 = math.exp %26 : vector<8x128xf32>
    %28 = arith.mulf %24, %27 : vector<8x128xf32>
    %29 = arith.addf %22, %28 : vector<8x128xf32>
    %30 = arith.truncf %29 : vector<8x128xf32> to vector<8x128xbf16>
    %c0_20 = arith.constant 0 : index
    %c0_21 = arith.constant 0 : index
    %31 = vector.load %arg9[%c0_20, %c0_21] : memref<128x128xbf16, #tpu.memory_space<vmem>>, vector<128x128xbf16>
    %cst_22 = arith.constant dense<0.000000e+00> : vector<8x128xf32>
    %32 = tpu.matmul %30, %31, %cst_22 {dimension_numbers = #tpu.dot_dimension_numbers<[1], [0], [0], [1], [0, 0, 1, 1], [], []>} : vector<8x128xbf16>, vector<128x128xbf16>, vector<8x128xf32> -> vector<8x128xf32>
    %c0_23 = arith.constant 0 : index
    %c0_24 = arith.constant 0 : index
    %33 = vector.load %arg10[%c0_23, %c0_24] : memref<1x128xf32, #tpu.memory_space<vmem>>, vector<1x128xf32>
    %34 = vector.broadcast %33 : vector<1x128xf32> to vector<8x128xf32>
    %35 = arith.addf %32, %34 : vector<8x128xf32>
    %cst_25 = arith.constant 0.000000e+00 : f32
    %36 = vector.broadcast %cst_25 : f32 to vector<8x128xf32>
    %37 = arith.maximumf %35, %36 : vector<8x128xf32>
    %38 = arith.truncf %37 : vector<8x128xf32> to vector<8x128xbf16>
    %c0_26 = arith.constant 0 : index
    %c0_27 = arith.constant 0 : index
    %39 = vector.load %arg11[%c0_26, %c0_27] : memref<128x512xbf16, #tpu.memory_space<vmem>>, vector<128x512xbf16>
    %cst_28 = arith.constant dense<0.000000e+00> : vector<8x512xf32>
    %40 = tpu.matmul %38, %39, %cst_28 {dimension_numbers = #tpu.dot_dimension_numbers<[1], [0], [0], [1], [0, 0, 1, 1], [], []>} : vector<8x128xbf16>, vector<128x512xbf16>, vector<8x512xf32> -> vector<8x512xf32>
    %c0_29 = arith.constant 0 : index
    %c0_30 = arith.constant 0 : index
    %41 = vector.load %arg12[%c0_29, %c0_30] : memref<1x512xf32, #tpu.memory_space<vmem>>, vector<1x512xf32>
    %42 = vector.broadcast %41 : vector<1x512xf32> to vector<8x512xf32>
    %43 = arith.addf %40, %42 : vector<8x512xf32>
    %cst_31 = arith.constant 0.000000e+00 : f32
    %44 = vector.broadcast %cst_31 : f32 to vector<8x512xf32>
    %45 = arith.maximumf %43, %44 : vector<8x512xf32>
    %46 = arith.truncf %45 : vector<8x512xf32> to vector<8x512xbf16>
    %c0_32 = arith.constant 0 : index
    %c0_33 = arith.constant 0 : index
    %47 = vector.load %arg13[%c0_32, %c0_33] : memref<512x768xbf16, #tpu.memory_space<vmem>>, vector<512x768xbf16>
    %cst_34 = arith.constant dense<0.000000e+00> : vector<8x768xf32>
    %48 = tpu.matmul %46, %47, %cst_34 {dimension_numbers = #tpu.dot_dimension_numbers<[1], [0], [0], [1], [0, 0, 1, 1], [], []>} : vector<8x512xbf16>, vector<512x768xbf16>, vector<8x768xf32> -> vector<8x768xf32>
    %c0_35 = arith.constant 0 : index
    %c0_36 = arith.constant 0 : index
    %49 = vector.load %arg14[%c0_35, %c0_36] : memref<1x768xf32, #tpu.memory_space<vmem>>, vector<1x768xf32>
    %50 = vector.broadcast %49 : vector<1x768xf32> to vector<8x768xf32>
    %51 = arith.addf %48, %50 : vector<8x768xf32>
    %52 = arith.negf %51 : vector<8x768xf32>
    %53 = math.exp %52 : vector<8x768xf32>
    %cst_37 = arith.constant 1.000000e+00 : f32
    %54 = vector.broadcast %cst_37 : f32 to vector<8x768xf32>
    %55 = arith.addf %54, %53 : vector<8x768xf32>
    %56 = arith.divf %54, %55 : vector<8x768xf32>
    %c0_38 = arith.constant 0 : index
    %c0_39 = arith.constant 0 : index
    %57 = vector.load %arg15[%c0_38, %c0_39] : memref<8x768xf32, #tpu.memory_space<vmem>>, vector<8x768xf32>
    tpu.vector_store %arg15[%c0_38, %c0_39], %56 {strides = array<i32>} : memref<8x768xf32, #tpu.memory_space<vmem>>, vector<8x768xf32>,
    %c0_40 = arith.constant 0 : index
    %c0_41 = arith.constant 0 : index
    %58 = vector.load %arg16[%c0_40, %c0_41] : memref<8x256xf32, #tpu.memory_space<vmem>>, vector<8x256xf32>
    tpu.vector_store %arg16[%c0_40, %c0_41], %21 {strides = array<i32>} : memref<8x256xf32, #tpu.memory_space<vmem>>, vector<8x256xf32>,
    return
  }
  func.func @transform_0(%arg0: i32) -> (i32, i32) {
    %c0_i32 = arith.constant 0 : i32
    %c0_i32_0 = arith.constant 0 : i32
    return %arg0, %c0_i32 : i32, i32
  }
  func.func @transform_1(%arg0: i32) -> (i32, i32) {
    %c0_i32 = arith.constant 0 : i32
    %c0_i32_0 = arith.constant 0 : i32
    return %arg0, %c0_i32 : i32, i32
  }
  func.func @transform_2(%arg0: i32) -> (i32, i32) {
    %c0_i32 = arith.constant 0 : i32
    %c0_i32_0 = arith.constant 0 : i32
    %c0_i32_1 = arith.constant 0 : i32
    return %c0_i32, %c0_i32_0 : i32, i32
  }
  func.func @transform_3(%arg0: i32) -> (i32, i32) {
    %c0_i32 = arith.constant 0 : i32
    %c0_i32_0 = arith.constant 0 : i32
    %c0_i32_1 = arith.constant 0 : i32
    return %c0_i32, %c0_i32_0 : i32, i32
  }
  func.func @transform_4(%arg0: i32) -> (i32, i32) {
    %c0_i32 = arith.constant 0 : i32
    %c0_i32_0 = arith.constant 0 : i32
    %c0_i32_1 = arith.constant 0 : i32
    return %c0_i32, %c0_i32_0 : i32, i32
  }
  func.func @transform_5(%arg0: i32) -> (i32, i32) {
    %c0_i32 = arith.constant 0 : i32
    %c0_i32_0 = arith.constant 0 : i32
    %c0_i32_1 = arith.constant 0 : i32
    return %c0_i32, %c0_i32_0 : i32, i32
  }
  func.func @transform_6(%arg0: i32) -> (i32, i32) {
    %c0_i32 = arith.constant 0 : i32
    %c0_i32_0 = arith.constant 0 : i32
    %c0_i32_1 = arith.constant 0 : i32
    return %c0_i32, %c0_i32_0 : i32, i32
  }
  func.func @transform_7(%arg0: i32) -> (i32, i32) {
    %c0_i32 = arith.constant 0 : i32
    %c0_i32_0 = arith.constant 0 : i32
    %c0_i32_1 = arith.constant 0 : i32
    return %c0_i32, %c0_i32_0 : i32, i32
  }
  func.func @transform_8(%arg0: i32) -> (i32, i32) {
    %c0_i32 = arith.constant 0 : i32
    %c0_i32_0 = arith.constant 0 : i32
    %c0_i32_1 = arith.constant 0 : i32
    return %c0_i32, %c0_i32_0 : i32, i32
  }
  func.func @transform_9(%arg0: i32) -> (i32, i32) {
    %c0_i32 = arith.constant 0 : i32
    %c0_i32_0 = arith.constant 0 : i32
    %c0_i32_1 = arith.constant 0 : i32
    return %c0_i32, %c0_i32_0 : i32, i32
  }
  func.func @transform_10(%arg0: i32) -> (i32, i32) {
    %c0_i32 = arith.constant 0 : i32
    %c0_i32_0 = arith.constant 0 : i32
    %c0_i32_1 = arith.constant 0 : i32
    return %c0_i32, %c0_i32_0 : i32, i32
  }
  func.func @transform_11(%arg0: i32) -> (i32, i32) {
    %c0_i32 = arith.constant 0 : i32
    %c0_i32_0 = arith.constant 0 : i32
    %c0_i32_1 = arith.constant 0 : i32
    return %c0_i32, %c0_i32_0 : i32, i32
  }
  func.func @transform_12(%arg0: i32) -> (i32, i32) {
    %c0_i32 = arith.constant 0 : i32
    %c0_i32_0 = arith.constant 0 : i32
    %c0_i32_1 = arith.constant 0 : i32
    return %c0_i32, %c0_i32_0 : i32, i32
  }
  func.func @transform_13(%arg0: i32) -> (i32, i32) {
    %c0_i32 = arith.constant 0 : i32
    %c0_i32_0 = arith.constant 0 : i32
    %c0_i32_1 = arith.constant 0 : i32
    return %c0_i32, %c0_i32_0 : i32, i32
  }
  func.func @transform_14(%arg0: i32) -> (i32, i32) {
    %c0_i32 = arith.constant 0 : i32
    %c0_i32_0 = arith.constant 0 : i32
    return %arg0, %c0_i32 : i32, i32
  }
  func.func @transform_15(%arg0: i32) -> (i32, i32) {
    %c0_i32 = arith.constant 0 : i32
    %c0_i32_0 = arith.constant 0 : i32
    return %arg0, %c0_i32 : i32, i32
  }
}

</mosaic_0001>

<llo_original>
// kernel: vae_forward.1
$region0: #{vae_forward.1}
  #allocation0 [shape = 'u32[]', space=smem, size = 0x4, offset = 0x4, fixed_abs, tag = 'smem constant byte address 0x4 - core index']
  #allocation1 [shape = 'u32[144,128]{1,0:T(1,128)}', space=vmem, size = 0x12000, scoped, tag = 'internal scratch']
  %s0 = inlined_call_operand.vmem [shape: bf16[8,768], index: 0, kind: input, shape index: {}]
  %s1 = inlined_call_operand.vmem [shape: f32[8,128], index: 1, kind: input, shape index: {}]
  %s2 = inlined_call_operand.vmem [shape: bf16[768,512], index: 2, kind: input, shape index: {}]
  %s3 = inlined_call_operand.vmem [shape: f32[1,512], index: 3, kind: input, shape index: {}]
  %s4 = inlined_call_operand.vmem [shape: bf16[512,128], index: 4, kind: input, shape index: {}]
  %s5 = inlined_call_operand.vmem [shape: f32[1,128], index: 5, kind: input, shape index: {}]
  %s6 = inlined_call_operand.vmem [shape: bf16[128,256], index: 6, kind: input, shape index: {}]
  %s7 = inlined_call_operand.vmem [shape: f32[1,256], index: 7, kind: input, shape index: {}]
  %s8 = inlined_call_operand.vmem [shape: bf16[128,128], index: 8, kind: input, shape index: {}]
  %s9 = inlined_call_operand.vmem [shape: f32[1,128], index: 9, kind: input, shape index: {}]
  %s10 = inlined_call_operand.vmem [shape: bf16[128,512], index: 10, kind: input, shape index: {}]
  %s11 = inlined_call_operand.vmem [shape: f32[1,512], index: 11, kind: input, shape index: {}]
  %s12 = inlined_call_operand.vmem [shape: bf16[512,768], index: 12, kind: input, shape index: {}]
  %s13 = inlined_call_operand.vmem [shape: f32[1,768], index: 13, kind: input, shape index: {}]
  %s14 = inlined_call_operand.vmem [shape: f32[8,768], index: 14, kind: output, shape index: {0}]
  %s15 = inlined_call_operand.vmem [shape: f32[8,256], index: 15, kind: output, shape index: {1}]
  %16 = xla_tuple %s14, %s15
  %s17 = sld [smem:[#allocation0]]
  $region74: #{vae_forward.1} parent=0
    _
  %s19 = ssub.s32 1, %s17
  %s20 = scalar_select 0, %s19, %s17
  // Predicated region
  $region2: #{vae_forward.1} parent=0 // pred_check
    _
  $region3: #{vae_forward.1} parent=0 // pred_check_branch
    %22 = sbr.rel (0) target = $region5
  $region4: #{vae_forward.1} parent=0 // pred_region
    _
  $region5: #{vae_forward.1} parent=0 // pred_fallthru
    _
  // Predicated region
  $region6: #{vae_forward.1} parent=0 // pred_check
    _
  $region7: #{vae_forward.1} parent=0 // pred_check_branch
    %24 = sbr.rel (0) target = $region9
  $region8: #{vae_forward.1} parent=0 // pred_region
    _
  $region9: #{vae_forward.1} parent=0 // pred_fallthru
    _
  // Predicated region
  $region10: #{vae_forward.1} parent=0 // pred_check
    _
  $region11: #{vae_forward.1} parent=0 // pred_check_branch
    %26 = sbr.rel (0) target = $region13
  $region12: #{vae_forward.1} parent=0 // pred_region
    _
  $region13: #{vae_forward.1} parent=0 // pred_fallthru
    _
  // Predicated region
  $region14: #{vae_forward.1} parent=0 // pred_check
    _
  $region15: #{vae_forward.1} parent=0 // pred_check_branch
    %28 = sbr.rel (0) target = $region17
  $region16: #{vae_forward.1} parent=0 // pred_region
    _
  $region17: #{vae_forward.1} parent=0 // pred_fallthru
    _
  // Predicated region
  $region18: #{vae_forward.1} parent=0 // pred_check
    _
  $region19: #{vae_forward.1} parent=0 // pred_check_branch
    %30 = sbr.rel (0) target = $region21
  $region20: #{vae_forward.1} parent=0 // pred_region
    _
  $region21: #{vae_forward.1} parent=0 // pred_fallthru
    _
  // Predicated region
  $region22: #{vae_forward.1} parent=0 // pred_check
    _
  $region23: #{vae_forward.1} parent=0 // pred_check_branch
    %32 = sbr.rel (0) target = $region25
  $region24: #{vae_forward.1} parent=0 // pred_region
    _
  $region25: #{vae_forward.1} parent=0 // pred_fallthru
    _
  // Predicated region
  $region26: #{vae_forward.1} parent=0 // pred_check
    _
  $region27: #{vae_forward.1} parent=0 // pred_check_branch
    %34 = sbr.rel (0) target = $region29
  $region28: #{vae_forward.1} parent=0 // pred_region
    _
  $region29: #{vae_forward.1} parent=0 // pred_fallthru
    _
  // Predicated region
  $region30: #{vae_forward.1} parent=0 // pred_check
    _
  $region31: #{vae_forward.1} parent=0 // pred_check_branch
    %36 = sbr.rel (0) target = $region33
  $region32: #{vae_forward.1} parent=0 // pred_region
    _
  $region33: #{vae_forward.1} parent=0 // pred_fallthru
    _
  // Predicated region
  $region34: #{vae_forward.1} parent=0 // pred_check
    _
  $region35: #{vae_forward.1} parent=0 // pred_check_branch
    %38 = sbr.rel (0) target = $region37
  $region36: #{vae_forward.1} parent=0 // pred_region
    _
  $region37: #{vae_forward.1} parent=0 // pred_fallthru
    _
  // Predicated region
  $region38: #{vae_forward.1} parent=0 // pred_check
    _
  $region39: #{vae_forward.1} parent=0 // pred_check_branch
    %40 = sbr.rel (0) target = $region41
  $region40: #{vae_forward.1} parent=0 // pred_region
    _
  $region41: #{vae_forward.1} parent=0 // pred_fallthru
    _
  // Predicated region
  $region42: #{vae_forward.1} parent=0 // pred_check
    _
  $region43: #{vae_forward.1} parent=0 // pred_check_branch
    %42 = sbr.rel (0) target = $region45
  $region44: #{vae_forward.1} parent=0 // pred_region
    _
  $region45: #{vae_forward.1} parent=0 // pred_fallthru
    _
  // Predicated region
  $region46: #{vae_forward.1} parent=0 // pred_check
    _
  $region47: #{vae_forward.1} parent=0 // pred_check_branch
    %44 = sbr.rel (0) target = $region49
  $region48: #{vae_forward.1} parent=0 // pred_region
    _
  $region49: #{vae_forward.1} parent=0 // pred_fallthru
    _
  // Predicated region
  $region50: #{vae_forward.1} parent=0 // pred_check
    _
  $region51: #{vae_forward.1} parent=0 // pred_check_branch
    %46 = sbr.rel (0) target = $region53
  $region52: #{vae_forward.1} parent=0 // pred_region
    _
  $region53: #{vae_forward.1} parent=0 // pred_fallthru
    _
  // Predicated region
  $region54: #{vae_forward.1} parent=0 // pred_check
    _
  $region55: #{vae_forward.1} parent=0 // pred_check_branch
    %48 = sbr.rel (0) target = $region57
  $region56: #{vae_forward.1} parent=0 // pred_region
    _
  $region57: #{vae_forward.1} parent=0 // pred_fallthru
    _
  %v50 = vld [vmem:[%s0] sm:$0xff]
  %v51 = vld [vmem:[%s0 + $0x8] sm:$0xff]
  %v52 = vld [vmem:[%s0 + $0x10] sm:$0xff]
  %v53 = vld [vmem:[%s2] sm:$0xff]
  %v54 = vld [vmem:[%s2 + $0x8] sm:$0xff]
  %v55 = vld [vmem:[%s2 + $0x10] sm:$0xff]
  %v56 = vld [vmem:[%s2 + $0x18] sm:$0xff]
  %v57 = vld [vmem:[%s2 + $0x20] sm:$0xff]
  %v58 = vld [vmem:[%s2 + $0x28] sm:$0xff]
  %v59 = vld [vmem:[%s2 + $0x30] sm:$0xff]
  %v60 = vld [vmem:[%s2 + $0x38] sm:$0xff]
  %v61 = vld [vmem:[%s2 + $0x40] sm:$0xff]
  %v62 = vld [vmem:[%s2 + $0x48] sm:$0xff]
  %v63 = vld [vmem:[%s2 + $0x50] sm:$0xff]
  %v64 = vld [vmem:[%s2 + $0x58] sm:$0xff]
  %v65 = vld [vmem:[%s2 + $0x60] sm:$0xff]
  %v66 = vld [vmem:[%s2 + $0x68] sm:$0xff]
  %v67 = vld [vmem:[%s2 + $0x70] sm:$0xff]
  %v68 = vld [vmem:[%s2 + $0x78] sm:$0xff]
  %v69 = vld [vmem:[%s2 + $0x80] sm:$0xff]
  %v70 = vld [vmem:[%s2 + $0x88] sm:$0xff]
  %v71 = vld [vmem:[%s2 + $0x90] sm:$0xff]
  %v72 = vld [vmem:[%s2 + $0x98] sm:$0xff]
  %v73 = vld [vmem:[%s2 + $0xa0] sm:$0xff]
  %v74 = vld [vmem:[%s2 + $0xa8] sm:$0xff]
  %v75 = vld [vmem:[%s2 + $0xb0] sm:$0xff]
  %v76 = vld [vmem:[%s2 + $0xb8] sm:$0xff]
  %v77 = vld [vmem:[%s2 + $0xc0] sm:$0xff]
  %v78 = vld [vmem:[%s2 + $0xc8] sm:$0xff]
  %v79 = vld [vmem:[%s2 + $0xd0] sm:$0xff]
  %v80 = vld [vmem:[%s2 + $0xd8] sm:$0xff]
  %v81 = vld [vmem:[%s2 + $0xe0] sm:$0xff]
  %v82 = vld [vmem:[%s2 + $0xe8] sm:$0xff]
  %v83 = vld [vmem:[%s2 + $0xf0] sm:$0xff]
  %v84 = vld [vmem:[%s2 + $0xf8] sm:$0xff]
  %v85 = vld [vmem:[%s2 + $0x100] sm:$0xff]
  %v86 = vld [vmem:[%s2 + $0x108] sm:$0xff]
  %v87 = vld [vmem:[%s2 + $0x110] sm:$0xff]
  %v88 = vld [vmem:[%s2 + $0x118] sm:$0xff]
  %v89 = vld [vmem:[%s2 + $0x120] sm:$0xff]
  %v90 = vld [vmem:[%s2 + $0x128] sm:$0xff]
  %v91 = vld [vmem:[%s2 + $0x130] sm:$0xff]
  %v92 = vld [vmem:[%s2 + $0x138] sm:$0xff]
  %v93 = vld [vmem:[%s2 + $0x140] sm:$0xff]
  %v94 = vld [vmem:[%s2 + $0x148] sm:$0xff]
  %v95 = vld [vmem:[%s2 + $0x150] sm:$0xff]
  %v96 = vld [vmem:[%s2 + $0x158] sm:$0xff]
  %v97 = vld [vmem:[%s2 + $0x160] sm:$0xff]
  %v98 = vld [vmem:[%s2 + $0x168] sm:$0xff]
  %v99 = vld [vmem:[%s2 + $0x170] sm:$0xff]
  %v100 = vld [vmem:[%s2 + $0x178] sm:$0xff]
  %v101 = vld [vmem:[%s2 + $0x180] sm:$0xff]
  %v102 = vld [vmem:[%s2 + $0x188] sm:$0xff]
  %v103 = vld [vmem:[%s2 + $0x190] sm:$0xff]
  %v104 = vld [vmem:[%s2 + $0x198] sm:$0xff]
  %v105 = vld [vmem:[%s2 + $0x1a0] sm:$0xff]
  %v106 = vld [vmem:[%s2 + $0x1a8] sm:$0xff]
  %v107 = vld [vmem:[%s2 + $0x1b0] sm:$0xff]
  %v108 = vld [vmem:[%s2 + $0x1b8] sm:$0xff]
  %v109 = vld [vmem:[%s2 + $0x1c0] sm:$0xff]
  %v110 = vld [vmem:[%s2 + $0x1c8] sm:$0xff]
  %v111 = vld [vmem:[%s2 + $0x1d0] sm:$0xff]
  %v112 = vld [vmem:[%s2 + $0x1d8] sm:$0xff]
  %v113 = vld [vmem:[%s2 + $0x1e0] sm:$0xff]
  %v114 = vld [vmem:[%s2 + $0x1e8] sm:$0xff]
  %v115 = vld [vmem:[%s2 + $0x1f0] sm:$0xff]
  %v116 = vld [vmem:[%s2 + $0x1f8] sm:$0xff]
  %v117 = vld [vmem:[%s2 + $0x200] sm:$0xff]
  %v118 = vld [vmem:[%s2 + $0x208] sm:$0xff]
  %v119 = vld [vmem:[%s2 + $0x210] sm:$0xff]
  %v120 = vld [vmem:[%s2 + $0x218] sm:$0xff]
  %v121 = vld [vmem:[%s2 + $0x220] sm:$0xff]
  %v122 = vld [vmem:[%s2 + $0x228] sm:$0xff]
  %v123 = vld [vmem:[%s2 + $0x230] sm:$0xff]
  %v124 = vld [vmem:[%s2 + $0x238] sm:$0xff]
  %v125 = vld [vmem:[%s2 + $0x240] sm:$0xff]
  %v126 = vld [vmem:[%s2 + $0x248] sm:$0xff]
  %v127 = vld [vmem:[%s2 + $0x250] sm:$0xff]
  %v128 = vld [vmem:[%s2 + $0x258] sm:$0xff]
  %v129 = vld [vmem:[%s2 + $0x260] sm:$0xff]
  %v130 = vld [vmem:[%s2 + $0x268] sm:$0xff]
  %v131 = vld [vmem:[%s2 + $0x270] sm:$0xff]
  %v132 = vld [vmem:[%s2 + $0x278] sm:$0xff]
  %v133 = vld [vmem:[%s2 + $0x280] sm:$0xff]
  %v134 = vld [vmem:[%s2 + $0x288] sm:$0xff]
  %v135 = vld [vmem:[%s2 + $0x290] sm:$0xff]
  %v136 = vld [vmem:[%s2 + $0x298] sm:$0xff]
  %v137 = vld [vmem:[%s2 + $0x2a0] sm:$0xff]
  %v138 = vld [vmem:[%s2 + $0x2a8] sm:$0xff]
  %v139 = vld [vmem:[%s2 + $0x2b0] sm:$0xff]
  %v140 = vld [vmem:[%s2 + $0x2b8] sm:$0xff]
  %v141 = vld [vmem:[%s2 + $0x2c0] sm:$0xff]
  %v142 = vld [vmem:[%s2 + $0x2c8] sm:$0xff]
  %v143 = vld [vmem:[%s2 + $0x2d0] sm:$0xff]
  %v144 = vld [vmem:[%s2 + $0x2d8] sm:$0xff]
  %v145 = vld [vmem:[%s2 + $0x2e0] sm:$0xff]
  %v146 = vld [vmem:[%s2 + $0x2e8] sm:$0xff]
  %v147 = vld [vmem:[%s2 + $0x2f0] sm:$0xff]
  %v148 = vld [vmem:[%s2 + $0x2f8] sm:$0xff]
  %v149 = vld [vmem:[%s2 + $0x300] sm:$0xff]
  %v150 = vld [vmem:[%s2 + $0x308] sm:$0xff]
  %v151 = vld [vmem:[%s2 + $0x310] sm:$0xff]
  %v152 = vld [vmem:[%s2 + $0x318] sm:$0xff]
  %v153 = vld [vmem:[%s2 + $0x320] sm:$0xff]
  %v154 = vld [vmem:[%s2 + $0x328] sm:$0xff]
  %v155 = vld [vmem:[%s2 + $0x330] sm:$0xff]
  %v156 = vld [vmem:[%s2 + $0x338] sm:$0xff]
  %v157 = vld [vmem:[%s2 + $0x340] sm:$0xff]
  %v158 = vld [vmem:[%s2 + $0x348] sm:$0xff]
  %v159 = vld [vmem:[%s2 + $0x350] sm:$0xff]
  %v160 = vld [vmem:[%s2 + $0x358] sm:$0xff]
  %v161 = vld [vmem:[%s2 + $0x360] sm:$0xff]
  %v162 = vld [vmem:[%s2 + $0x368] sm:$0xff]
  %v163 = vld [vmem:[%s2 + $0x370] sm:$0xff]
  %v164 = vld [vmem:[%s2 + $0x378] sm:$0xff]
  %v165 = vld [vmem:[%s2 + $0x380] sm:$0xff]
  %v166 = vld [vmem:[%s2 + $0x388] sm:$0xff]
  %v167 = vld [vmem:[%s2 + $0x390] sm:$0xff]
  %v168 = vld [vmem:[%s2 + $0x398] sm:$0xff]
  %v169 = vld [vmem:[%s2 + $0x3a0] sm:$0xff]
  %v170 = vld [vmem:[%s2 + $0x3a8] sm:$0xff]
  %v171 = vld [vmem:[%s2 + $0x3b0] sm:$0xff]
  %v172 = vld [vmem:[%s2 + $0x3b8] sm:$0xff]
  %v173 = vld [vmem:[%s2 + $0x3c0] sm:$0xff]
  %v174 = vld [vmem:[%s2 + $0x3c8] sm:$0xff]
  %v175 = vld [vmem:[%s2 + $0x3d0] sm:$0xff]
  %v176 = vld [vmem:[%s2 + $0x3d8] sm:$0xff]
  %v177 = vld [vmem:[%s2 + $0x3e0] sm:$0xff]
  %v178 = vld [vmem:[%s2 + $0x3e8] sm:$0xff]
  %v179 = vld [vmem:[%s2 + $0x3f0] sm:$0xff]
  %v180 = vld [vmem:[%s2 + $0x3f8] sm:$0xff]
  %v181 = vld [vmem:[%s2 + $0x400] sm:$0xff]
  %v182 = vld [vmem:[%s2 + $0x408] sm:$0xff]
  %v183 = vld [vmem:[%s2 + $0x410] sm:$0xff]
  %v184 = vld [vmem:[%s2 + $0x418] sm:$0xff]
  %v185 = vld [vmem:[%s2 + $0x420] sm:$0xff]
  %v186 = vld [vmem:[%s2 + $0x428] sm:$0xff]
  %v187 = vld [vmem:[%s2 + $0x430] sm:$0xff]
  %v188 = vld [vmem:[%s2 + $0x438] sm:$0xff]
  %v189 = vld [vmem:[%s2 + $0x440] sm:$0xff]
  %v190 = vld [vmem:[%s2 + $0x448] sm:$0xff]
  %v191 = vld [vmem:[%s2 + $0x450] sm:$0xff]
  %v192 = vld [vmem:[%s2 + $0x458] sm:$0xff]
  %v193 = vld [vmem:[%s2 + $0x460] sm:$0xff]
  %v194 = vld [vmem:[%s2 + $0x468] sm:$0xff]
  %v195 = vld [vmem:[%s2 + $0x470] sm:$0xff]
  %v196 = vld [vmem:[%s2 + $0x478] sm:$0xff]
  %v197 = vld [vmem:[%s2 + $0x480] sm:$0xff]
  %v198 = vld [vmem:[%s2 + $0x488] sm:$0xff]
  %v199 = vld [vmem:[%s2 + $0x490] sm:$0xff]
  %v200 = vld [vmem:[%s2 + $0x498] sm:$0xff]
  %v201 = vld [vmem:[%s2 + $0x4a0] sm:$0xff]
  %v202 = vld [vmem:[%s2 + $0x4a8] sm:$0xff]
  %v203 = vld [vmem:[%s2 + $0x4b0] sm:$0xff]
  %v204 = vld [vmem:[%s2 + $0x4b8] sm:$0xff]
  %v205 = vld [vmem:[%s2 + $0x4c0] sm:$0xff]
  %v206 = vld [vmem:[%s2 + $0x4c8] sm:$0xff]
  %v207 = vld [vmem:[%s2 + $0x4d0] sm:$0xff]
  %v208 = vld [vmem:[%s2 + $0x4d8] sm:$0xff]
  %v209 = vld [vmem:[%s2 + $0x4e0] sm:$0xff]
  %v210 = vld [vmem:[%s2 + $0x4e8] sm:$0xff]
  %v211 = vld [vmem:[%s2 + $0x4f0] sm:$0xff]
  %v212 = vld [vmem:[%s2 + $0x4f8] sm:$0xff]
  %v213 = vld [vmem:[%s2 + $0x500] sm:$0xff]
  %v214 = vld [vmem:[%s2 + $0x508] sm:$0xff]
  %v215 = vld [vmem:[%s2 + $0x510] sm:$0xff]
  %v216 = vld [vmem:[%s2 + $0x518] sm:$0xff]
  %v217 = vld [vmem:[%s2 + $0x520] sm:$0xff]
  %v218 = vld [vmem:[%s2 + $0x528] sm:$0xff]
  %v219 = vld [vmem:[%s2 + $0x530] sm:$0xff]
  %v220 = vld [vmem:[%s2 + $0x538] sm:$0xff]
  %v221 = vld [vmem:[%s2 + $0x540] sm:$0xff]
  %v222 = vld [vmem:[%s2 + $0x548] sm:$0xff]
  %v223 = vld [vmem:[%s2 + $0x550] sm:$0xff]
  %v224 = vld [vmem:[%s2 + $0x558] sm:$0xff]
  %v225 = vld [vmem:[%s2 + $0x560] sm:$0xff]
  %v226 = vld [vmem:[%s2 + $0x568] sm:$0xff]
  %v227 = vld [vmem:[%s2 + $0x570] sm:$0xff]
  %v228 = vld [vmem:[%s2 + $0x578] sm:$0xff]
  %v229 = vld [vmem:[%s2 + $0x580] sm:$0xff]
  %v230 = vld [vmem:[%s2 + $0x588] sm:$0xff]
  %v231 = vld [vmem:[%s2 + $0x590] sm:$0xff]
  %v232 = vld [vmem:[%s2 + $0x598] sm:$0xff]
  %v233 = vld [vmem:[%s2 + $0x5a0] sm:$0xff]
  %v234 = vld [vmem:[%s2 + $0x5a8] sm:$0xff]
  %v235 = vld [vmem:[%s2 + $0x5b0] sm:$0xff]
  %v236 = vld [vmem:[%s2 + $0x5b8] sm:$0xff]
  %v237 = vld [vmem:[%s2 + $0x5c0] sm:$0xff]
  %v238 = vld [vmem:[%s2 + $0x5c8] sm:$0xff]
  %v239 = vld [vmem:[%s2 + $0x5d0] sm:$0xff]
  %v240 = vld [vmem:[%s2 + $0x5d8] sm:$0xff]
  %v241 = vld [vmem:[%s2 + $0x5e0] sm:$0xff]
  %v242 = vld [vmem:[%s2 + $0x5e8] sm:$0xff]
  %v243 = vld [vmem:[%s2 + $0x5f0] sm:$0xff]
  %v244 = vld [vmem:[%s2 + $0x5f8] sm:$0xff]
  %v245 = vld [vmem:[%s3] sm:$0xf]
  %v247 = vlaneseq
  %v248 = vshrl.u32 %v247, 7
  %v249 = vsub.s32 0, %v248
  %v250 = vrot.slane %v245, %v249
  %v251 = vlaneseq
  %v252 = vshrl.u32 %v251, 7
  %v253 = vsub.s32 1, %v252
  %v254 = vrot.slane %v245, %v253
  %v255 = vlaneseq
  %v256 = vshrl.u32 %v255, 7
  %v257 = vsub.s32 2, %v256
  %v258 = vrot.slane %v245, %v257
  %v259 = vlaneseq
  %v260 = vshrl.u32 %v259, 7
  %v261 = vsub.s32 3, %v260
  %v262 = vrot.slane %v245, %v261
  %v270 = vunpack.c.l.b16 %v50
  %v271 = vunpack.c.h.b16 %v50
  %v272 = vunpack.c.l.b16 %v51
  %v273 = vunpack.c.h.b16 %v51
  %v274 = vunpack.c.l.b16 %v52
  %v275 = vunpack.c.h.b16 %v52
  %v276 = vpack.c.b16 %v270, %v270
  %v277 = vpack.c.b16 %v271, %v271
  %v278 = vpack.c.b16 %v272, %v272
  %v279 = vpack.c.b16 %v273, %v273
  %v280 = vpack.c.b16 %v274, %v274
  %v281 = vpack.c.b16 %v275, %v275
  %v480 = vunpack.c.l.b16 %v53
  %v481 = vunpack.c.h.b16 %v53
  %v482 = vunpack.c.l.b16 %v54
  %v483 = vunpack.c.h.b16 %v54
  %v484 = vunpack.c.l.b16 %v55
  %v485 = vunpack.c.h.b16 %v55
  %v486 = vunpack.c.l.b16 %v56
  %v487 = vunpack.c.h.b16 %v56
  %v488 = vunpack.c.l.b16 %v57
  %v489 = vunpack.c.h.b16 %v57
  %v490 = vunpack.c.l.b16 %v58
  %v491 = vunpack.c.h.b16 %v58
  %v492 = vunpack.c.l.b16 %v59
  %v493 = vunpack.c.h.b16 %v59
  %v494 = vunpack.c.l.b16 %v60
  %v495 = vunpack.c.h.b16 %v60
  %v496 = vunpack.c.l.b16 %v61
  %v497 = vunpack.c.h.b16 %v61
  %v498 = vunpack.c.l.b16 %v62
  %v499 = vunpack.c.h.b16 %v62
  %v500 = vunpack.c.l.b16 %v63
  %v501 = vunpack.c.h.b16 %v63
  %v502 = vunpack.c.l.b16 %v64
  %v503 = vunpack.c.h.b16 %v64
  %v504 = vunpack.c.l.b16 %v65
  %v505 = vunpack.c.h.b16 %v65
  %v506 = vunpack.c.l.b16 %v66
  %v507 = vunpack.c.h.b16 %v66
  %v508 = vunpack.c.l.b16 %v67
  %v509 = vunpack.c.h.b16 %v67
  %v510 = vunpack.c.l.b16 %v68
  %v511 = vunpack.c.h.b16 %v68
  %v512 = vunpack.c.l.b16 %v69
  %v513 = vunpack.c.h.b16 %v69
  %v514 = vunpack.c.l.b16 %v70
  %v515 = vunpack.c.h.b16 %v70
  %v516 = vunpack.c.l.b16 %v71
  %v517 = vunpack.c.h.b16 %v71
  %v518 = vunpack.c.l.b16 %v72
  %v519 = vunpack.c.h.b16 %v72
  %v520 = vunpack.c.l.b16 %v73
  %v521 = vunpack.c.h.b16 %v73
  %v522 = vunpack.c.l.b16 %v74
  %v523 = vunpack.c.h.b16 %v74
  %v524 = vunpack.c.l.b16 %v75
  %v525 = vunpack.c.h.b16 %v75
  %v526 = vunpack.c.l.b16 %v76
  %v527 = vunpack.c.h.b16 %v76
  %v528 = vunpack.c.l.b16 %v77
  %v529 = vunpack.c.h.b16 %v77
  %v530 = vunpack.c.l.b16 %v78
  %v531 = vunpack.c.h.b16 %v78
  %v532 = vunpack.c.l.b16 %v79
  %v533 = vunpack.c.h.b16 %v79
  %v534 = vunpack.c.l.b16 %v80
  %v535 = vunpack.c.h.b16 %v80
  %v536 = vunpack.c.l.b16 %v81
  %v537 = vunpack.c.h.b16 %v81
  %v538 = vunpack.c.l.b16 %v82
  %v539 = vunpack.c.h.b16 %v82
  %v540 = vunpack.c.l.b16 %v83
  %v541 = vunpack.c.h.b16 %v83
  %v542 = vunpack.c.l.b16 %v84
  %v543 = vunpack.c.h.b16 %v84
  %v544 = vunpack.c.l.b16 %v85
  %v545 = vunpack.c.h.b16 %v85
  %v546 = vunpack.c.l.b16 %v86
  %v547 = vunpack.c.h.b16 %v86
  %v548 = vunpack.c.l.b16 %v87
  %v549 = vunpack.c.h.b16 %v87
  %v550 = vunpack.c.l.b16 %v88
  %v551 = vunpack.c.h.b16 %v88
  %v552 = vunpack.c.l.b16 %v89
  %v553 = vunpack.c.h.b16 %v89
  %v554 = vunpack.c.l.b16 %v90
  %v555 = vunpack.c.h.b16 %v90
  %v556 = vunpack.c.l.b16 %v91
  %v557 = vunpack.c.h.b16 %v91
  %v558 = vunpack.c.l.b16 %v92
  %v559 = vunpack.c.h.b16 %v92
  %v560 = vunpack.c.l.b16 %v93
  %v561 = vunpack.c.h.b16 %v93
  %v562 = vunpack.c.l.b16 %v94
  %v563 = vunpack.c.h.b16 %v94
  %v564 = vunpack.c.l.b16 %v95
  %v565 = vunpack.c.h.b16 %v95
  %v566 = vunpack.c.l.b16 %v96
  %v567 = vunpack.c.h.b16 %v96
  %v568 = vunpack.c.l.b16 %v97
  %v569 = vunpack.c.h.b16 %v97
  %v570 = vunpack.c.l.b16 %v98
  %v571 = vunpack.c.h.b16 %v98
  %v572 = vunpack.c.l.b16 %v99
  %v573 = vunpack.c.h.b16 %v99
  %v574 = vunpack.c.l.b16 %v100
  %v575 = vunpack.c.h.b16 %v100
  %v576 = vunpack.c.l.b16 %v101
  %v577 = vunpack.c.h.b16 %v101
  %v578 = vunpack.c.l.b16 %v102
  %v579 = vunpack.c.h.b16 %v102
  %v580 = vunpack.c.l.b16 %v103
  %v581 = vunpack.c.h.b16 %v103
  %v582 = vunpack.c.l.b16 %v104
  %v583 = vunpack.c.h.b16 %v104
  %v584 = vunpack.c.l.b16 %v105
  %v585 = vunpack.c.h.b16 %v105
  %v586 = vunpack.c.l.b16 %v106
  %v587 = vunpack.c.h.b16 %v106
  %v588 = vunpack.c.l.b16 %v107
  %v589 = vunpack.c.h.b16 %v107
  %v590 = vunpack.c.l.b16 %v108
  %v591 = vunpack.c.h.b16 %v108
  %v592 = vunpack.c.l.b16 %v109
  %v593 = vunpack.c.h.b16 %v109
  %v594 = vunpack.c.l.b16 %v110
  %v595 = vunpack.c.h.b16 %v110
  %v596 = vunpack.c.l.b16 %v111
  %v597 = vunpack.c.h.b16 %v111
  %v598 = vunpack.c.l.b16 %v112
  %v599 = vunpack.c.h.b16 %v112
  %v600 = vunpack.c.l.b16 %v113
  %v601 = vunpack.c.h.b16 %v113
  %v602 = vunpack.c.l.b16 %v114
  %v603 = vunpack.c.h.b16 %v114
  %v604 = vunpack.c.l.b16 %v115
  %v605 = vunpack.c.h.b16 %v115
  %v606 = vunpack.c.l.b16 %v116
  %v607 = vunpack.c.h.b16 %v116
  %v608 = vunpack.c.l.b16 %v117
  %v609 = vunpack.c.h.b16 %v117
  %v610 = vunpack.c.l.b16 %v118
  %v611 = vunpack.c.h.b16 %v118
  %v612 = vunpack.c.l.b16 %v119
  %v613 = vunpack.c.h.b16 %v119
  %v614 = vunpack.c.l.b16 %v120
  %v615 = vunpack.c.h.b16 %v120
  %v616 = vunpack.c.l.b16 %v121
  %v617 = vunpack.c.h.b16 %v121
  %v618 = vunpack.c.l.b16 %v122
  %v619 = vunpack.c.h.b16 %v122
  %v620 = vunpack.c.l.b16 %v123
  %v621 = vunpack.c.h.b16 %v123
  %v622 = vunpack.c.l.b16 %v124
  %v623 = vunpack.c.h.b16 %v124
  %v624 = vunpack.c.l.b16 %v125
  %v625 = vunpack.c.h.b16 %v125
  %v626 = vunpack.c.l.b16 %v126
  %v627 = vunpack.c.h.b16 %v126
  %v628 = vunpack.c.l.b16 %v127
  %v629 = vunpack.c.h.b16 %v127
  %v630 = vunpack.c.l.b16 %v128
  %v631 = vunpack.c.h.b16 %v128
  %v632 = vunpack.c.l.b16 %v129
  %v633 = vunpack.c.h.b16 %v129
  %v634 = vunpack.c.l.b16 %v130
  %v635 = vunpack.c.h.b16 %v130
  %v636 = vunpack.c.l.b16 %v131
  %v637 = vunpack.c.h.b16 %v131
  %v638 = vunpack.c.l.b16 %v132
  %v639 = vunpack.c.h.b16 %v132
  %v640 = vunpack.c.l.b16 %v133
  %v641 = vunpack.c.h.b16 %v133
  %v642 = vunpack.c.l.b16 %v134
  %v643 = vunpack.c.h.b16 %v134
  %v644 = vunpack.c.l.b16 %v135
  %v645 = vunpack.c.h.b16 %v135
  %v646 = vunpack.c.l.b16 %v136
  %v647 = vunpack.c.h.b16 %v136
  %v648 = vunpack.c.l.b16 %v137
  %v649 = vunpack.c.h.b16 %v137
  %v650 = vunpack.c.l.b16 %v138
  %v651 = vunpack.c.h.b16 %v138
  %v652 = vunpack.c.l.b16 %v139
  %v653 = vunpack.c.h.b16 %v139
  %v654 = vunpack.c.l.b16 %v140
  %v655 = vunpack.c.h.b16 %v140
  %v656 = vunpack.c.l.b16 %v141
  %v657 = vunpack.c.h.b16 %v141
  %v658 = vunpack.c.l.b16 %v142
  %v659 = vunpack.c.h.b16 %v142
  %v660 = vunpack.c.l.b16 %v143
  %v661 = vunpack.c.h.b16 %v143
  %v662 = vunpack.c.l.b16 %v144
  %v663 = vunpack.c.h.b16 %v144
  %v664 = vunpack.c.l.b16 %v145
  %v665 = vunpack.c.h.b16 %v145
  %v666 = vunpack.c.l.b16 %v146
  %v667 = vunpack.c.h.b16 %v146
  %v668 = vunpack.c.l.b16 %v147
  %v669 = vunpack.c.h.b16 %v147
  %v670 = vunpack.c.l.b16 %v148
  %v671 = vunpack.c.h.b16 %v148
  %v672 = vunpack.c.l.b16 %v149
  %v673 = vunpack.c.h.b16 %v149
  %v674 = vunpack.c.l.b16 %v150
  %v675 = vunpack.c.h.b16 %v150
  %v676 = vunpack.c.l.b16 %v151
  %v677 = vunpack.c.h.b16 %v151
  %v678 = vunpack.c.l.b16 %v152
  %v679 = vunpack.c.h.b16 %v152
  %v680 = vunpack.c.l.b16 %v153
  %v681 = vunpack.c.h.b16 %v153
  %v682 = vunpack.c.l.b16 %v154
  %v683 = vunpack.c.h.b16 %v154
  %v684 = vunpack.c.l.b16 %v155
  %v685 = vunpack.c.h.b16 %v155
  %v686 = vunpack.c.l.b16 %v156
  %v687 = vunpack.c.h.b16 %v156
  %v688 = vunpack.c.l.b16 %v157
  %v689 = vunpack.c.h.b16 %v157
  %v690 = vunpack.c.l.b16 %v158
  %v691 = vunpack.c.h.b16 %v158
  %v692 = vunpack.c.l.b16 %v159
  %v693 = vunpack.c.h.b16 %v159
  %v694 = vunpack.c.l.b16 %v160
  %v695 = vunpack.c.h.b16 %v160
  %v696 = vunpack.c.l.b16 %v161
  %v697 = vunpack.c.h.b16 %v161
  %v698 = vunpack.c.l.b16 %v162
  %v699 = vunpack.c.h.b16 %v162
  %v700 = vunpack.c.l.b16 %v163
  %v701 = vunpack.c.h.b16 %v163
  %v702 = vunpack.c.l.b16 %v164
  %v703 = vunpack.c.h.b16 %v164
  %v704 = vunpack.c.l.b16 %v165
  %v705 = vunpack.c.h.b16 %v165
  %v706 = vunpack.c.l.b16 %v166
  %v707 = vunpack.c.h.b16 %v166
  %v708 = vunpack.c.l.b16 %v167
  %v709 = vunpack.c.h.b16 %v167
  %v710 = vunpack.c.l.b16 %v168
  %v711 = vunpack.c.h.b16 %v168
  %v712 = vunpack.c.l.b16 %v169
  %v713 = vunpack.c.h.b16 %v169
  %v714 = vunpack.c.l.b16 %v170
  %v715 = vunpack.c.h.b16 %v170
  %v716 = vunpack.c.l.b16 %v171
  %v717 = vunpack.c.h.b16 %v171
  %v718 = vunpack.c.l.b16 %v172
  %v719 = vunpack.c.h.b16 %v172
  %v720 = vunpack.c.l.b16 %v173
  %v721 = vunpack.c.h.b16 %v173
  %v722 = vunpack.c.l.b16 %v174
  %v723 = vunpack.c.h.b16 %v174
  %v724 = vunpack.c.l.b16 %v175
  %v725 = vunpack.c.h.b16 %v175
  %v726 = vunpack.c.l.b16 %v176
  %v727 = vunpack.c.h.b16 %v176
  %v728 = vunpack.c.l.b16 %v177
  %v729 = vunpack.c.h.b16 %v177
  %v730 = vunpack.c.l.b16 %v178
  %v731 = vunpack.c.h.b16 %v178
  %v732 = vunpack.c.l.b16 %v179
  %v733 = vunpack.c.h.b16 %v179
  %v734 = vunpack.c.l.b16 %v180
  %v735 = vunpack.c.h.b16 %v180
  %v736 = vunpack.c.l.b16 %v181
  %v737 = vunpack.c.h.b16 %v181
  %v738 = vunpack.c.l.b16 %v182
  %v739 = vunpack.c.h.b16 %v182
  %v740 = vunpack.c.l.b16 %v183
  %v741 = vunpack.c.h.b16 %v183
  %v742 = vunpack.c.l.b16 %v184
  %v743 = vunpack.c.h.b16 %v184
  %v744 = vunpack.c.l.b16 %v185
  %v745 = vunpack.c.h.b16 %v185
  %v746 = vunpack.c.l.b16 %v186
  %v747 = vunpack.c.h.b16 %v186
  %v748 = vunpack.c.l.b16 %v187
  %v749 = vunpack.c.h.b16 %v187
  %v750 = vunpack.c.l.b16 %v188
  %v751 = vunpack.c.h.b16 %v188
  %v752 = vunpack.c.l.b16 %v189
  %v753 = vunpack.c.h.b16 %v189
  %v754 = vunpack.c.l.b16 %v190
  %v755 = vunpack.c.h.b16 %v190
  %v756 = vunpack.c.l.b16 %v191
  %v757 = vunpack.c.h.b16 %v191
  %v758 = vunpack.c.l.b16 %v192
  %v759 = vunpack.c.h.b16 %v192
  %v760 = vunpack.c.l.b16 %v193
  %v761 = vunpack.c.h.b16 %v193
  %v762 = vunpack.c.l.b16 %v194
  %v763 = vunpack.c.h.b16 %v194
  %v764 = vunpack.c.l.b16 %v195
  %v765 = vunpack.c.h.b16 %v195
  %v766 = vunpack.c.l.b16 %v196
  %v767 = vunpack.c.h.b16 %v196
  %v768 = vunpack.c.l.b16 %v197
  %v769 = vunpack.c.h.b16 %v197
  %v770 = vunpack.c.l.b16 %v198
  %v771 = vunpack.c.h.b16 %v198
  %v772 = vunpack.c.l.b16 %v199
  %v773 = vunpack.c.h.b16 %v199
  %v774 = vunpack.c.l.b16 %v200
  %v775 = vunpack.c.h.b16 %v200
  %v776 = vunpack.c.l.b16 %v201
  %v777 = vunpack.c.h.b16 %v201
  %v778 = vunpack.c.l.b16 %v202
  %v779 = vunpack.c.h.b16 %v202
  %v780 = vunpack.c.l.b16 %v203
  %v781 = vunpack.c.h.b16 %v203
  %v782 = vunpack.c.l.b16 %v204
  %v783 = vunpack.c.h.b16 %v204
  %v784 = vunpack.c.l.b16 %v205
  %v785 = vunpack.c.h.b16 %v205
  %v786 = vunpack.c.l.b16 %v206
  %v787 = vunpack.c.h.b16 %v206
  %v788 = vunpack.c.l.b16 %v207
  %v789 = vunpack.c.h.b16 %v207
  %v790 = vunpack.c.l.b16 %v208
  %v791 = vunpack.c.h.b16 %v208
  %v792 = vunpack.c.l.b16 %v209
  %v793 = vunpack.c.h.b16 %v209
  %v794 = vunpack.c.l.b16 %v210
  %v795 = vunpack.c.h.b16 %v210
  %v796 = vunpack.c.l.b16 %v211
  %v797 = vunpack.c.h.b16 %v211
  %v798 = vunpack.c.l.b16 %v212
  %v799 = vunpack.c.h.b16 %v212
  %v800 = vunpack.c.l.b16 %v213
  %v801 = vunpack.c.h.b16 %v213
  %v802 = vunpack.c.l.b16 %v214
  %v803 = vunpack.c.h.b16 %v214
  %v804 = vunpack.c.l.b16 %v215
  %v805 = vunpack.c.h.b16 %v215
  %v806 = vunpack.c.l.b16 %v216
  %v807 = vunpack.c.h.b16 %v216
  %v808 = vunpack.c.l.b16 %v217
  %v809 = vunpack.c.h.b16 %v217
  %v810 = vunpack.c.l.b16 %v218
  %v811 = vunpack.c.h.b16 %v218
  %v812 = vunpack.c.l.b16 %v219
  %v813 = vunpack.c.h.b16 %v219
  %v814 = vunpack.c.l.b16 %v220
  %v815 = vunpack.c.h.b16 %v220
  %v816 = vunpack.c.l.b16 %v221
  %v817 = vunpack.c.h.b16 %v221
  %v818 = vunpack.c.l.b16 %v222
  %v819 = vunpack.c.h.b16 %v222
  %v820 = vunpack.c.l.b16 %v223
  %v821 = vunpack.c.h.b16 %v223
  %v822 = vunpack.c.l.b16 %v224
  %v823 = vunpack.c.h.b16 %v224
  %v824 = vunpack.c.l.b16 %v225
  %v825 = vunpack.c.h.b16 %v225
  %v826 = vunpack.c.l.b16 %v226
  %v827 = vunpack.c.h.b16 %v226
  %v828 = vunpack.c.l.b16 %v227
  %v829 = vunpack.c.h.b16 %v227
  %v830 = vunpack.c.l.b16 %v228
  %v831 = vunpack.c.h.b16 %v228
  %v832 = vunpack.c.l.b16 %v229
  %v833 = vunpack.c.h.b16 %v229
  %v834 = vunpack.c.l.b16 %v230
  %v835 = vunpack.c.h.b16 %v230
  %v836 = vunpack.c.l.b16 %v231
  %v837 = vunpack.c.h.b16 %v231
  %v838 = vunpack.c.l.b16 %v232
  %v839 = vunpack.c.h.b16 %v232
  %v840 = vunpack.c.l.b16 %v233
  %v841 = vunpack.c.h.b16 %v233
  %v842 = vunpack.c.l.b16 %v234
  %v843 = vunpack.c.h.b16 %v234
  %v844 = vunpack.c.l.b16 %v235
  %v845 = vunpack.c.h.b16 %v235
  %v846 = vunpack.c.l.b16 %v236
  %v847 = vunpack.c.h.b16 %v236
  %v848 = vunpack.c.l.b16 %v237
  %v849 = vunpack.c.h.b16 %v237
  %v850 = vunpack.c.l.b16 %v238
  %v851 = vunpack.c.h.b16 %v238
  %v852 = vunpack.c.l.b16 %v239
  %v853 = vunpack.c.h.b16 %v239
  %v854 = vunpack.c.l.b16 %v240
  %v855 = vunpack.c.h.b16 %v240
  %v856 = vunpack.c.l.b16 %v241
  %v857 = vunpack.c.h.b16 %v241
  %v858 = vunpack.c.l.b16 %v242
  %v859 = vunpack.c.h.b16 %v242
  %v860 = vunpack.c.l.b16 %v243
  %v861 = vunpack.c.h.b16 %v243
  %v862 = vunpack.c.l.b16 %v244
  %v863 = vunpack.c.h.b16 %v244
  %v864 = vpack.c.b16 %v484, %v480
  %v865 = vpack.c.b16 %v485, %v481
  %v866 = vpack.c.b16 %v486, %v482
  %v867 = vpack.c.b16 %v487, %v483
  %v868 = vpack.c.b16 %v492, %v488
  %v869 = vpack.c.b16 %v493, %v489
  %v870 = vpack.c.b16 %v494, %v490
  %v871 = vpack.c.b16 %v495, %v491
  %v872 = vpack.c.b16 %v500, %v496
  %v873 = vpack.c.b16 %v501, %v497
  %v874 = vpack.c.b16 %v502, %v498
  %v875 = vpack.c.b16 %v503, %v499
  %v876 = vpack.c.b16 %v508, %v504
  %v877 = vpack.c.b16 %v509, %v505
  %v878 = vpack.c.b16 %v510, %v506
  %v879 = vpack.c.b16 %v511, %v507
  %v880 = vpack.c.b16 %v516, %v512
  %v881 = vpack.c.b16 %v517, %v513
  %v882 = vpack.c.b16 %v518, %v514
  %v883 = vpack.c.b16 %v519, %v515
  %v884 = vpack.c.b16 %v524, %v520
  %v885 = vpack.c.b16 %v525, %v521
  %v886 = vpack.c.b16 %v526, %v522
  %v887 = vpack.c.b16 %v527, %v523
  %v888 = vpack.c.b16 %v532, %v528
  %v889 = vpack.c.b16 %v533, %v529
  %v890 = vpack.c.b16 %v534, %v530
  %v891 = vpack.c.b16 %v535, %v531
  %v892 = vpack.c.b16 %v540, %v536
  %v893 = vpack.c.b16 %v541, %v537
  %v894 = vpack.c.b16 %v542, %v538
  %v895 = vpack.c.b16 %v543, %v539
  %v896 = vpack.c.b16 %v548, %v544
  %v897 = vpack.c.b16 %v549, %v545
  %v898 = vpack.c.b16 %v550, %v546
  %v899 = vpack.c.b16 %v551, %v547
  %v900 = vpack.c.b16 %v556, %v552
  %v901 = vpack.c.b16 %v557, %v553
  %v902 = vpack.c.b16 %v558, %v554
  %v903 = vpack.c.b16 %v559, %v555
  %v904 = vpack.c.b16 %v564, %v560
  %v905 = vpack.c.b16 %v565, %v561
  %v906 = vpack.c.b16 %v566, %v562
  %v907 = vpack.c.b16 %v567, %v563
  %v908 = vpack.c.b16 %v572, %v568
  %v909 = vpack.c.b16 %v573, %v569
  %v910 = vpack.c.b16 %v574, %v570
  %v911 = vpack.c.b16 %v575, %v571
  %v912 = vpack.c.b16 %v580, %v576
  %v913 = vpack.c.b16 %v581, %v577
  %v914 = vpack.c.b16 %v582, %v578
  %v915 = vpack.c.b16 %v583, %v579
  %v916 = vpack.c.b16 %v588, %v584
  %v917 = vpack.c.b16 %v589, %v585
  %v918 = vpack.c.b16 %v590, %v586
  %v919 = vpack.c.b16 %v591, %v587
  %v920 = vpack.c.b16 %v596, %v592
  %v921 = vpack.c.b16 %v597, %v593
  %v922 = vpack.c.b16 %v598, %v594
  %v923 = vpack.c.b16 %v599, %v595
  %v924 = vpack.c.b16 %v604, %v600
  %v925 = vpack.c.b16 %v605, %v601
  %v926 = vpack.c.b16 %v606, %v602
  %v927 = vpack.c.b16 %v607, %v603
  %v928 = vpack.c.b16 %v612, %v608
  %v929 = vpack.c.b16 %v613, %v609
  %v930 = vpack.c.b16 %v614, %v610
  %v931 = vpack.c.b16 %v615, %v611
  %v932 = vpack.c.b16 %v620, %v616
  %v933 = vpack.c.b16 %v621, %v617
  %v934 = vpack.c.b16 %v622, %v618
  %v935 = vpack.c.b16 %v623, %v619
  %v936 = vpack.c.b16 %v628, %v624
  %v937 = vpack.c.b16 %v629, %v625
  %v938 = vpack.c.b16 %v630, %v626
  %v939 = vpack.c.b16 %v631, %v627
  %v940 = vpack.c.b16 %v636, %v632
  %v941 = vpack.c.b16 %v637, %v633
  %v942 = vpack.c.b16 %v638, %v634
  %v943 = vpack.c.b16 %v639, %v635
  %v944 = vpack.c.b16 %v644, %v640
  %v945 = vpack.c.b16 %v645, %v641
  %v946 = vpack.c.b16 %v646, %v642
  %v947 = vpack.c.b16 %v647, %v643
  %v948 = vpack.c.b16 %v652, %v648
  %v949 = vpack.c.b16 %v653, %v649
  %v950 = vpack.c.b16 %v654, %v650
  %v951 = vpack.c.b16 %v655, %v651
  %v952 = vpack.c.b16 %v660, %v656
  %v953 = vpack.c.b16 %v661, %v657
  %v954 = vpack.c.b16 %v662, %v658
  %v955 = vpack.c.b16 %v663, %v659
  %v956 = vpack.c.b16 %v668, %v664
  %v957 = vpack.c.b16 %v669, %v665
  %v958 = vpack.c.b16 %v670, %v666
  %v959 = vpack.c.b16 %v671, %v667
  %v960 = vpack.c.b16 %v676, %v672
  %v961 = vpack.c.b16 %v677, %v673
  %v962 = vpack.c.b16 %v678, %v674
  %v963 = vpack.c.b16 %v679, %v675
  %v964 = vpack.c.b16 %v684, %v680
  %v965 = vpack.c.b16 %v685, %v681
  %v966 = vpack.c.b16 %v686, %v682
  %v967 = vpack.c.b16 %v687, %v683
  %v968 = vpack.c.b16 %v692, %v688
  %v969 = vpack.c.b16 %v693, %v689
  %v970 = vpack.c.b16 %v694, %v690
  %v971 = vpack.c.b16 %v695, %v691
  %v972 = vpack.c.b16 %v700, %v696
  %v973 = vpack.c.b16 %v701, %v697
  %v974 = vpack.c.b16 %v702, %v698
  %v975 = vpack.c.b16 %v703, %v699
  %v976 = vpack.c.b16 %v708, %v704
  %v977 = vpack.c.b16 %v709, %v705
  %v978 = vpack.c.b16 %v710, %v706
  %v979 = vpack.c.b16 %v711, %v707
  %v980 = vpack.c.b16 %v716, %v712
  %v981 = vpack.c.b16 %v717, %v713
  %v982 = vpack.c.b16 %v718, %v714
  %v983 = vpack.c.b16 %v719, %v715
  %v984 = vpack.c.b16 %v724, %v720
  %v985 = vpack.c.b16 %v725, %v721
  %v986 = vpack.c.b16 %v726, %v722
  %v987 = vpack.c.b16 %v727, %v723
  %v988 = vpack.c.b16 %v732, %v728
  %v989 = vpack.c.b16 %v733, %v729
  %v990 = vpack.c.b16 %v734, %v730
  %v991 = vpack.c.b16 %v735, %v731
  %v992 = vpack.c.b16 %v740, %v736
  %v993 = vpack.c.b16 %v741, %v737
  %v994 = vpack.c.b16 %v742, %v738
  %v995 = vpack.c.b16 %v743, %v739
  %v996 = vpack.c.b16 %v748, %v744
  %v997 = vpack.c.b16 %v749, %v745
  %v998 = vpack.c.b16 %v750, %v746
  %v999 = vpack.c.b16 %v751, %v747
  %v1000 = vpack.c.b16 %v756, %v752
  %v1001 = vpack.c.b16 %v757, %v753
  %v1002 = vpack.c.b16 %v758, %v754
  %v1003 = vpack.c.b16 %v759, %v755
  %v1004 = vpack.c.b16 %v764, %v760
  %v1005 = vpack.c.b16 %v765, %v761
  %v1006 = vpack.c.b16 %v766, %v762
  %v1007 = vpack.c.b16 %v767, %v763
  %v1008 = vpack.c.b16 %v772, %v768
  %v1009 = vpack.c.b16 %v773, %v769
  %v1010 = vpack.c.b16 %v774, %v770
  %v1011 = vpack.c.b16 %v775, %v771
  %v1012 = vpack.c.b16 %v780, %v776
  %v1013 = vpack.c.b16 %v781, %v777
  %v1014 = vpack.c.b16 %v782, %v778
  %v1015 = vpack.c.b16 %v783, %v779
  %v1016 = vpack.c.b16 %v788, %v784
  %v1017 = vpack.c.b16 %v789, %v785
  %v1018 = vpack.c.b16 %v790, %v786
  %v1019 = vpack.c.b16 %v791, %v787
  %v1020 = vpack.c.b16 %v796, %v792
  %v1021 = vpack.c.b16 %v797, %v793
  %v1022 = vpack.c.b16 %v798, %v794
  %v1023 = vpack.c.b16 %v799, %v795
  %v1024 = vpack.c.b16 %v804, %v800
  %v1025 = vpack.c.b16 %v805, %v801
  %v1026 = vpack.c.b16 %v806, %v802
  %v1027 = vpack.c.b16 %v807, %v803
  %v1028 = vpack.c.b16 %v812, %v808
  %v1029 = vpack.c.b16 %v813, %v809
  %v1030 = vpack.c.b16 %v814, %v810
  %v1031 = vpack.c.b16 %v815, %v811
  %v1032 = vpack.c.b16 %v820, %v816
  %v1033 = vpack.c.b16 %v821, %v817
  %v1034 = vpack.c.b16 %v822, %v818
  %v1035 = vpack.c.b16 %v823, %v819
  %v1036 = vpack.c.b16 %v828, %v824
  %v1037 = vpack.c.b16 %v829, %v825
  %v1038 = vpack.c.b16 %v830, %v826
  %v1039 = vpack.c.b16 %v831, %v827
  %v1040 = vpack.c.b16 %v836, %v832
  %v1041 = vpack.c.b16 %v837, %v833
  %v1042 = vpack.c.b16 %v838, %v834
  %v1043 = vpack.c.b16 %v839, %v835
  %v1044 = vpack.c.b16 %v844, %v840
  %v1045 = vpack.c.b16 %v845, %v841
  %v1046 = vpack.c.b16 %v846, %v842
  %v1047 = vpack.c.b16 %v847, %v843
  %v1048 = vpack.c.b16 %v852, %v848
  %v1049 = vpack.c.b16 %v853, %v849
  %v1050 = vpack.c.b16 %v854, %v850
  %v1051 = vpack.c.b16 %v855, %v851
  %v1052 = vpack.c.b16 %v860, %v856
  %v1053 = vpack.c.b16 %v861, %v857
  %v1054 = vpack.c.b16 %v862, %v858
  %v1055 = vpack.c.b16 %v863, %v859
  %1248 = vmatprep.subr.bf16.mxu0 %v893
  %1249 = vmatpush1.bf16.msra.mxu0 %v892
  %1250 = vmatprep.subr.bf16.mxu0 %v889
  %1251 = vmatpush1.bf16.msra.mxu0 %v888
  %1252 = vmatprep.subr.bf16.mxu0 %v885
  %1253 = vmatpush1.bf16.msra.mxu0 %v884
  %1254 = vmatprep.subr.bf16.mxu0 %v881
  %1255 = vmatpush1.bf16.msra.mxu0 %v880
  %1256 = vmatprep.subr.bf16.mxu0 %v877
  %1257 = vmatpush1.bf16.msra.mxu0 %v876
  %1258 = vmatprep.subr.bf16.mxu0 %v873
  %1259 = vmatpush1.bf16.msra.mxu0 %v872
  %1260 = vmatprep.subr.bf16.mxu0 %v869
  %1261 = vmatpush1.bf16.msra.mxu0 %v868
  %1262 = vmatprep.subr.bf16.mxu0 %v865
  %1263 = vmatpush1.bf16.msra.mxu0 %v864
  %1264 = vmatprep.subr.bf16.mxu0 %v925
  %1265 = vmatpush2.bf16.msra.mxu0 %v924
  %1266 = vmatprep.subr.bf16.mxu0 %v921
  %1267 = vmatpush2.bf16.msra.mxu0 %v920
  %1268 = vmatprep.subr.bf16.mxu0 %v917
  %1269 = vmatpush2.bf16.msra.mxu0 %v916
  %1270 = vmatprep.subr.bf16.mxu0 %v913
  %1271 = vmatpush2.bf16.msra.mxu0 %v912
  %1272 = vmatprep.subr.bf16.mxu0 %v909
  %1273 = vmatpush2.bf16.msra.mxu0 %v908
  %1274 = vmatprep.subr.bf16.mxu0 %v905
  %1275 = vmatpush2.bf16.msra.mxu0 %v904
  %1276 = vmatprep.subr.bf16.mxu0 %v901
  %1277 = vmatpush2.bf16.msra.mxu0 %v900
  %1278 = vmatprep.subr.bf16.mxu0 %v897
  %1279 = vmatpush2.bf16.msra.mxu0 %v896
  %1280 = vmatprep.mubr.bf16.mxu0 %v277
  %1281 = vmatmul.mubr.bf16.gmra.mxu0 %v276
  %v1282 = vpop.f32.mrf.mxu0
  %v1283 = vadd.f32 %v250, %v1282
  %v1284 = vpop.f32.mrf.mxu0
  %v1285 = vadd.f32 %v254, %v1284
  %v1286 = vpop.f32.mrf.mxu0
  %v1287 = vpop.f32.mrf.mxu0
  %1288 = vdwg.mxu0
  %1289 = vmatprep.subr.bf16.mxu0 %v957
  %1290 = vmatpush1.bf16.msra.mxu0 %v956
  %1291 = vmatprep.subr.bf16.mxu0 %v953
  %1292 = vmatpush1.bf16.msra.mxu0 %v952
  %1293 = vmatprep.subr.bf16.mxu0 %v949
  %1294 = vmatpush1.bf16.msra.mxu0 %v948
  %1295 = vmatprep.subr.bf16.mxu0 %v945
  %1296 = vmatpush1.bf16.msra.mxu0 %v944
  %1297 = vmatprep.subr.bf16.mxu0 %v941
  %1298 = vmatpush1.bf16.msra.mxu0 %v940
  %1299 = vmatprep.subr.bf16.mxu0 %v937
  %1300 = vmatpush1.bf16.msra.mxu0 %v936
  %1301 = vmatprep.subr.bf16.mxu0 %v933
  %1302 = vmatpush1.bf16.msra.mxu0 %v932
  %1303 = vmatprep.subr.bf16.mxu0 %v929
  %1304 = vmatpush1.bf16.msra.mxu0 %v928
  %1305 = vmatprep.subr.bf16.mxu0 %v989
  %1306 = vmatpush2.bf16.msra.mxu0 %v988
  %1307 = vmatprep.subr.bf16.mxu0 %v985
  %1308 = vmatpush2.bf16.msra.mxu0 %v984
  %1309 = vmatprep.subr.bf16.mxu0 %v981
  %1310 = vmatpush2.bf16.msra.mxu0 %v980
  %1311 = vmatprep.subr.bf16.mxu0 %v977
  %1312 = vmatpush2.bf16.msra.mxu0 %v976
  %1313 = vmatprep.subr.bf16.mxu0 %v973
  %1314 = vmatpush2.bf16.msra.mxu0 %v972
  %1315 = vmatprep.subr.bf16.mxu0 %v969
  %1316 = vmatpush2.bf16.msra.mxu0 %v968
  %1317 = vmatprep.subr.bf16.mxu0 %v965
  %1318 = vmatpush2.bf16.msra.mxu0 %v964
  %1319 = vmatprep.subr.bf16.mxu0 %v961
  %1320 = vmatpush2.bf16.msra.mxu0 %v960
  %1321 = vmatprep.mubr.bf16.mxu0 %v279
  %1322 = vmatmul.mubr.bf16.gmra.mxu0 %v278
  %v1323 = vpop.f32.mrf.mxu0
  %v1324 = vadd.f32 %v1283, %v1323
  %v1325 = vpop.f32.mrf.mxu0
  %v1326 = vadd.f32 %v1285, %v1325
  %v1327 = vpop.f32.mrf.mxu0
  %v1328 = vpop.f32.mrf.mxu0
  %1329 = vdwg.mxu0
  %1330 = vmatprep.subr.bf16.mxu0 %v1021
  %1331 = vmatpush1.bf16.msra.mxu0 %v1020
  %1332 = vmatprep.subr.bf16.mxu0 %v1017
  %1333 = vmatpush1.bf16.msra.mxu0 %v1016
  %1334 = vmatprep.subr.bf16.mxu0 %v1013
  %1335 = vmatpush1.bf16.msra.mxu0 %v1012
  %1336 = vmatprep.subr.bf16.mxu0 %v1009
  %1337 = vmatpush1.bf16.msra.mxu0 %v1008
  %1338 = vmatprep.subr.bf16.mxu0 %v1005
  %1339 = vmatpush1.bf16.msra.mxu0 %v1004
  %1340 = vmatprep.subr.bf16.mxu0 %v1001
  %1341 = vmatpush1.bf16.msra.mxu0 %v1000
  %1342 = vmatprep.subr.bf16.mxu0 %v997
  %1343 = vmatpush1.bf16.msra.mxu0 %v996
  %1344 = vmatprep.subr.bf16.mxu0 %v993
  %1345 = vmatpush1.bf16.msra.mxu0 %v992
  %1346 = vmatprep.subr.bf16.mxu0 %v1053
  %1347 = vmatpush2.bf16.msra.mxu0 %v1052
  %1348 = vmatprep.subr.bf16.mxu0 %v1049
  %1349 = vmatpush2.bf16.msra.mxu0 %v1048
  %1350 = vmatprep.subr.bf16.mxu0 %v1045
  %1351 = vmatpush2.bf16.msra.mxu0 %v1044
  %1352 = vmatprep.subr.bf16.mxu0 %v1041
  %1353 = vmatpush2.bf16.msra.mxu0 %v1040
  %1354 = vmatprep.subr.bf16.mxu0 %v1037
  %1355 = vmatpush2.bf16.msra.mxu0 %v1036
  %1356 = vmatprep.subr.bf16.mxu0 %v1033
  %1357 = vmatpush2.bf16.msra.mxu0 %v1032
  %1358 = vmatprep.subr.bf16.mxu0 %v1029
  %1359 = vmatpush2.bf16.msra.mxu0 %v1028
  %1360 = vmatprep.subr.bf16.mxu0 %v1025
  %1361 = vmatpush2.bf16.msra.mxu0 %v1024
  %1362 = vmatprep.mubr.bf16.mxu0 %v281
  %1363 = vmatmul.mubr.bf16.gmra.mxu0 %v280
  %v1364 = vpop.f32.mrf.mxu0
  %v1365 = vadd.f32 %v1324, %v1364
  %v1366 = vpop.f32.mrf.mxu0
  %v1367 = vadd.f32 %v1326, %v1366
  %v1368 = vpop.f32.mrf.mxu0
  %v1369 = vpop.f32.mrf.mxu0
  %1370 = vdwg.mxu0
  %1371 = vmatprep.subr.bf16.mxu0 %v895
  %1372 = vmatpush1.bf16.msra.mxu0 %v894
  %1373 = vmatprep.subr.bf16.mxu0 %v891
  %1374 = vmatpush1.bf16.msra.mxu0 %v890
  %1375 = vmatprep.subr.bf16.mxu0 %v887
  %1376 = vmatpush1.bf16.msra.mxu0 %v886
  %1377 = vmatprep.subr.bf16.mxu0 %v883
  %1378 = vmatpush1.bf16.msra.mxu0 %v882
  %1379 = vmatprep.subr.bf16.mxu0 %v879
  %1380 = vmatpush1.bf16.msra.mxu0 %v878
  %1381 = vmatprep.subr.bf16.mxu0 %v875
  %1382 = vmatpush1.bf16.msra.mxu0 %v874
  %1383 = vmatprep.subr.bf16.mxu0 %v871
  %1384 = vmatpush1.bf16.msra.mxu0 %v870
  %1385 = vmatprep.subr.bf16.mxu0 %v867
  %1386 = vmatpush1.bf16.msra.mxu0 %v866
  %1387 = vmatprep.subr.bf16.mxu0 %v927
  %1388 = vmatpush2.bf16.msra.mxu0 %v926
  %1389 = vmatprep.subr.bf16.mxu0 %v923
  %1390 = vmatpush2.bf16.msra.mxu0 %v922
  %1391 = vmatprep.subr.bf16.mxu0 %v919
  %1392 = vmatpush2.bf16.msra.mxu0 %v918
  %1393 = vmatprep.subr.bf16.mxu0 %v915
  %1394 = vmatpush2.bf16.msra.mxu0 %v914
  %1395 = vmatprep.subr.bf16.mxu0 %v911
  %1396 = vmatpush2.bf16.msra.mxu0 %v910
  %1397 = vmatprep.subr.bf16.mxu0 %v907
  %1398 = vmatpush2.bf16.msra.mxu0 %v906
  %1399 = vmatprep.subr.bf16.mxu0 %v903
  %1400 = vmatpush2.bf16.msra.mxu0 %v902
  %1401 = vmatprep.subr.bf16.mxu0 %v899
  %1402 = vmatpush2.bf16.msra.mxu0 %v898
  %1403 = vmatprep.mubr.bf16.mxu0 %v277
  %1404 = vmatmul.mubr.bf16.gmra.mxu0 %v276
  %v1405 = vpop.f32.mrf.mxu0
  %v1406 = vadd.f32 %v258, %v1405
  %v1407 = vpop.f32.mrf.mxu0
  %v1408 = vadd.f32 %v262, %v1407
  %v1409 = vpop.f32.mrf.mxu0
  %v1410 = vpop.f32.mrf.mxu0
  %1411 = vdwg.mxu0
  %1412 = vmatprep.subr.bf16.mxu0 %v959
  %1413 = vmatpush1.bf16.msra.mxu0 %v958
  %1414 = vmatprep.subr.bf16.mxu0 %v955
  %1415 = vmatpush1.bf16.msra.mxu0 %v954
  %1416 = vmatprep.subr.bf16.mxu0 %v951
  %1417 = vmatpush1.bf16.msra.mxu0 %v950
  %1418 = vmatprep.subr.bf16.mxu0 %v947
  %1419 = vmatpush1.bf16.msra.mxu0 %v946
  %1420 = vmatprep.subr.bf16.mxu0 %v943
  %1421 = vmatpush1.bf16.msra.mxu0 %v942
  %1422 = vmatprep.subr.bf16.mxu0 %v939
  %1423 = vmatpush1.bf16.msra.mxu0 %v938
  %1424 = vmatprep.subr.bf16.mxu0 %v935
  %1425 = vmatpush1.bf16.msra.mxu0 %v934
  %1426 = vmatprep.subr.bf16.mxu0 %v931
  %1427 = vmatpush1.bf16.msra.mxu0 %v930
  %1428 = vmatprep.subr.bf16.mxu0 %v991
  %1429 = vmatpush2.bf16.msra.mxu0 %v990
  %1430 = vmatprep.subr.bf16.mxu0 %v987
  %1431 = vmatpush2.bf16.msra.mxu0 %v986
  %1432 = vmatprep.subr.bf16.mxu0 %v983
  %1433 = vmatpush2.bf16.msra.mxu0 %v982
  %1434 = vmatprep.subr.bf16.mxu0 %v979
  %1435 = vmatpush2.bf16.msra.mxu0 %v978
  %1436 = vmatprep.subr.bf16.mxu0 %v975
  %1437 = vmatpush2.bf16.msra.mxu0 %v974
  %1438 = vmatprep.subr.bf16.mxu0 %v971
  %1439 = vmatpush2.bf16.msra.mxu0 %v970
  %1440 = vmatprep.subr.bf16.mxu0 %v967
  %1441 = vmatpush2.bf16.msra.mxu0 %v966
  %1442 = vmatprep.subr.bf16.mxu0 %v963
  %1443 = vmatpush2.bf16.msra.mxu0 %v962
  %1444 = vmatprep.mubr.bf16.mxu0 %v279
  %1445 = vmatmul.mubr.bf16.gmra.mxu0 %v278
  %v1446 = vpop.f32.mrf.mxu0
  %v1447 = vadd.f32 %v1406, %v1446
  %v1448 = vpop.f32.mrf.mxu0
  %v1449 = vadd.f32 %v1408, %v1448
  %v1450 = vpop.f32.mrf.mxu0
  %v1451 = vpop.f32.mrf.mxu0
  %1452 = vdwg.mxu0
  %1453 = vmatprep.subr.bf16.mxu0 %v1023
  %1454 = vmatpush1.bf16.msra.mxu0 %v1022
  %1455 = vmatprep.subr.bf16.mxu0 %v1019
  %1456 = vmatpush1.bf16.msra.mxu0 %v1018
  %1457 = vmatprep.subr.bf16.mxu0 %v1015
  %1458 = vmatpush1.bf16.msra.mxu0 %v1014
  %1459 = vmatprep.subr.bf16.mxu0 %v1011
  %1460 = vmatpush1.bf16.msra.mxu0 %v1010
  %1461 = vmatprep.subr.bf16.mxu0 %v1007
  %1462 = vmatpush1.bf16.msra.mxu0 %v1006
  %1463 = vmatprep.subr.bf16.mxu0 %v1003
  %1464 = vmatpush1.bf16.msra.mxu0 %v1002
  %1465 = vmatprep.subr.bf16.mxu0 %v999
  %1466 = vmatpush1.bf16.msra.mxu0 %v998
  %1467 = vmatprep.subr.bf16.mxu0 %v995
  %1468 = vmatpush1.bf16.msra.mxu0 %v994
  %1469 = vmatprep.subr.bf16.mxu0 %v1055
  %1470 = vmatpush2.bf16.msra.mxu0 %v1054
  %1471 = vmatprep.subr.bf16.mxu0 %v1051
  %1472 = vmatpush2.bf16.msra.mxu0 %v1050
  %1473 = vmatprep.subr.bf16.mxu0 %v1047
  %1474 = vmatpush2.bf16.msra.mxu0 %v1046
  %1475 = vmatprep.subr.bf16.mxu0 %v1043
  %1476 = vmatpush2.bf16.msra.mxu0 %v1042
  %1477 = vmatprep.subr.bf16.mxu0 %v1039
  %1478 = vmatpush2.bf16.msra.mxu0 %v1038
  %1479 = vmatprep.subr.bf16.mxu0 %v1035
  %1480 = vmatpush2.bf16.msra.mxu0 %v1034
  %1481 = vmatprep.subr.bf16.mxu0 %v1031
  %1482 = vmatpush2.bf16.msra.mxu0 %v1030
  %1483 = vmatprep.subr.bf16.mxu0 %v1027
  %1484 = vmatpush2.bf16.msra.mxu0 %v1026
  %1485 = vmatprep.mubr.bf16.mxu0 %v281
  %1486 = vmatmul.mubr.bf16.gmra.mxu0 %v280
  %v1487 = vpop.f32.mrf.mxu0
  %v1488 = vadd.f32 %v1447, %v1487
  %v1489 = vpop.f32.mrf.mxu0
  %v1490 = vadd.f32 %v1449, %v1489
  %v1491 = vpop.f32.mrf.mxu0
  %v1492 = vpop.f32.mrf.mxu0
  %1493 = vdwg.mxu0
  %v1494 = vmax.f32 %v1365, 0.0
  %v1495 = vmax.f32 %v1367, 0.0
  %v1496 = vmax.f32 %v1488, 0.0
  %v1497 = vmax.f32 %v1490, 0.0
  %v1498 = vpack.c.bf16 %v1494, %v1494
  %v1499 = vpack.c.bf16 %v1495, %v1495
  %v1500 = vpack.c.bf16 %v1496, %v1496
  %v1501 = vpack.c.bf16 %v1497, %v1497
  %v1502 = vld [vmem:[%s4] sm:$0xf]
  %v1503 = vld [vmem:[%s4 + $0x4] sm:$0xf]
  %v1504 = vld [vmem:[%s4 + $0x8] sm:$0xf]
  %v1505 = vld [vmem:[%s4 + $0xc] sm:$0xf]
  %v1506 = vld [vmem:[%s4 + $0x10] sm:$0xf]
  %v1507 = vld [vmem:[%s4 + $0x14] sm:$0xf]
  %v1508 = vld [vmem:[%s4 + $0x18] sm:$0xf]
  %v1509 = vld [vmem:[%s4 + $0x1c] sm:$0xf]
  %v1510 = vld [vmem:[%s4 + $0x20] sm:$0xf]
  %v1511 = vld [vmem:[%s4 + $0x24] sm:$0xf]
  %v1512 = vld [vmem:[%s4 + $0x28] sm:$0xf]
  %v1513 = vld [vmem:[%s4 + $0x2c] sm:$0xf]
  %v1514 = vld [vmem:[%s4 + $0x30] sm:$0xf]
  %v1515 = vld [vmem:[%s4 + $0x34] sm:$0xf]
  %v1516 = vld [vmem:[%s4 + $0x38] sm:$0xf]
  %v1517 = vld [vmem:[%s4 + $0x3c] sm:$0xf]
  %v1518 = vld [vmem:[%s4 + $0x40] sm:$0xf]
  %v1519 = vld [vmem:[%s4 + $0x44] sm:$0xf]
  %v1520 = vld [vmem:[%s4 + $0x48] sm:$0xf]
  %v1521 = vld [vmem:[%s4 + $0x4c] sm:$0xf]
  %v1522 = vld [vmem:[%s4 + $0x50] sm:$0xf]
  %v1523 = vld [vmem:[%s4 + $0x54] sm:$0xf]
  %v1524 = vld [vmem:[%s4 + $0x58] sm:$0xf]
  %v1525 = vld [vmem:[%s4 + $0x5c] sm:$0xf]
  %v1526 = vld [vmem:[%s4 + $0x60] sm:$0xf]
  %v1527 = vld [vmem:[%s4 + $0x64] sm:$0xf]
  %v1528 = vld [vmem:[%s4 + $0x68] sm:$0xf]
  %v1529 = vld [vmem:[%s4 + $0x6c] sm:$0xf]
  %v1530 = vld [vmem:[%s4 + $0x70] sm:$0xf]
  %v1531 = vld [vmem:[%s4 + $0x74] sm:$0xf]
  %v1532 = vld [vmem:[%s4 + $0x78] sm:$0xf]
  %v1533 = vld [vmem:[%s4 + $0x7c] sm:$0xf]
  %v1534 = vld [vmem:[%s4 + $0x80] sm:$0xf]
  %v1535 = vld [vmem:[%s4 + $0x84] sm:$0xf]
  %v1536 = vld [vmem:[%s4 + $0x88] sm:$0xf]
  %v1537 = vld [vmem:[%s4 + $0x8c] sm:$0xf]
  %v1538 = vld [vmem:[%s4 + $0x90] sm:$0xf]
  %v1539 = vld [vmem:[%s4 + $0x94] sm:$0xf]
  %v1540 = vld [vmem:[%s4 + $0x98] sm:$0xf]
  %v1541 = vld [vmem:[%s4 + $0x9c] sm:$0xf]
  %v1542 = vld [vmem:[%s4 + $0xa0] sm:$0xf]
  %v1543 = vld [vmem:[%s4 + $0xa4] sm:$0xf]
  %v1544 = vld [vmem:[%s4 + $0xa8] sm:$0xf]
  %v1545 = vld [vmem:[%s4 + $0xac] sm:$0xf]
  %v1546 = vld [vmem:[%s4 + $0xb0] sm:$0xf]
  %v1547 = vld [vmem:[%s4 + $0xb4] sm:$0xf]
  %v1548 = vld [vmem:[%s4 + $0xb8] sm:$0xf]
  %v1549 = vld [vmem:[%s4 + $0xbc] sm:$0xf]
  %v1550 = vld [vmem:[%s4 + $0xc0] sm:$0xf]
  %v1551 = vld [vmem:[%s4 + $0xc4] sm:$0xf]
  %v1552 = vld [vmem:[%s4 + $0xc8] sm:$0xf]
  %v1553 = vld [vmem:[%s4 + $0xcc] sm:$0xf]
  %v1554 = vld [vmem:[%s4 + $0xd0] sm:$0xf]
  %v1555 = vld [vmem:[%s4 + $0xd4] sm:$0xf]
  %v1556 = vld [vmem:[%s4 + $0xd8] sm:$0xf]
  %v1557 = vld [vmem:[%s4 + $0xdc] sm:$0xf]
  %v1558 = vld [vmem:[%s4 + $0xe0] sm:$0xf]
  %v1559 = vld [vmem:[%s4 + $0xe4] sm:$0xf]
  %v1560 = vld [vmem:[%s4 + $0xe8] sm:$0xf]
  %v1561 = vld [vmem:[%s4 + $0xec] sm:$0xf]
  %v1562 = vld [vmem:[%s4 + $0xf0] sm:$0xf]
  %v1563 = vld [vmem:[%s4 + $0xf4] sm:$0xf]
  %v1564 = vld [vmem:[%s4 + $0xf8] sm:$0xf]
  %v1565 = vld [vmem:[%s4 + $0xfc] sm:$0xf]
  %v1566 = vld [vmem:[%s5] sm:$0x1]
  %v1568 = vlaneseq
  %v1569 = vshrl.u32 %v1568, 7
  %v1570 = vsub.s32 0, %v1569
  %v1571 = vrot.slane %v1566, %v1570
  %v1637 = vunpack.c.l.b16 %v1502
  %v1638 = vunpack.c.l.b16 %v1503
  %v1639 = vunpack.c.l.b16 %v1504
  %v1640 = vunpack.c.l.b16 %v1505
  %v1641 = vunpack.c.l.b16 %v1506
  %v1642 = vunpack.c.l.b16 %v1507
  %v1643 = vunpack.c.l.b16 %v1508
  %v1644 = vunpack.c.l.b16 %v1509
  %v1645 = vunpack.c.l.b16 %v1510
  %v1646 = vunpack.c.l.b16 %v1511
  %v1647 = vunpack.c.l.b16 %v1512
  %v1648 = vunpack.c.l.b16 %v1513
  %v1649 = vunpack.c.l.b16 %v1514
  %v1650 = vunpack.c.l.b16 %v1515
  %v1651 = vunpack.c.l.b16 %v1516
  %v1652 = vunpack.c.l.b16 %v1517
  %v1653 = vunpack.c.l.b16 %v1518
  %v1654 = vunpack.c.l.b16 %v1519
  %v1655 = vunpack.c.l.b16 %v1520
  %v1656 = vunpack.c.l.b16 %v1521
  %v1657 = vunpack.c.l.b16 %v1522
  %v1658 = vunpack.c.l.b16 %v1523
  %v1659 = vunpack.c.l.b16 %v1524
  %v1660 = vunpack.c.l.b16 %v1525
  %v1661 = vunpack.c.l.b16 %v1526
  %v1662 = vunpack.c.l.b16 %v1527
  %v1663 = vunpack.c.l.b16 %v1528
  %v1664 = vunpack.c.l.b16 %v1529
  %v1665 = vunpack.c.l.b16 %v1530
  %v1666 = vunpack.c.l.b16 %v1531
  %v1667 = vunpack.c.l.b16 %v1532
  %v1668 = vunpack.c.l.b16 %v1533
  %v1669 = vunpack.c.l.b16 %v1534
  %v1670 = vunpack.c.l.b16 %v1535
  %v1671 = vunpack.c.l.b16 %v1536
  %v1672 = vunpack.c.l.b16 %v1537
  %v1673 = vunpack.c.l.b16 %v1538
  %v1674 = vunpack.c.l.b16 %v1539
  %v1675 = vunpack.c.l.b16 %v1540
  %v1676 = vunpack.c.l.b16 %v1541
  %v1677 = vunpack.c.l.b16 %v1542
  %v1678 = vunpack.c.l.b16 %v1543
  %v1679 = vunpack.c.l.b16 %v1544
  %v1680 = vunpack.c.l.b16 %v1545
  %v1681 = vunpack.c.l.b16 %v1546
  %v1682 = vunpack.c.l.b16 %v1547
  %v1683 = vunpack.c.l.b16 %v1548
  %v1684 = vunpack.c.l.b16 %v1549
  %v1685 = vunpack.c.l.b16 %v1550
  %v1686 = vunpack.c.l.b16 %v1551
  %v1687 = vunpack.c.l.b16 %v1552
  %v1688 = vunpack.c.l.b16 %v1553
  %v1689 = vunpack.c.l.b16 %v1554
  %v1690 = vunpack.c.l.b16 %v1555
  %v1691 = vunpack.c.l.b16 %v1556
  %v1692 = vunpack.c.l.b16 %v1557
  %v1693 = vunpack.c.l.b16 %v1558
  %v1694 = vunpack.c.l.b16 %v1559
  %v1695 = vunpack.c.l.b16 %v1560
  %v1696 = vunpack.c.l.b16 %v1561
  %v1697 = vunpack.c.l.b16 %v1562
  %v1698 = vunpack.c.l.b16 %v1563
  %v1699 = vunpack.c.l.b16 %v1564
  %v1700 = vunpack.c.l.b16 %v1565
  %v1701 = vpack.c.b16 %v1638, %v1637
  %v1702 = vpack.c.b16 %v1640, %v1639
  %v1703 = vpack.c.b16 %v1642, %v1641
  %v1704 = vpack.c.b16 %v1644, %v1643
  %v1705 = vpack.c.b16 %v1646, %v1645
  %v1706 = vpack.c.b16 %v1648, %v1647
  %v1707 = vpack.c.b16 %v1650, %v1649
  %v1708 = vpack.c.b16 %v1652, %v1651
  %v1709 = vpack.c.b16 %v1654, %v1653
  %v1710 = vpack.c.b16 %v1656, %v1655
  %v1711 = vpack.c.b16 %v1658, %v1657
  %v1712 = vpack.c.b16 %v1660, %v1659
  %v1713 = vpack.c.b16 %v1662, %v1661
  %v1714 = vpack.c.b16 %v1664, %v1663
  %v1715 = vpack.c.b16 %v1666, %v1665
  %v1716 = vpack.c.b16 %v1668, %v1667
  %v1717 = vpack.c.b16 %v1670, %v1669
  %v1718 = vpack.c.b16 %v1672, %v1671
  %v1719 = vpack.c.b16 %v1674, %v1673
  %v1720 = vpack.c.b16 %v1676, %v1675
  %v1721 = vpack.c.b16 %v1678, %v1677
  %v1722 = vpack.c.b16 %v1680, %v1679
  %v1723 = vpack.c.b16 %v1682, %v1681
  %v1724 = vpack.c.b16 %v1684, %v1683
  %v1725 = vpack.c.b16 %v1686, %v1685
  %v1726 = vpack.c.b16 %v1688, %v1687
  %v1727 = vpack.c.b16 %v1690, %v1689
  %v1728 = vpack.c.b16 %v1692, %v1691
  %v1729 = vpack.c.b16 %v1694, %v1693
  %v1730 = vpack.c.b16 %v1696, %v1695
  %v1731 = vpack.c.b16 %v1698, %v1697
  %v1732 = vpack.c.b16 %v1700, %v1699
  %1765 = vmatprep.subr.bf16.mxu0 0
  %1766 = vmatpush1.bf16.msra.mxu0 %v1708
  %1767 = vmatprep.subr.bf16.mxu0 0
  %1768 = vmatpush1.bf16.msra.mxu0 %v1707
  %1769 = vmatprep.subr.bf16.mxu0 0
  %1770 = vmatpush1.bf16.msra.mxu0 %v1706
  %1771 = vmatprep.subr.bf16.mxu0 0
  %1772 = vmatpush1.bf16.msra.mxu0 %v1705
  %1773 = vmatprep.subr.bf16.mxu0 0
  %1774 = vmatpush1.bf16.msra.mxu0 %v1704
  %1775 = vmatprep.subr.bf16.mxu0 0
  %1776 = vmatpush1.bf16.msra.mxu0 %v1703
  %1777 = vmatprep.subr.bf16.mxu0 0
  %1778 = vmatpush1.bf16.msra.mxu0 %v1702
  %1779 = vmatprep.subr.bf16.mxu0 0
  %1780 = vmatpush1.bf16.msra.mxu0 %v1701
  %1781 = vmatprep.subr.bf16.mxu0 0
  %1782 = vmatpush2.bf16.msra.mxu0 %v1716
  %1783 = vmatprep.subr.bf16.mxu0 0
  %1784 = vmatpush2.bf16.msra.mxu0 %v1715
  %1785 = vmatprep.subr.bf16.mxu0 0
  %1786 = vmatpush2.bf16.msra.mxu0 %v1714
  %1787 = vmatprep.subr.bf16.mxu0 0
  %1788 = vmatpush2.bf16.msra.mxu0 %v1713
  %1789 = vmatprep.subr.bf16.mxu0 0
  %1790 = vmatpush2.bf16.msra.mxu0 %v1712
  %1791 = vmatprep.subr.bf16.mxu0 0
  %1792 = vmatpush2.bf16.msra.mxu0 %v1711
  %1793 = vmatprep.subr.bf16.mxu0 0
  %1794 = vmatpush2.bf16.msra.mxu0 %v1710
  %1795 = vmatprep.subr.bf16.mxu0 0
  %1796 = vmatpush2.bf16.msra.mxu0 %v1709
  %1797 = vmatprep.mubr.bf16.mxu0 %v1499
  %1798 = vmatmul.mubr.bf16.gmra.mxu0 %v1498
  %v1799 = vpop.f32.mrf.mxu0
  %v1800 = vadd.f32 %v1571, %v1799
  %v1801 = vpop.f32.mrf.mxu0
  %v1802 = vpop.f32.mrf.mxu0
  %v1803 = vpop.f32.mrf.mxu0
  %1804 = vdwg.mxu0
  %1805 = vmatprep.subr.bf16.mxu0 0
  %1806 = vmatpush1.bf16.msra.mxu0 %v1724
  %1807 = vmatprep.subr.bf16.mxu0 0
  %1808 = vmatpush1.bf16.msra.mxu0 %v1723
  %1809 = vmatprep.subr.bf16.mxu0 0
  %1810 = vmatpush1.bf16.msra.mxu0 %v1722
  %1811 = vmatprep.subr.bf16.mxu0 0
  %1812 = vmatpush1.bf16.msra.mxu0 %v1721
  %1813 = vmatprep.subr.bf16.mxu0 0
  %1814 = vmatpush1.bf16.msra.mxu0 %v1720
  %1815 = vmatprep.subr.bf16.mxu0 0
  %1816 = vmatpush1.bf16.msra.mxu0 %v1719
  %1817 = vmatprep.subr.bf16.mxu0 0
  %1818 = vmatpush1.bf16.msra.mxu0 %v1718
  %1819 = vmatprep.subr.bf16.mxu0 0
  %1820 = vmatpush1.bf16.msra.mxu0 %v1717
  %1821 = vmatprep.subr.bf16.mxu0 0
  %1822 = vmatpush2.bf16.msra.mxu0 %v1732
  %1823 = vmatprep.subr.bf16.mxu0 0
  %1824 = vmatpush2.bf16.msra.mxu0 %v1731
  %1825 = vmatprep.subr.bf16.mxu0 0
  %1826 = vmatpush2.bf16.msra.mxu0 %v1730
  %1827 = vmatprep.subr.bf16.mxu0 0
  %1828 = vmatpush2.bf16.msra.mxu0 %v1729
  %1829 = vmatprep.subr.bf16.mxu0 0
  %1830 = vmatpush2.bf16.msra.mxu0 %v1728
  %1831 = vmatprep.subr.bf16.mxu0 0
  %1832 = vmatpush2.bf16.msra.mxu0 %v1727
  %1833 = vmatprep.subr.bf16.mxu0 0
  %1834 = vmatpush2.bf16.msra.mxu0 %v1726
  %1835 = vmatprep.subr.bf16.mxu0 0
  %1836 = vmatpush2.bf16.msra.mxu0 %v1725
  %1837 = vmatprep.mubr.bf16.mxu0 %v1501
  %1838 = vmatmul.mubr.bf16.gmra.mxu0 %v1500
  %v1839 = vpop.f32.mrf.mxu0
  %v1840 = vadd.f32 %v1800, %v1839
  %v1841 = vpop.f32.mrf.mxu0
  %v1842 = vpop.f32.mrf.mxu0
  %v1843 = vpop.f32.mrf.mxu0
  %1844 = vdwg.mxu0
  %v1845 = vmax.f32 %v1840, 0.0
  %v1846 = vpack.c.bf16 %v1845, %v1845
  %v1847 = vld [vmem:[%s6] sm:$0xff]
  %v1848 = vld [vmem:[%s6 + $0x8] sm:$0xff]
  %v1849 = vld [vmem:[%s6 + $0x10] sm:$0xff]
  %v1850 = vld [vmem:[%s6 + $0x18] sm:$0xff]
  %v1851 = vld [vmem:[%s6 + $0x20] sm:$0xff]
  %v1852 = vld [vmem:[%s6 + $0x28] sm:$0xff]
  %v1853 = vld [vmem:[%s6 + $0x30] sm:$0xff]
  %v1854 = vld [vmem:[%s6 + $0x38] sm:$0xff]
  %v1855 = vld [vmem:[%s6 + $0x40] sm:$0xff]
  %v1856 = vld [vmem:[%s6 + $0x48] sm:$0xff]
  %v1857 = vld [vmem:[%s6 + $0x50] sm:$0xff]
  %v1858 = vld [vmem:[%s6 + $0x58] sm:$0xff]
  %v1859 = vld [vmem:[%s6 + $0x60] sm:$0xff]
  %v1860 = vld [vmem:[%s6 + $0x68] sm:$0xff]
  %v1861 = vld [vmem:[%s6 + $0x70] sm:$0xff]
  %v1862 = vld [vmem:[%s6 + $0x78] sm:$0xff]
  %v1863 = vld [vmem:[%s7] sm:$0x3]
  %v1865 = vlaneseq
  %v1866 = vshrl.u32 %v1865, 7
  %v1867 = vsub.s32 0, %v1866
  %v1868 = vrot.slane %v1863, %v1867
  %v1869 = vlaneseq
  %v1870 = vshrl.u32 %v1869, 7
  %v1871 = vsub.s32 1, %v1870
  %v1872 = vrot.slane %v1863, %v1871
  %v1891 = vunpack.c.l.b16 %v1847
  %v1892 = vunpack.c.h.b16 %v1847
  %v1893 = vunpack.c.l.b16 %v1848
  %v1894 = vunpack.c.h.b16 %v1848
  %v1895 = vunpack.c.l.b16 %v1849
  %v1896 = vunpack.c.h.b16 %v1849
  %v1897 = vunpack.c.l.b16 %v1850
  %v1898 = vunpack.c.h.b16 %v1850
  %v1899 = vunpack.c.l.b16 %v1851
  %v1900 = vunpack.c.h.b16 %v1851
  %v1901 = vunpack.c.l.b16 %v1852
  %v1902 = vunpack.c.h.b16 %v1852
  %v1903 = vunpack.c.l.b16 %v1853
  %v1904 = vunpack.c.h.b16 %v1853
  %v1905 = vunpack.c.l.b16 %v1854
  %v1906 = vunpack.c.h.b16 %v1854
  %v1907 = vunpack.c.l.b16 %v1855
  %v1908 = vunpack.c.h.b16 %v1855
  %v1909 = vunpack.c.l.b16 %v1856
  %v1910 = vunpack.c.h.b16 %v1856
  %v1911 = vunpack.c.l.b16 %v1857
  %v1912 = vunpack.c.h.b16 %v1857
  %v1913 = vunpack.c.l.b16 %v1858
  %v1914 = vunpack.c.h.b16 %v1858
  %v1915 = vunpack.c.l.b16 %v1859
  %v1916 = vunpack.c.h.b16 %v1859
  %v1917 = vunpack.c.l.b16 %v1860
  %v1918 = vunpack.c.h.b16 %v1860
  %v1919 = vunpack.c.l.b16 %v1861
  %v1920 = vunpack.c.h.b16 %v1861
  %v1921 = vunpack.c.l.b16 %v1862
  %v1922 = vunpack.c.h.b16 %v1862
  %v1923 = vpack.c.b16 %v1893, %v1891
  %v1924 = vpack.c.b16 %v1894, %v1892
  %v1925 = vpack.c.b16 %v1897, %v1895
  %v1926 = vpack.c.b16 %v1898, %v1896
  %v1927 = vpack.c.b16 %v1901, %v1899
  %v1928 = vpack.c.b16 %v1902, %v1900
  %v1929 = vpack.c.b16 %v1905, %v1903
  %v1930 = vpack.c.b16 %v1906, %v1904
  %v1931 = vpack.c.b16 %v1909, %v1907
  %v1932 = vpack.c.b16 %v1910, %v1908
  %v1933 = vpack.c.b16 %v1913, %v1911
  %v1934 = vpack.c.b16 %v1914, %v1912
  %v1935 = vpack.c.b16 %v1917, %v1915
  %v1936 = vpack.c.b16 %v1918, %v1916
  %v1937 = vpack.c.b16 %v1921, %v1919
  %v1938 = vpack.c.b16 %v1922, %v1920
  %1955 = vmatprep.subr.bf16.mxu0 %v1938
  %1956 = vmatpush1.bf16.msra.mxu0 %v1937
  %1957 = vmatprep.subr.bf16.mxu0 %v1936
  %1958 = vmatpush1.bf16.msra.mxu0 %v1935
  %1959 = vmatprep.subr.bf16.mxu0 %v1934
  %1960 = vmatpush1.bf16.msra.mxu0 %v1933
  %1961 = vmatprep.subr.bf16.mxu0 %v1932
  %1962 = vmatpush1.bf16.msra.mxu0 %v1931
  %1963 = vmatprep.subr.bf16.mxu0 %v1930
  %1964 = vmatpush1.bf16.msra.mxu0 %v1929
  %1965 = vmatprep.subr.bf16.mxu0 %v1928
  %1966 = vmatpush1.bf16.msra.mxu0 %v1927
  %1967 = vmatprep.subr.bf16.mxu0 %v1926
  %1968 = vmatpush1.bf16.msra.mxu0 %v1925
  %1969 = vmatprep.subr.bf16.mxu0 %v1924
  %1970 = vmatpush1.bf16.msra.mxu0 %v1923
  %1971 = vmatprep.subr.bf16.mxu0 0
  %1972 = vmatpush2.bf16.msra.mxu0 0
  %1973 = vmatprep.subr.bf16.mxu0 0
  %1974 = vmatpush2.bf16.msra.mxu0 0
  %1975 = vmatprep.subr.bf16.mxu0 0
  %1976 = vmatpush2.bf16.msra.mxu0 0
  %1977 = vmatprep.subr.bf16.mxu0 0
  %1978 = vmatpush2.bf16.msra.mxu0 0
  %1979 = vmatprep.subr.bf16.mxu0 0
  %1980 = vmatpush2.bf16.msra.mxu0 0
  %1981 = vmatprep.subr.bf16.mxu0 0
  %1982 = vmatpush2.bf16.msra.mxu0 0
  %1983 = vmatprep.subr.bf16.mxu0 0
  %1984 = vmatpush2.bf16.msra.mxu0 0
  %1985 = vmatprep.subr.bf16.mxu0 0
  %1986 = vmatpush2.bf16.msra.mxu0 0
  %1987 = vmatprep.mubr.bf16.mxu0 0
  %1988 = vmatmul.mubr.bf16.gmra.mxu0 %v1846
  %v1989 = vpop.f32.mrf.mxu0
  %v1990 = vadd.f32 %v1868, %v1989
  %v1991 = vpop.f32.mrf.mxu0
  %v1992 = vadd.f32 %v1872, %v1991
  %v1993 = vpop.f32.mrf.mxu0
  %v1994 = vpop.f32.mrf.mxu0
  %1995 = vdwg.mxu0
  %v1996 = vld [vmem:[%s1] sm:$0xff]
  %v1997 = vmul.f32 %v1992, 0.5
  %v1998 = vmul.f32 %v1997, 1.442695
  %v1999 = vpow.pop %v1998
  %v2000 = vmul.f32 %v1996, %v1999
  %v2001 = vadd.f32 %v1990, %v2000
  %v2002 = vpack.c.bf16 %v2001, %v2001
  %v2003 = vld [vmem:[%s8] sm:$0xf]
  %v2004 = vld [vmem:[%s8 + $0x4] sm:$0xf]
  %v2005 = vld [vmem:[%s8 + $0x8] sm:$0xf]
  %v2006 = vld [vmem:[%s8 + $0xc] sm:$0xf]
  %v2007 = vld [vmem:[%s8 + $0x10] sm:$0xf]
  %v2008 = vld [vmem:[%s8 + $0x14] sm:$0xf]
  %v2009 = vld [vmem:[%s8 + $0x18] sm:$0xf]
  %v2010 = vld [vmem:[%s8 + $0x1c] sm:$0xf]
  %v2011 = vld [vmem:[%s8 + $0x20] sm:$0xf]
  %v2012 = vld [vmem:[%s8 + $0x24] sm:$0xf]
  %v2013 = vld [vmem:[%s8 + $0x28] sm:$0xf]
  %v2014 = vld [vmem:[%s8 + $0x2c] sm:$0xf]
  %v2015 = vld [vmem:[%s8 + $0x30] sm:$0xf]
  %v2016 = vld [vmem:[%s8 + $0x34] sm:$0xf]
  %v2017 = vld [vmem:[%s8 + $0x38] sm:$0xf]
  %v2018 = vld [vmem:[%s8 + $0x3c] sm:$0xf]
  %v2019 = vld [vmem:[%s9] sm:$0x1]
  %v2021 = vlaneseq
  %v2022 = vshrl.u32 %v2021, 7
  %v2023 = vsub.s32 0, %v2022
  %v2024 = vrot.slane %v2019, %v2023
  %v2042 = vunpack.c.l.b16 %v2003
  %v2043 = vunpack.c.l.b16 %v2004
  %v2044 = vunpack.c.l.b16 %v2005
  %v2045 = vunpack.c.l.b16 %v2006
  %v2046 = vunpack.c.l.b16 %v2007
  %v2047 = vunpack.c.l.b16 %v2008
  %v2048 = vunpack.c.l.b16 %v2009
  %v2049 = vunpack.c.l.b16 %v2010
  %v2050 = vunpack.c.l.b16 %v2011
  %v2051 = vunpack.c.l.b16 %v2012
  %v2052 = vunpack.c.l.b16 %v2013
  %v2053 = vunpack.c.l.b16 %v2014
  %v2054 = vunpack.c.l.b16 %v2015
  %v2055 = vunpack.c.l.b16 %v2016
  %v2056 = vunpack.c.l.b16 %v2017
  %v2057 = vunpack.c.l.b16 %v2018
  %v2058 = vpack.c.b16 %v2043, %v2042
  %v2059 = vpack.c.b16 %v2045, %v2044
  %v2060 = vpack.c.b16 %v2047, %v2046
  %v2061 = vpack.c.b16 %v2049, %v2048
  %v2062 = vpack.c.b16 %v2051, %v2050
  %v2063 = vpack.c.b16 %v2053, %v2052
  %v2064 = vpack.c.b16 %v2055, %v2054
  %v2065 = vpack.c.b16 %v2057, %v2056
  %2074 = vmatprep.subr.bf16.mxu0 0
  %2075 = vmatpush1.bf16.msra.mxu0 %v2065
  %2076 = vmatprep.subr.bf16.mxu0 0
  %2077 = vmatpush1.bf16.msra.mxu0 %v2064
  %2078 = vmatprep.subr.bf16.mxu0 0
  %2079 = vmatpush1.bf16.msra.mxu0 %v2063
  %2080 = vmatprep.subr.bf16.mxu0 0
  %2081 = vmatpush1.bf16.msra.mxu0 %v2062
  %2082 = vmatprep.subr.bf16.mxu0 0
  %2083 = vmatpush1.bf16.msra.mxu0 %v2061
  %2084 = vmatprep.subr.bf16.mxu0 0
  %2085 = vmatpush1.bf16.msra.mxu0 %v2060
  %2086 = vmatprep.subr.bf16.mxu0 0
  %2087 = vmatpush1.bf16.msra.mxu0 %v2059
  %2088 = vmatprep.subr.bf16.mxu0 0
  %2089 = vmatpush1.bf16.msra.mxu0 %v2058
  %2090 = vmatprep.subr.bf16.mxu0 0
  %2091 = vmatpush2.bf16.msra.mxu0 0
  %2092 = vmatprep.subr.bf16.mxu0 0
  %2093 = vmatpush2.bf16.msra.mxu0 0
  %2094 = vmatprep.subr.bf16.mxu0 0
  %2095 = vmatpush2.bf16.msra.mxu0 0
  %2096 = vmatprep.subr.bf16.mxu0 0
  %2097 = vmatpush2.bf16.msra.mxu0 0
  %2098 = vmatprep.subr.bf16.mxu0 0
  %2099 = vmatpush2.bf16.msra.mxu0 0
  %2100 = vmatprep.subr.bf16.mxu0 0
  %2101 = vmatpush2.bf16.msra.mxu0 0
  %2102 = vmatprep.subr.bf16.mxu0 0
  %2103 = vmatpush2.bf16.msra.mxu0 0
  %2104 = vmatprep.subr.bf16.mxu0 0
  %2105 = vmatpush2.bf16.msra.mxu0 0
  %2106 = vmatprep.mubr.bf16.mxu0 0
  %2107 = vmatmul.mubr.bf16.gmra.mxu0 %v2002
  %v2108 = vpop.f32.mrf.mxu0
  %v2109 = vadd.f32 %v2024, %v2108
  %v2110 = vpop.f32.mrf.mxu0
  %v2111 = vpop.f32.mrf.mxu0
  %v2112 = vpop.f32.mrf.mxu0
  %2113 = vdwg.mxu0
  %v2114 = vmax.f32 %v2109, 0.0
  %v2115 = vpack.c.bf16 %v2114, %v2114
  %v2116 = vld [vmem:[%s10] sm:$0xff]
  %v2117 = vld [vmem:[%s10 + $0x8] sm:$0xff]
  %v2118 = vld [vmem:[%s10 + $0x10] sm:$0xff]
  %v2119 = vld [vmem:[%s10 + $0x18] sm:$0xff]
  %v2120 = vld [vmem:[%s10 + $0x20] sm:$0xff]
  %v2121 = vld [vmem:[%s10 + $0x28] sm:$0xff]
  %v2122 = vld [vmem:[%s10 + $0x30] sm:$0xff]
  %v2123 = vld [vmem:[%s10 + $0x38] sm:$0xff]
  %v2124 = vld [vmem:[%s10 + $0x40] sm:$0xff]
  %v2125 = vld [vmem:[%s10 + $0x48] sm:$0xff]
  %v2126 = vld [vmem:[%s10 + $0x50] sm:$0xff]
  %v2127 = vld [vmem:[%s10 + $0x58] sm:$0xff]
  %v2128 = vld [vmem:[%s10 + $0x60] sm:$0xff]
  %v2129 = vld [vmem:[%s10 + $0x68] sm:$0xff]
  %v2130 = vld [vmem:[%s10 + $0x70] sm:$0xff]
  %v2131 = vld [vmem:[%s10 + $0x78] sm:$0xff]
  %v2132 = vld [vmem:[%s10 + $0x80] sm:$0xff]
  %v2133 = vld [vmem:[%s10 + $0x88] sm:$0xff]
  %v2134 = vld [vmem:[%s10 + $0x90] sm:$0xff]
  %v2135 = vld [vmem:[%s10 + $0x98] sm:$0xff]
  %v2136 = vld [vmem:[%s10 + $0xa0] sm:$0xff]
  %v2137 = vld [vmem:[%s10 + $0xa8] sm:$0xff]
  %v2138 = vld [vmem:[%s10 + $0xb0] sm:$0xff]
  %v2139 = vld [vmem:[%s10 + $0xb8] sm:$0xff]
  %v2140 = vld [vmem:[%s10 + $0xc0] sm:$0xff]
  %v2141 = vld [vmem:[%s10 + $0xc8] sm:$0xff]
  %v2142 = vld [vmem:[%s10 + $0xd0] sm:$0xff]
  %v2143 = vld [vmem:[%s10 + $0xd8] sm:$0xff]
  %v2144 = vld [vmem:[%s10 + $0xe0] sm:$0xff]
  %v2145 = vld [vmem:[%s10 + $0xe8] sm:$0xff]
  %v2146 = vld [vmem:[%s10 + $0xf0] sm:$0xff]
  %v2147 = vld [vmem:[%s10 + $0xf8] sm:$0xff]
  %v2148 = vld [vmem:[%s11] sm:$0xf]
  %v2150 = vlaneseq
  %v2151 = vshrl.u32 %v2150, 7
  %v2152 = vsub.s32 0, %v2151
  %v2153 = vrot.slane %v2148, %v2152
  %v2154 = vlaneseq
  %v2155 = vshrl.u32 %v2154, 7
  %v2156 = vsub.s32 1, %v2155
  %v2157 = vrot.slane %v2148, %v2156
  %v2158 = vlaneseq
  %v2159 = vshrl.u32 %v2158, 7
  %v2160 = vsub.s32 2, %v2159
  %v2161 = vrot.slane %v2148, %v2160
  %v2162 = vlaneseq
  %v2163 = vshrl.u32 %v2162, 7
  %v2164 = vsub.s32 3, %v2163
  %v2165 = vrot.slane %v2148, %v2164
  %v2202 = vunpack.c.l.b16 %v2116
  %v2203 = vunpack.c.h.b16 %v2116
  %v2204 = vunpack.c.l.b16 %v2117
  %v2205 = vunpack.c.h.b16 %v2117
  %v2206 = vunpack.c.l.b16 %v2118
  %v2207 = vunpack.c.h.b16 %v2118
  %v2208 = vunpack.c.l.b16 %v2119
  %v2209 = vunpack.c.h.b16 %v2119
  %v2210 = vunpack.c.l.b16 %v2120
  %v2211 = vunpack.c.h.b16 %v2120
  %v2212 = vunpack.c.l.b16 %v2121
  %v2213 = vunpack.c.h.b16 %v2121
  %v2214 = vunpack.c.l.b16 %v2122
  %v2215 = vunpack.c.h.b16 %v2122
  %v2216 = vunpack.c.l.b16 %v2123
  %v2217 = vunpack.c.h.b16 %v2123
  %v2218 = vunpack.c.l.b16 %v2124
  %v2219 = vunpack.c.h.b16 %v2124
  %v2220 = vunpack.c.l.b16 %v2125
  %v2221 = vunpack.c.h.b16 %v2125
  %v2222 = vunpack.c.l.b16 %v2126
  %v2223 = vunpack.c.h.b16 %v2126
  %v2224 = vunpack.c.l.b16 %v2127
  %v2225 = vunpack.c.h.b16 %v2127
  %v2226 = vunpack.c.l.b16 %v2128
  %v2227 = vunpack.c.h.b16 %v2128
  %v2228 = vunpack.c.l.b16 %v2129
  %v2229 = vunpack.c.h.b16 %v2129
  %v2230 = vunpack.c.l.b16 %v2130
  %v2231 = vunpack.c.h.b16 %v2130
  %v2232 = vunpack.c.l.b16 %v2131
  %v2233 = vunpack.c.h.b16 %v2131
  %v2234 = vunpack.c.l.b16 %v2132
  %v2235 = vunpack.c.h.b16 %v2132
  %v2236 = vunpack.c.l.b16 %v2133
  %v2237 = vunpack.c.h.b16 %v2133
  %v2238 = vunpack.c.l.b16 %v2134
  %v2239 = vunpack.c.h.b16 %v2134
  %v2240 = vunpack.c.l.b16 %v2135
  %v2241 = vunpack.c.h.b16 %v2135
  %v2242 = vunpack.c.l.b16 %v2136
  %v2243 = vunpack.c.h.b16 %v2136
  %v2244 = vunpack.c.l.b16 %v2137
  %v2245 = vunpack.c.h.b16 %v2137
  %v2246 = vunpack.c.l.b16 %v2138
  %v2247 = vunpack.c.h.b16 %v2138
  %v2248 = vunpack.c.l.b16 %v2139
  %v2249 = vunpack.c.h.b16 %v2139
  %v2250 = vunpack.c.l.b16 %v2140
  %v2251 = vunpack.c.h.b16 %v2140
  %v2252 = vunpack.c.l.b16 %v2141
  %v2253 = vunpack.c.h.b16 %v2141
  %v2254 = vunpack.c.l.b16 %v2142
  %v2255 = vunpack.c.h.b16 %v2142
  %v2256 = vunpack.c.l.b16 %v2143
  %v2257 = vunpack.c.h.b16 %v2143
  %v2258 = vunpack.c.l.b16 %v2144
  %v2259 = vunpack.c.h.b16 %v2144
  %v2260 = vunpack.c.l.b16 %v2145
  %v2261 = vunpack.c.h.b16 %v2145
  %v2262 = vunpack.c.l.b16 %v2146
  %v2263 = vunpack.c.h.b16 %v2146
  %v2264 = vunpack.c.l.b16 %v2147
  %v2265 = vunpack.c.h.b16 %v2147
  %v2266 = vpack.c.b16 %v2206, %v2202
  %v2267 = vpack.c.b16 %v2207, %v2203
  %v2268 = vpack.c.b16 %v2208, %v2204
  %v2269 = vpack.c.b16 %v2209, %v2205
  %v2270 = vpack.c.b16 %v2214, %v2210
  %v2271 = vpack.c.b16 %v2215, %v2211
  %v2272 = vpack.c.b16 %v2216, %v2212
  %v2273 = vpack.c.b16 %v2217, %v2213
  %v2274 = vpack.c.b16 %v2222, %v2218
  %v2275 = vpack.c.b16 %v2223, %v2219
  %v2276 = vpack.c.b16 %v2224, %v2220
  %v2277 = vpack.c.b16 %v2225, %v2221
  %v2278 = vpack.c.b16 %v2230, %v2226
  %v2279 = vpack.c.b16 %v2231, %v2227
  %v2280 = vpack.c.b16 %v2232, %v2228
  %v2281 = vpack.c.b16 %v2233, %v2229
  %v2282 = vpack.c.b16 %v2238, %v2234
  %v2283 = vpack.c.b16 %v2239, %v2235
  %v2284 = vpack.c.b16 %v2240, %v2236
  %v2285 = vpack.c.b16 %v2241, %v2237
  %v2286 = vpack.c.b16 %v2246, %v2242
  %v2287 = vpack.c.b16 %v2247, %v2243
  %v2288 = vpack.c.b16 %v2248, %v2244
  %v2289 = vpack.c.b16 %v2249, %v2245
  %v2290 = vpack.c.b16 %v2254, %v2250
  %v2291 = vpack.c.b16 %v2255, %v2251
  %v2292 = vpack.c.b16 %v2256, %v2252
  %v2293 = vpack.c.b16 %v2257, %v2253
  %v2294 = vpack.c.b16 %v2262, %v2258
  %v2295 = vpack.c.b16 %v2263, %v2259
  %v2296 = vpack.c.b16 %v2264, %v2260
  %v2297 = vpack.c.b16 %v2265, %v2261
  %2330 = vmatprep.subr.bf16.mxu0 %v2295
  %2331 = vmatpush1.bf16.msra.mxu0 %v2294
  %2332 = vmatprep.subr.bf16.mxu0 %v2291
  %2333 = vmatpush1.bf16.msra.mxu0 %v2290
  %2334 = vmatprep.subr.bf16.mxu0 %v2287
  %2335 = vmatpush1.bf16.msra.mxu0 %v2286
  %2336 = vmatprep.subr.bf16.mxu0 %v2283
  %2337 = vmatpush1.bf16.msra.mxu0 %v2282
  %2338 = vmatprep.subr.bf16.mxu0 %v2279
  %2339 = vmatpush1.bf16.msra.mxu0 %v2278
  %2340 = vmatprep.subr.bf16.mxu0 %v2275
  %2341 = vmatpush1.bf16.msra.mxu0 %v2274
  %2342 = vmatprep.subr.bf16.mxu0 %v2271
  %2343 = vmatpush1.bf16.msra.mxu0 %v2270
  %2344 = vmatprep.subr.bf16.mxu0 %v2267
  %2345 = vmatpush1.bf16.msra.mxu0 %v2266
  %2346 = vmatprep.subr.bf16.mxu0 0
  %2347 = vmatpush2.bf16.msra.mxu0 0
  %2348 = vmatprep.subr.bf16.mxu0 0
  %2349 = vmatpush2.bf16.msra.mxu0 0
  %2350 = vmatprep.subr.bf16.mxu0 0
  %2351 = vmatpush2.bf16.msra.mxu0 0
  %2352 = vmatprep.subr.bf16.mxu0 0
  %2353 = vmatpush2.bf16.msra.mxu0 0
  %2354 = vmatprep.subr.bf16.mxu0 0
  %2355 = vmatpush2.bf16.msra.mxu0 0
  %2356 = vmatprep.subr.bf16.mxu0 0
  %2357 = vmatpush2.bf16.msra.mxu0 0
  %2358 = vmatprep.subr.bf16.mxu0 0
  %2359 = vmatpush2.bf16.msra.mxu0 0
  %2360 = vmatprep.subr.bf16.mxu0 0
  %2361 = vmatpush2.bf16.msra.mxu0 0
  %2362 = vmatprep.mubr.bf16.mxu0 0
  %2363 = vmatmul.mubr.bf16.gmra.mxu0 %v2115
  %v2364 = vpop.f32.mrf.mxu0
  %v2365 = vadd.f32 %v2153, %v2364
  %v2366 = vpop.f32.mrf.mxu0
  %v2367 = vadd.f32 %v2157, %v2366
  %v2368 = vpop.f32.mrf.mxu0
  %v2369 = vpop.f32.mrf.mxu0
  %2370 = vdwg.mxu0
  %2371 = vmatprep.subr.bf16.mxu0 %v2297
  %2372 = vmatpush1.bf16.msra.mxu0 %v2296
  %2373 = vmatprep.subr.bf16.mxu0 %v2293
  %2374 = vmatpush1.bf16.msra.mxu0 %v2292
  %2375 = vmatprep.subr.bf16.mxu0 %v2289
  %2376 = vmatpush1.bf16.msra.mxu0 %v2288
  %2377 = vmatprep.subr.bf16.mxu0 %v2285
  %2378 = vmatpush1.bf16.msra.mxu0 %v2284
  %2379 = vmatprep.subr.bf16.mxu0 %v2281
  %2380 = vmatpush1.bf16.msra.mxu0 %v2280
  %2381 = vmatprep.subr.bf16.mxu0 %v2277
  %2382 = vmatpush1.bf16.msra.mxu0 %v2276
  %2383 = vmatprep.subr.bf16.mxu0 %v2273
  %2384 = vmatpush1.bf16.msra.mxu0 %v2272
  %2385 = vmatprep.subr.bf16.mxu0 %v2269
  %2386 = vmatpush1.bf16.msra.mxu0 %v2268
  %2387 = vmatprep.subr.bf16.mxu0 0
  %2388 = vmatpush2.bf16.msra.mxu0 0
  %2389 = vmatprep.subr.bf16.mxu0 0
  %2390 = vmatpush2.bf16.msra.mxu0 0
  %2391 = vmatprep.subr.bf16.mxu0 0
  %2392 = vmatpush2.bf16.msra.mxu0 0
  %2393 = vmatprep.subr.bf16.mxu0 0
  %2394 = vmatpush2.bf16.msra.mxu0 0
  %2395 = vmatprep.subr.bf16.mxu0 0
  %2396 = vmatpush2.bf16.msra.mxu0 0
  %2397 = vmatprep.subr.bf16.mxu0 0
  %2398 = vmatpush2.bf16.msra.mxu0 0
  %2399 = vmatprep.subr.bf16.mxu0 0
  %2400 = vmatpush2.bf16.msra.mxu0 0
  %2401 = vmatprep.subr.bf16.mxu0 0
  %2402 = vmatpush2.bf16.msra.mxu0 0
  %2403 = vmatprep.mubr.bf16.mxu0 0
  %2404 = vmatmul.mubr.bf16.gmra.mxu0 %v2115
  %v2405 = vpop.f32.mrf.mxu0
  %v2406 = vadd.f32 %v2161, %v2405
  %v2407 = vpop.f32.mrf.mxu0
  %v2408 = vadd.f32 %v2165, %v2407
  %v2409 = vpop.f32.mrf.mxu0
  %v2410 = vpop.f32.mrf.mxu0
  %2411 = vdwg.mxu0
  %v2412 = vmax.f32 %v2365, 0.0
  %v2413 = vmax.f32 %v2367, 0.0
  %v2414 = vmax.f32 %v2406, 0.0
  %v2415 = vmax.f32 %v2408, 0.0
  %v2416 = vpack.c.bf16 %v2412, %v2412
  %v2417 = vpack.c.bf16 %v2413, %v2413
  %v2418 = vpack.c.bf16 %v2414, %v2414
  %v2419 = vpack.c.bf16 %v2415, %v2415
  %v2420 = vld [vmem:[%s12] sm:$0xff]
  %v2421 = vld [vmem:[%s12 + $0x8] sm:$0xff]
  %v2422 = vld [vmem:[%s12 + $0x10] sm:$0xff]
  %v2423 = vld [vmem:[%s12 + $0x18] sm:$0xff]
  %v2424 = vld [vmem:[%s12 + $0x20] sm:$0xff]
  %v2425 = vld [vmem:[%s12 + $0x28] sm:$0xff]
  %v2426 = vld [vmem:[%s12 + $0x30] sm:$0xff]
  %v2427 = vld [vmem:[%s12 + $0x38] sm:$0xff]
  %v2428 = vld [vmem:[%s12 + $0x40] sm:$0xff]
  %v2429 = vld [vmem:[%s12 + $0x48] sm:$0xff]
  %v2430 = vld [vmem:[%s12 + $0x50] sm:$0xff]
  %v2431 = vld [vmem:[%s12 + $0x58] sm:$0xff]
  %v2432 = vld [vmem:[%s12 + $0x60] sm:$0xff]
  %v2433 = vld [vmem:[%s12 + $0x68] sm:$0xff]
  %v2434 = vld [vmem:[%s12 + $0x70] sm:$0xff]
  %v2435 = vld [vmem:[%s12 + $0x78] sm:$0xff]
  %v2436 = vld [vmem:[%s12 + $0x80] sm:$0xff]
  %v2437 = vld [vmem:[%s12 + $0x88] sm:$0xff]
  %v2438 = vld [vmem:[%s12 + $0x90] sm:$0xff]
  %v2439 = vld [vmem:[%s12 + $0x98] sm:$0xff]
  %v2440 = vld [vmem:[%s12 + $0xa0] sm:$0xff]
  %v2441 = vld [vmem:[%s12 + $0xa8] sm:$0xff]
  %v2442 = vld [vmem:[%s12 + $0xb0] sm:$0xff]
  %v2443 = vld [vmem:[%s12 + $0xb8] sm:$0xff]
  %v2444 = vld [vmem:[%s12 + $0xc0] sm:$0xff]
  %v2445 = vld [vmem:[%s12 + $0xc8] sm:$0xff]
  %v2446 = vld [vmem:[%s12 + $0xd0] sm:$0xff]
  %v2447 = vld [vmem:[%s12 + $0xd8] sm:$0xff]
  %v2448 = vld [vmem:[%s12 + $0xe0] sm:$0xff]
  %v2449 = vld [vmem:[%s12 + $0xe8] sm:$0xff]
  %v2450 = vld [vmem:[%s12 + $0xf0] sm:$0xff]
  %v2451 = vld [vmem:[%s12 + $0xf8] sm:$0xff]
  %v2452 = vld [vmem:[%s12 + $0x100] sm:$0xff]
  %v2453 = vld [vmem:[%s12 + $0x108] sm:$0xff]
  %v2454 = vld [vmem:[%s12 + $0x110] sm:$0xff]
  %v2455 = vld [vmem:[%s12 + $0x118] sm:$0xff]
  %v2456 = vld [vmem:[%s12 + $0x120] sm:$0xff]
  %v2457 = vld [vmem:[%s12 + $0x128] sm:$0xff]
  %v2458 = vld [vmem:[%s12 + $0x130] sm:$0xff]
  %v2459 = vld [vmem:[%s12 + $0x138] sm:$0xff]
  %v2460 = vld [vmem:[%s12 + $0x140] sm:$0xff]
  %v2461 = vld [vmem:[%s12 + $0x148] sm:$0xff]
  %v2462 = vld [vmem:[%s12 + $0x150] sm:$0xff]
  %v2463 = vld [vmem:[%s12 + $0x158] sm:$0xff]
  %v2464 = vld [vmem:[%s12 + $0x160] sm:$0xff]
  %v2465 = vld [vmem:[%s12 + $0x168] sm:$0xff]
  %v2466 = vld [vmem:[%s12 + $0x170] sm:$0xff]
  %v2467 = vld [vmem:[%s12 + $0x178] sm:$0xff]
  %v2468 = vld [vmem:[%s12 + $0x180] sm:$0xff]
  %v2469 = vld [vmem:[%s12 + $0x188] sm:$0xff]
  %v2470 = vld [vmem:[%s12 + $0x190] sm:$0xff]
  %v2471 = vld [vmem:[%s12 + $0x198] sm:$0xff]
  %v2472 = vld [vmem:[%s12 + $0x1a0] sm:$0xff]
  %v2473 = vld [vmem:[%s12 + $0x1a8] sm:$0xff]
  %v2474 = vld [vmem:[%s12 + $0x1b0] sm:$0xff]
  %v2475 = vld [vmem:[%s12 + $0x1b8] sm:$0xff]
  %v2476 = vld [vmem:[%s12 + $0x1c0] sm:$0xff]
  %v2477 = vld [vmem:[%s12 + $0x1c8] sm:$0xff]
  %v2478 = vld [vmem:[%s12 + $0x1d0] sm:$0xff]
  %v2479 = vld [vmem:[%s12 + $0x1d8] sm:$0xff]
  %v2480 = vld [vmem:[%s12 + $0x1e0] sm:$0xff]
  %v2481 = vld [vmem:[%s12 + $0x1e8] sm:$0xff]
  %v2482 = vld [vmem:[%s12 + $0x1f0] sm:$0xff]
  %v2483 = vld [vmem:[%s12 + $0x1f8] sm:$0xff]
  %v2484 = vld [vmem:[%s12 + $0x200] sm:$0xff]
  %v2485 = vld [vmem:[%s12 + $0x208] sm:$0xff]
  %v2486 = vld [vmem:[%s12 + $0x210] sm:$0xff]
  %v2487 = vld [vmem:[%s12 + $0x218] sm:$0xff]
  %v2488 = vld [vmem:[%s12 + $0x220] sm:$0xff]
  %v2489 = vld [vmem:[%s12 + $0x228] sm:$0xff]
  %v2490 = vld [vmem:[%s12 + $0x230] sm:$0xff]
  %v2491 = vld [vmem:[%s12 + $0x238] sm:$0xff]
  %v2492 = vld [vmem:[%s12 + $0x240] sm:$0xff]
  %v2493 = vld [vmem:[%s12 + $0x248] sm:$0xff]
  %v2494 = vld [vmem:[%s12 + $0x250] sm:$0xff]
  %v2495 = vld [vmem:[%s12 + $0x258] sm:$0xff]
  %v2496 = vld [vmem:[%s12 + $0x260] sm:$0xff]
  %v2497 = vld [vmem:[%s12 + $0x268] sm:$0xff]
  %v2498 = vld [vmem:[%s12 + $0x270] sm:$0xff]
  %v2499 = vld [vmem:[%s12 + $0x278] sm:$0xff]
  %v2500 = vld [vmem:[%s12 + $0x280] sm:$0xff]
  %v2501 = vld [vmem:[%s12 + $0x288] sm:$0xff]
  %v2502 = vld [vmem:[%s12 + $0x290] sm:$0xff]
  %v2503 = vld [vmem:[%s12 + $0x298] sm:$0xff]
  %v2504 = vld [vmem:[%s12 + $0x2a0] sm:$0xff]
  %v2505 = vld [vmem:[%s12 + $0x2a8] sm:$0xff]
  %v2506 = vld [vmem:[%s12 + $0x2b0] sm:$0xff]
  %v2507 = vld [vmem:[%s12 + $0x2b8] sm:$0xff]
  %v2508 = vld [vmem:[%s12 + $0x2c0] sm:$0xff]
  %v2509 = vld [vmem:[%s12 + $0x2c8] sm:$0xff]
  %v2510 = vld [vmem:[%s12 + $0x2d0] sm:$0xff]
  %v2511 = vld [vmem:[%s12 + $0x2d8] sm:$0xff]
  %v2512 = vld [vmem:[%s12 + $0x2e0] sm:$0xff]
  %v2513 = vld [vmem:[%s12 + $0x2e8] sm:$0xff]
  %v2514 = vld [vmem:[%s12 + $0x2f0] sm:$0xff]
  %v2515 = vld [vmem:[%s12 + $0x2f8] sm:$0xff]
  %v2516 = vld [vmem:[%s12 + $0x300] sm:$0xff]
  %v2517 = vld [vmem:[%s12 + $0x308] sm:$0xff]
  %v2518 = vld [vmem:[%s12 + $0x310] sm:$0xff]
  %v2519 = vld [vmem:[%s12 + $0x318] sm:$0xff]
  %v2520 = vld [vmem:[%s12 + $0x320] sm:$0xff]
  %v2521 = vld [vmem:[%s12 + $0x328] sm:$0xff]
  %v2522 = vld [vmem:[%s12 + $0x330] sm:$0xff]
  %v2523 = vld [vmem:[%s12 + $0x338] sm:$0xff]
  %v2524 = vld [vmem:[%s12 + $0x340] sm:$0xff]
  %v2525 = vld [vmem:[%s12 + $0x348] sm:$0xff]
  %v2526 = vld [vmem:[%s12 + $0x350] sm:$0xff]
  %v2527 = vld [vmem:[%s12 + $0x358] sm:$0xff]
  %v2528 = vld [vmem:[%s12 + $0x360] sm:$0xff]
  %v2529 = vld [vmem:[%s12 + $0x368] sm:$0xff]
  %v2530 = vld [vmem:[%s12 + $0x370] sm:$0xff]
  %v2531 = vld [vmem:[%s12 + $0x378] sm:$0xff]
  %v2532 = vld [vmem:[%s12 + $0x380] sm:$0xff]
  %v2533 = vld [vmem:[%s12 + $0x388] sm:$0xff]
  %v2534 = vld [vmem:[%s12 + $0x390] sm:$0xff]
  %v2535 = vld [vmem:[%s12 + $0x398] sm:$0xff]
  %v2536 = vld [vmem:[%s12 + $0x3a0] sm:$0xff]
  %v2537 = vld [vmem:[%s12 + $0x3a8] sm:$0xff]
  %v2538 = vld [vmem:[%s12 + $0x3b0] sm:$0xff]
  %v2539 = vld [vmem:[%s12 + $0x3b8] sm:$0xff]
  %v2540 = vld [vmem:[%s12 + $0x3c0] sm:$0xff]
  %v2541 = vld [vmem:[%s12 + $0x3c8] sm:$0xff]
  %v2542 = vld [vmem:[%s12 + $0x3d0] sm:$0xff]
  %v2543 = vld [vmem:[%s12 + $0x3d8] sm:$0xff]
  %v2544 = vld [vmem:[%s12 + $0x3e0] sm:$0xff]
  %v2545 = vld [vmem:[%s12 + $0x3e8] sm:$0xff]
  %v2546 = vld [vmem:[%s12 + $0x3f0] sm:$0xff]
  %v2547 = vld [vmem:[%s12 + $0x3f8] sm:$0xff]
  %v2548 = vld [vmem:[%s12 + $0x400] sm:$0xff]
  %v2549 = vld [vmem:[%s12 + $0x408] sm:$0xff]
  %v2550 = vld [vmem:[%s12 + $0x410] sm:$0xff]
  %v2551 = vld [vmem:[%s12 + $0x418] sm:$0xff]
  %v2552 = vld [vmem:[%s12 + $0x420] sm:$0xff]
  %v2553 = vld [vmem:[%s12 + $0x428] sm:$0xff]
  %v2554 = vld [vmem:[%s12 + $0x430] sm:$0xff]
  %v2555 = vld [vmem:[%s12 + $0x438] sm:$0xff]
  %v2556 = vld [vmem:[%s12 + $0x440] sm:$0xff]
  %v2557 = vld [vmem:[%s12 + $0x448] sm:$0xff]
  %v2558 = vld [vmem:[%s12 + $0x450] sm:$0xff]
  %v2559 = vld [vmem:[%s12 + $0x458] sm:$0xff]
  %v2560 = vld [vmem:[%s12 + $0x460] sm:$0xff]
  %v2561 = vld [vmem:[%s12 + $0x468] sm:$0xff]
  %v2562 = vld [vmem:[%s12 + $0x470] sm:$0xff]
  %v2563 = vld [vmem:[%s12 + $0x478] sm:$0xff]
  %v2564 = vld [vmem:[%s12 + $0x480] sm:$0xff]
  %v2565 = vld [vmem:[%s12 + $0x488] sm:$0xff]
  %v2566 = vld [vmem:[%s12 + $0x490] sm:$0xff]
  %v2567 = vld [vmem:[%s12 + $0x498] sm:$0xff]
  %v2568 = vld [vmem:[%s12 + $0x4a0] sm:$0xff]
  %v2569 = vld [vmem:[%s12 + $0x4a8] sm:$0xff]
  %v2570 = vld [vmem:[%s12 + $0x4b0] sm:$0xff]
  %v2571 = vld [vmem:[%s12 + $0x4b8] sm:$0xff]
  %v2572 = vld [vmem:[%s12 + $0x4c0] sm:$0xff]
  %v2573 = vld [vmem:[%s12 + $0x4c8] sm:$0xff]
  %v2574 = vld [vmem:[%s12 + $0x4d0] sm:$0xff]
  %v2575 = vld [vmem:[%s12 + $0x4d8] sm:$0xff]
  %v2576 = vld [vmem:[%s12 + $0x4e0] sm:$0xff]
  %v2577 = vld [vmem:[%s12 + $0x4e8] sm:$0xff]
  %v2578 = vld [vmem:[%s12 + $0x4f0] sm:$0xff]
  %v2579 = vld [vmem:[%s12 + $0x4f8] sm:$0xff]
  %v2580 = vld [vmem:[%s12 + $0x500] sm:$0xff]
  %v2581 = vld [vmem:[%s12 + $0x508] sm:$0xff]
  %v2582 = vld [vmem:[%s12 + $0x510] sm:$0xff]
  %v2583 = vld [vmem:[%s12 + $0x518] sm:$0xff]
  %v2584 = vld [vmem:[%s12 + $0x520] sm:$0xff]
  %v2585 = vld [vmem:[%s12 + $0x528] sm:$0xff]
  %v2586 = vld [vmem:[%s12 + $0x530] sm:$0xff]
  %v2587 = vld [vmem:[%s12 + $0x538] sm:$0xff]
  %v2588 = vld [vmem:[%s12 + $0x540] sm:$0xff]
  %v2589 = vld [vmem:[%s12 + $0x548] sm:$0xff]
  %v2590 = vld [vmem:[%s12 + $0x550] sm:$0xff]
  %v2591 = vld [vmem:[%s12 + $0x558] sm:$0xff]
  %v2592 = vld [vmem:[%s12 + $0x560] sm:$0xff]
  %v2593 = vld [vmem:[%s12 + $0x568] sm:$0xff]
  %v2594 = vld [vmem:[%s12 + $0x570] sm:$0xff]
  %v2595 = vld [vmem:[%s12 + $0x578] sm:$0xff]
  %v2596 = vld [vmem:[%s12 + $0x580] sm:$0xff]
  %v2597 = vld [vmem:[%s12 + $0x588] sm:$0xff]
  %v2598 = vld [vmem:[%s12 + $0x590] sm:$0xff]
  %v2599 = vld [vmem:[%s12 + $0x598] sm:$0xff]
  %v2600 = vld [vmem:[%s12 + $0x5a0] sm:$0xff]
  %v2601 = vld [vmem:[%s12 + $0x5a8] sm:$0xff]
  %v2602 = vld [vmem:[%s12 + $0x5b0] sm:$0xff]
  %v2603 = vld [vmem:[%s12 + $0x5b8] sm:$0xff]
  %v2604 = vld [vmem:[%s12 + $0x5c0] sm:$0xff]
  %v2605 = vld [vmem:[%s12 + $0x5c8] sm:$0xff]
  %v2606 = vld [vmem:[%s12 + $0x5d0] sm:$0xff]
  %v2607 = vld [vmem:[%s12 + $0x5d8] sm:$0xff]
  %v2608 = vld [vmem:[%s12 + $0x5e0] sm:$0xff]
  %v2609 = vld [vmem:[%s12 + $0x5e8] sm:$0xff]
  %v2610 = vld [vmem:[%s12 + $0x5f0] sm:$0xff]
  %v2611 = vld [vmem:[%s12 + $0x5f8] sm:$0xff]
  %v2612 = vld [vmem:[%s13] sm:$0x3f]
  %v2614 = vlaneseq
  %v2615 = vshrl.u32 %v2614, 7
  %v2616 = vsub.s32 0, %v2615
  %v2617 = vrot.slane %v2612, %v2616
  %v2618 = vlaneseq
  %v2619 = vshrl.u32 %v2618, 7
  %v2620 = vsub.s32 1, %v2619
  %v2621 = vrot.slane %v2612, %v2620
  %v2622 = vlaneseq
  %v2623 = vshrl.u32 %v2622, 7
  %v2624 = vsub.s32 2, %v2623
  %v2625 = vrot.slane %v2612, %v2624
  %v2626 = vlaneseq
  %v2627 = vshrl.u32 %v2626, 7
  %v2628 = vsub.s32 3, %v2627
  %v2629 = vrot.slane %v2612, %v2628
  %v2630 = vlaneseq
  %v2631 = vshrl.u32 %v2630, 7
  %v2632 = vsub.s32 4, %v2631
  %v2633 = vrot.slane %v2612, %v2632
  %v2634 = vlaneseq
  %v2635 = vshrl.u32 %v2634, 7
  %v2636 = vsub.s32 5, %v2635
  %v2637 = vrot.slane %v2612, %v2636
  %v2836 = vunpack.c.l.b16 %v2420
  %v2837 = vunpack.c.h.b16 %v2420
  %v2838 = vunpack.c.l.b16 %v2421
  %v2839 = vunpack.c.h.b16 %v2421
  %v2840 = vunpack.c.l.b16 %v2422
  %v2841 = vunpack.c.h.b16 %v2422
  %v2842 = vunpack.c.l.b16 %v2423
  %v2843 = vunpack.c.h.b16 %v2423
  %v2844 = vunpack.c.l.b16 %v2424
  %v2845 = vunpack.c.h.b16 %v2424
  %v2846 = vunpack.c.l.b16 %v2425
  %v2847 = vunpack.c.h.b16 %v2425
  %v2848 = vunpack.c.l.b16 %v2426
  %v2849 = vunpack.c.h.b16 %v2426
  %v2850 = vunpack.c.l.b16 %v2427
  %v2851 = vunpack.c.h.b16 %v2427
  %v2852 = vunpack.c.l.b16 %v2428
  %v2853 = vunpack.c.h.b16 %v2428
  %v2854 = vunpack.c.l.b16 %v2429
  %v2855 = vunpack.c.h.b16 %v2429
  %v2856 = vunpack.c.l.b16 %v2430
  %v2857 = vunpack.c.h.b16 %v2430
  %v2858 = vunpack.c.l.b16 %v2431
  %v2859 = vunpack.c.h.b16 %v2431
  %v2860 = vunpack.c.l.b16 %v2432
  %v2861 = vunpack.c.h.b16 %v2432
  %v2862 = vunpack.c.l.b16 %v2433
  %v2863 = vunpack.c.h.b16 %v2433
  %v2864 = vunpack.c.l.b16 %v2434
  %v2865 = vunpack.c.h.b16 %v2434
  %v2866 = vunpack.c.l.b16 %v2435
  %v2867 = vunpack.c.h.b16 %v2435
  %v2868 = vunpack.c.l.b16 %v2436
  %v2869 = vunpack.c.h.b16 %v2436
  %v2870 = vunpack.c.l.b16 %v2437
  %v2871 = vunpack.c.h.b16 %v2437
  %v2872 = vunpack.c.l.b16 %v2438
  %v2873 = vunpack.c.h.b16 %v2438
  %v2874 = vunpack.c.l.b16 %v2439
  %v2875 = vunpack.c.h.b16 %v2439
  %v2876 = vunpack.c.l.b16 %v2440
  %v2877 = vunpack.c.h.b16 %v2440
  %v2878 = vunpack.c.l.b16 %v2441
  %v2879 = vunpack.c.h.b16 %v2441
  %v2880 = vunpack.c.l.b16 %v2442
  %v2881 = vunpack.c.h.b16 %v2442
  %v2882 = vunpack.c.l.b16 %v2443
  %v2883 = vunpack.c.h.b16 %v2443
  %v2884 = vunpack.c.l.b16 %v2444
  %v2885 = vunpack.c.h.b16 %v2444
  %v2886 = vunpack.c.l.b16 %v2445
  %v2887 = vunpack.c.h.b16 %v2445
  %v2888 = vunpack.c.l.b16 %v2446
  %v2889 = vunpack.c.h.b16 %v2446
  %v2890 = vunpack.c.l.b16 %v2447
  %v2891 = vunpack.c.h.b16 %v2447
  %v2892 = vunpack.c.l.b16 %v2448
  %v2893 = vunpack.c.h.b16 %v2448
  %v2894 = vunpack.c.l.b16 %v2449
  %v2895 = vunpack.c.h.b16 %v2449
  %v2896 = vunpack.c.l.b16 %v2450
  %v2897 = vunpack.c.h.b16 %v2450
  %v2898 = vunpack.c.l.b16 %v2451
  %v2899 = vunpack.c.h.b16 %v2451
  %v2900 = vunpack.c.l.b16 %v2452
  %v2901 = vunpack.c.h.b16 %v2452
  %v2902 = vunpack.c.l.b16 %v2453
  %v2903 = vunpack.c.h.b16 %v2453
  %v2904 = vunpack.c.l.b16 %v2454
  %v2905 = vunpack.c.h.b16 %v2454
  %v2906 = vunpack.c.l.b16 %v2455
  %v2907 = vunpack.c.h.b16 %v2455
  %v2908 = vunpack.c.l.b16 %v2456
  %v2909 = vunpack.c.h.b16 %v2456
  %v2910 = vunpack.c.l.b16 %v2457
  %v2911 = vunpack.c.h.b16 %v2457
  %v2912 = vunpack.c.l.b16 %v2458
  %v2913 = vunpack.c.h.b16 %v2458
  %v2914 = vunpack.c.l.b16 %v2459
  %v2915 = vunpack.c.h.b16 %v2459
  %v2916 = vunpack.c.l.b16 %v2460
  %v2917 = vunpack.c.h.b16 %v2460
  %v2918 = vunpack.c.l.b16 %v2461
  %v2919 = vunpack.c.h.b16 %v2461
  %v2920 = vunpack.c.l.b16 %v2462
  %v2921 = vunpack.c.h.b16 %v2462
  %v2922 = vunpack.c.l.b16 %v2463
  %v2923 = vunpack.c.h.b16 %v2463
  %v2924 = vunpack.c.l.b16 %v2464
  %v2925 = vunpack.c.h.b16 %v2464
  %v2926 = vunpack.c.l.b16 %v2465
  %v2927 = vunpack.c.h.b16 %v2465
  %v2928 = vunpack.c.l.b16 %v2466
  %v2929 = vunpack.c.h.b16 %v2466
  %v2930 = vunpack.c.l.b16 %v2467
  %v2931 = vunpack.c.h.b16 %v2467
  %v2932 = vunpack.c.l.b16 %v2468
  %v2933 = vunpack.c.h.b16 %v2468
  %v2934 = vunpack.c.l.b16 %v2469
  %v2935 = vunpack.c.h.b16 %v2469
  %v2936 = vunpack.c.l.b16 %v2470
  %v2937 = vunpack.c.h.b16 %v2470
  %v2938 = vunpack.c.l.b16 %v2471
  %v2939 = vunpack.c.h.b16 %v2471
  %v2940 = vunpack.c.l.b16 %v2472
  %v2941 = vunpack.c.h.b16 %v2472
  %v2942 = vunpack.c.l.b16 %v2473
  %v2943 = vunpack.c.h.b16 %v2473
  %v2944 = vunpack.c.l.b16 %v2474
  %v2945 = vunpack.c.h.b16 %v2474
  %v2946 = vunpack.c.l.b16 %v2475
  %v2947 = vunpack.c.h.b16 %v2475
  %v2948 = vunpack.c.l.b16 %v2476
  %v2949 = vunpack.c.h.b16 %v2476
  %v2950 = vunpack.c.l.b16 %v2477
  %v2951 = vunpack.c.h.b16 %v2477
  %v2952 = vunpack.c.l.b16 %v2478
  %v2953 = vunpack.c.h.b16 %v2478
  %v2954 = vunpack.c.l.b16 %v2479
  %v2955 = vunpack.c.h.b16 %v2479
  %v2956 = vunpack.c.l.b16 %v2480
  %v2957 = vunpack.c.h.b16 %v2480
  %v2958 = vunpack.c.l.b16 %v2481
  %v2959 = vunpack.c.h.b16 %v2481
  %v2960 = vunpack.c.l.b16 %v2482
  %v2961 = vunpack.c.h.b16 %v2482
  %v2962 = vunpack.c.l.b16 %v2483
  %v2963 = vunpack.c.h.b16 %v2483
  %v2964 = vunpack.c.l.b16 %v2484
  %v2965 = vunpack.c.h.b16 %v2484
  %v2966 = vunpack.c.l.b16 %v2485
  %v2967 = vunpack.c.h.b16 %v2485
  %v2968 = vunpack.c.l.b16 %v2486
  %v2969 = vunpack.c.h.b16 %v2486
  %v2970 = vunpack.c.l.b16 %v2487
  %v2971 = vunpack.c.h.b16 %v2487
  %v2972 = vunpack.c.l.b16 %v2488
  %v2973 = vunpack.c.h.b16 %v2488
  %v2974 = vunpack.c.l.b16 %v2489
  %v2975 = vunpack.c.h.b16 %v2489
  %v2976 = vunpack.c.l.b16 %v2490
  %v2977 = vunpack.c.h.b16 %v2490
  %v2978 = vunpack.c.l.b16 %v2491
  %v2979 = vunpack.c.h.b16 %v2491
  %v2980 = vunpack.c.l.b16 %v2492
  %v2981 = vunpack.c.h.b16 %v2492
  %v2982 = vunpack.c.l.b16 %v2493
  %v2983 = vunpack.c.h.b16 %v2493
  %v2984 = vunpack.c.l.b16 %v2494
  %v2985 = vunpack.c.h.b16 %v2494
  %v2986 = vunpack.c.l.b16 %v2495
  %v2987 = vunpack.c.h.b16 %v2495
  %v2988 = vunpack.c.l.b16 %v2496
  %v2989 = vunpack.c.h.b16 %v2496
  %v2990 = vunpack.c.l.b16 %v2497
  %v2991 = vunpack.c.h.b16 %v2497
  %v2992 = vunpack.c.l.b16 %v2498
  %v2993 = vunpack.c.h.b16 %v2498
  %v2994 = vunpack.c.l.b16 %v2499
  %v2995 = vunpack.c.h.b16 %v2499
  %v2996 = vunpack.c.l.b16 %v2500
  %v2997 = vunpack.c.h.b16 %v2500
  %v2998 = vunpack.c.l.b16 %v2501
  %v2999 = vunpack.c.h.b16 %v2501
  %v3000 = vunpack.c.l.b16 %v2502
  %v3001 = vunpack.c.h.b16 %v2502
  %v3002 = vunpack.c.l.b16 %v2503
  %v3003 = vunpack.c.h.b16 %v2503
  %v3004 = vunpack.c.l.b16 %v2504
  %v3005 = vunpack.c.h.b16 %v2504
  %v3006 = vunpack.c.l.b16 %v2505
  %v3007 = vunpack.c.h.b16 %v2505
  %v3008 = vunpack.c.l.b16 %v2506
  %v3009 = vunpack.c.h.b16 %v2506
  %v3010 = vunpack.c.l.b16 %v2507
  %v3011 = vunpack.c.h.b16 %v2507
  %v3012 = vunpack.c.l.b16 %v2508
  %v3013 = vunpack.c.h.b16 %v2508
  %v3014 = vunpack.c.l.b16 %v2509
  %v3015 = vunpack.c.h.b16 %v2509
  %v3016 = vunpack.c.l.b16 %v2510
  %v3017 = vunpack.c.h.b16 %v2510
  %v3018 = vunpack.c.l.b16 %v2511
  %v3019 = vunpack.c.h.b16 %v2511
  %v3020 = vunpack.c.l.b16 %v2512
  %v3021 = vunpack.c.h.b16 %v2512
  %v3022 = vunpack.c.l.b16 %v2513
  %v3023 = vunpack.c.h.b16 %v2513
  %v3024 = vunpack.c.l.b16 %v2514
  %v3025 = vunpack.c.h.b16 %v2514
  %v3026 = vunpack.c.l.b16 %v2515
  %v3027 = vunpack.c.h.b16 %v2515
  %v3028 = vunpack.c.l.b16 %v2516
  %v3029 = vunpack.c.h.b16 %v2516
  %v3030 = vunpack.c.l.b16 %v2517
  %v3031 = vunpack.c.h.b16 %v2517
  %v3032 = vunpack.c.l.b16 %v2518
  %v3033 = vunpack.c.h.b16 %v2518
  %v3034 = vunpack.c.l.b16 %v2519
  %v3035 = vunpack.c.h.b16 %v2519
  %v3036 = vunpack.c.l.b16 %v2520
  %v3037 = vunpack.c.h.b16 %v2520
  %v3038 = vunpack.c.l.b16 %v2521
  %v3039 = vunpack.c.h.b16 %v2521
  %v3040 = vunpack.c.l.b16 %v2522
  %v3041 = vunpack.c.h.b16 %v2522
  %v3042 = vunpack.c.l.b16 %v2523
  %v3043 = vunpack.c.h.b16 %v2523
  %v3044 = vunpack.c.l.b16 %v2524
  %v3045 = vunpack.c.h.b16 %v2524
  %v3046 = vunpack.c.l.b16 %v2525
  %v3047 = vunpack.c.h.b16 %v2525
  %v3048 = vunpack.c.l.b16 %v2526
  %v3049 = vunpack.c.h.b16 %v2526
  %v3050 = vunpack.c.l.b16 %v2527
  %v3051 = vunpack.c.h.b16 %v2527
  %v3052 = vunpack.c.l.b16 %v2528
  %v3053 = vunpack.c.h.b16 %v2528
  %v3054 = vunpack.c.l.b16 %v2529
  %v3055 = vunpack.c.h.b16 %v2529
  %v3056 = vunpack.c.l.b16 %v2530
  %v3057 = vunpack.c.h.b16 %v2530
  %v3058 = vunpack.c.l.b16 %v2531
  %v3059 = vunpack.c.h.b16 %v2531
  %v3060 = vunpack.c.l.b16 %v2532
  %v3061 = vunpack.c.h.b16 %v2532
  %v3062 = vunpack.c.l.b16 %v2533
  %v3063 = vunpack.c.h.b16 %v2533
  %v3064 = vunpack.c.l.b16 %v2534
  %v3065 = vunpack.c.h.b16 %v2534
  %v3066 = vunpack.c.l.b16 %v2535
  %v3067 = vunpack.c.h.b16 %v2535
  %v3068 = vunpack.c.l.b16 %v2536
  %v3069 = vunpack.c.h.b16 %v2536
  %v3070 = vunpack.c.l.b16 %v2537
  %v3071 = vunpack.c.h.b16 %v2537
  %v3072 = vunpack.c.l.b16 %v2538
  %v3073 = vunpack.c.h.b16 %v2538
  %v3074 = vunpack.c.l.b16 %v2539
  %v3075 = vunpack.c.h.b16 %v2539
  %v3076 = vunpack.c.l.b16 %v2540
  %v3077 = vunpack.c.h.b16 %v2540
  %v3078 = vunpack.c.l.b16 %v2541
  %v3079 = vunpack.c.h.b16 %v2541
  %v3080 = vunpack.c.l.b16 %v2542
  %v3081 = vunpack.c.h.b16 %v2542
  %v3082 = vunpack.c.l.b16 %v2543
  %v3083 = vunpack.c.h.b16 %v2543
  %v3084 = vunpack.c.l.b16 %v2544
  %v3085 = vunpack.c.h.b16 %v2544
  %v3086 = vunpack.c.l.b16 %v2545
  %v3087 = vunpack.c.h.b16 %v2545
  %v3088 = vunpack.c.l.b16 %v2546
  %v3089 = vunpack.c.h.b16 %v2546
  %v3090 = vunpack.c.l.b16 %v2547
  %v3091 = vunpack.c.h.b16 %v2547
  %v3092 = vunpack.c.l.b16 %v2548
  %v3093 = vunpack.c.h.b16 %v2548
  %v3094 = vunpack.c.l.b16 %v2549
  %v3095 = vunpack.c.h.b16 %v2549
  %v3096 = vunpack.c.l.b16 %v2550
  %v3097 = vunpack.c.h.b16 %v2550
  %v3098 = vunpack.c.l.b16 %v2551
  %v3099 = vunpack.c.h.b16 %v2551
  %v3100 = vunpack.c.l.b16 %v2552
  %v3101 = vunpack.c.h.b16 %v2552
  %v3102 = vunpack.c.l.b16 %v2553
  %v3103 = vunpack.c.h.b16 %v2553
  %v3104 = vunpack.c.l.b16 %v2554
  %v3105 = vunpack.c.h.b16 %v2554
  %v3106 = vunpack.c.l.b16 %v2555
  %v3107 = vunpack.c.h.b16 %v2555
  %v3108 = vunpack.c.l.b16 %v2556
  %v3109 = vunpack.c.h.b16 %v2556
  %v3110 = vunpack.c.l.b16 %v2557
  %v3111 = vunpack.c.h.b16 %v2557
  %v3112 = vunpack.c.l.b16 %v2558
  %v3113 = vunpack.c.h.b16 %v2558
  %v3114 = vunpack.c.l.b16 %v2559
  %v3115 = vunpack.c.h.b16 %v2559
  %v3116 = vunpack.c.l.b16 %v2560
  %v3117 = vunpack.c.h.b16 %v2560
  %v3118 = vunpack.c.l.b16 %v2561
  %v3119 = vunpack.c.h.b16 %v2561
  %v3120 = vunpack.c.l.b16 %v2562
  %v3121 = vunpack.c.h.b16 %v2562
  %v3122 = vunpack.c.l.b16 %v2563
  %v3123 = vunpack.c.h.b16 %v2563
  %v3124 = vunpack.c.l.b16 %v2564
  %v3125 = vunpack.c.h.b16 %v2564
  %v3126 = vunpack.c.l.b16 %v2565
  %v3127 = vunpack.c.h.b16 %v2565
  %v3128 = vunpack.c.l.b16 %v2566
  %v3129 = vunpack.c.h.b16 %v2566
  %v3130 = vunpack.c.l.b16 %v2567
  %v3131 = vunpack.c.h.b16 %v2567
  %v3132 = vunpack.c.l.b16 %v2568
  %v3133 = vunpack.c.h.b16 %v2568
  %v3134 = vunpack.c.l.b16 %v2569
  %v3135 = vunpack.c.h.b16 %v2569
  %v3136 = vunpack.c.l.b16 %v2570
  %v3137 = vunpack.c.h.b16 %v2570
  %v3138 = vunpack.c.l.b16 %v2571
  %v3139 = vunpack.c.h.b16 %v2571
  %v3140 = vunpack.c.l.b16 %v2572
  %v3141 = vunpack.c.h.b16 %v2572
  %v3142 = vunpack.c.l.b16 %v2573
  %v3143 = vunpack.c.h.b16 %v2573
  %v3144 = vunpack.c.l.b16 %v2574
  %v3145 = vunpack.c.h.b16 %v2574
  %v3146 = vunpack.c.l.b16 %v2575
  %v3147 = vunpack.c.h.b16 %v2575
  %v3148 = vunpack.c.l.b16 %v2576
  %v3149 = vunpack.c.h.b16 %v2576
  %v3150 = vunpack.c.l.b16 %v2577
  %v3151 = vunpack.c.h.b16 %v2577
  %v3152 = vunpack.c.l.b16 %v2578
  %v3153 = vunpack.c.h.b16 %v2578
  %v3154 = vunpack.c.l.b16 %v2579
  %v3155 = vunpack.c.h.b16 %v2579
  %v3156 = vunpack.c.l.b16 %v2580
  %v3157 = vunpack.c.h.b16 %v2580
  %v3158 = vunpack.c.l.b16 %v2581
  %v3159 = vunpack.c.h.b16 %v2581
  %v3160 = vunpack.c.l.b16 %v2582
  %v3161 = vunpack.c.h.b16 %v2582
  %v3162 = vunpack.c.l.b16 %v2583
  %v3163 = vunpack.c.h.b16 %v2583
  %v3164 = vunpack.c.l.b16 %v2584
  %v3165 = vunpack.c.h.b16 %v2584
  %v3166 = vunpack.c.l.b16 %v2585
  %v3167 = vunpack.c.h.b16 %v2585
  %v3168 = vunpack.c.l.b16 %v2586
  %v3169 = vunpack.c.h.b16 %v2586
  %v3170 = vunpack.c.l.b16 %v2587
  %v3171 = vunpack.c.h.b16 %v2587
  %v3172 = vunpack.c.l.b16 %v2588
  %v3173 = vunpack.c.h.b16 %v2588
  %v3174 = vunpack.c.l.b16 %v2589
  %v3175 = vunpack.c.h.b16 %v2589
  %v3176 = vunpack.c.l.b16 %v2590
  %v3177 = vunpack.c.h.b16 %v2590
  %v3178 = vunpack.c.l.b16 %v2591
  %v3179 = vunpack.c.h.b16 %v2591
  %v3180 = vunpack.c.l.b16 %v2592
  %v3181 = vunpack.c.h.b16 %v2592
  %v3182 = vunpack.c.l.b16 %v2593
  %v3183 = vunpack.c.h.b16 %v2593
  %v3184 = vunpack.c.l.b16 %v2594
  %v3185 = vunpack.c.h.b16 %v2594
  %v3186 = vunpack.c.l.b16 %v2595
  %v3187 = vunpack.c.h.b16 %v2595
  %v3188 = vunpack.c.l.b16 %v2596
  %v3189 = vunpack.c.h.b16 %v2596
  %v3190 = vunpack.c.l.b16 %v2597
  %v3191 = vunpack.c.h.b16 %v2597
  %v3192 = vunpack.c.l.b16 %v2598
  %v3193 = vunpack.c.h.b16 %v2598
  %v3194 = vunpack.c.l.b16 %v2599
  %v3195 = vunpack.c.h.b16 %v2599
  %v3196 = vunpack.c.l.b16 %v2600
  %v3197 = vunpack.c.h.b16 %v2600
  %v3198 = vunpack.c.l.b16 %v2601
  %v3199 = vunpack.c.h.b16 %v2601
  %v3200 = vunpack.c.l.b16 %v2602
  %v3201 = vunpack.c.h.b16 %v2602
  %v3202 = vunpack.c.l.b16 %v2603
  %v3203 = vunpack.c.h.b16 %v2603
  %v3204 = vunpack.c.l.b16 %v2604
  %v3205 = vunpack.c.h.b16 %v2604
  %v3206 = vunpack.c.l.b16 %v2605
  %v3207 = vunpack.c.h.b16 %v2605
  %v3208 = vunpack.c.l.b16 %v2606
  %v3209 = vunpack.c.h.b16 %v2606
  %v3210 = vunpack.c.l.b16 %v2607
  %v3211 = vunpack.c.h.b16 %v2607
  %v3212 = vunpack.c.l.b16 %v2608
  %v3213 = vunpack.c.h.b16 %v2608
  %v3214 = vunpack.c.l.b16 %v2609
  %v3215 = vunpack.c.h.b16 %v2609
  %v3216 = vunpack.c.l.b16 %v2610
  %v3217 = vunpack.c.h.b16 %v2610
  %v3218 = vunpack.c.l.b16 %v2611
  %v3219 = vunpack.c.h.b16 %v2611
  %v3220 = vpack.c.b16 %v2842, %v2836
  %v3221 = vpack.c.b16 %v2843, %v2837
  %v3222 = vpack.c.b16 %v2844, %v2838
  %v3223 = vpack.c.b16 %v2845, %v2839
  %v3224 = vpack.c.b16 %v2846, %v2840
  %v3225 = vpack.c.b16 %v2847, %v2841
  %v3226 = vpack.c.b16 %v2854, %v2848
  %v3227 = vpack.c.b16 %v2855, %v2849
  %v3228 = vpack.c.b16 %v2856, %v2850
  %v3229 = vpack.c.b16 %v2857, %v2851
  %v3230 = vpack.c.b16 %v2858, %v2852
  %v3231 = vpack.c.b16 %v2859, %v2853
  %v3232 = vpack.c.b16 %v2866, %v2860
  %v3233 = vpack.c.b16 %v2867, %v2861
  %v3234 = vpack.c.b16 %v2868, %v2862
  %v3235 = vpack.c.b16 %v2869, %v2863
  %v3236 = vpack.c.b16 %v2870, %v2864
  %v3237 = vpack.c.b16 %v2871, %v2865
  %v3238 = vpack.c.b16 %v2878, %v2872
  %v3239 = vpack.c.b16 %v2879, %v2873
  %v3240 = vpack.c.b16 %v2880, %v2874
  %v3241 = vpack.c.b16 %v2881, %v2875
  %v3242 = vpack.c.b16 %v2882, %v2876
  %v3243 = vpack.c.b16 %v2883, %v2877
  %v3244 = vpack.c.b16 %v2890, %v2884
  %v3245 = vpack.c.b16 %v2891, %v2885
  %v3246 = vpack.c.b16 %v2892, %v2886
  %v3247 = vpack.c.b16 %v2893, %v2887
  %v3248 = vpack.c.b16 %v2894, %v2888
  %v3249 = vpack.c.b16 %v2895, %v2889
  %v3250 = vpack.c.b16 %v2902, %v2896
  %v3251 = vpack.c.b16 %v2903, %v2897
  %v3252 = vpack.c.b16 %v2904, %v2898
  %v3253 = vpack.c.b16 %v2905, %v2899
  %v3254 = vpack.c.b16 %v2906, %v2900
  %v3255 = vpack.c.b16 %v2907, %v2901
  %v3256 = vpack.c.b16 %v2914, %v2908
  %v3257 = vpack.c.b16 %v2915, %v2909
  %v3258 = vpack.c.b16 %v2916, %v2910
  %v3259 = vpack.c.b16 %v2917, %v2911
  %v3260 = vpack.c.b16 %v2918, %v2912
  %v3261 = vpack.c.b16 %v2919, %v2913
  %v3262 = vpack.c.b16 %v2926, %v2920
  %v3263 = vpack.c.b16 %v2927, %v2921
  %v3264 = vpack.c.b16 %v2928, %v2922
  %v3265 = vpack.c.b16 %v2929, %v2923
  %v3266 = vpack.c.b16 %v2930, %v2924
  %v3267 = vpack.c.b16 %v2931, %v2925
  %v3268 = vpack.c.b16 %v2938, %v2932
  %v3269 = vpack.c.b16 %v2939, %v2933
  %v3270 = vpack.c.b16 %v2940, %v2934
  %v3271 = vpack.c.b16 %v2941, %v2935
  %v3272 = vpack.c.b16 %v2942, %v2936
  %v3273 = vpack.c.b16 %v2943, %v2937
  %v3274 = vpack.c.b16 %v2950, %v2944
  %v3275 = vpack.c.b16 %v2951, %v2945
  %v3276 = vpack.c.b16 %v2952, %v2946
  %v3277 = vpack.c.b16 %v2953, %v2947
  %v3278 = vpack.c.b16 %v2954, %v2948
  %v3279 = vpack.c.b16 %v2955, %v2949
  %v3280 = vpack.c.b16 %v2962, %v2956
  %v3281 = vpack.c.b16 %v2963, %v2957
  %v3282 = vpack.c.b16 %v2964, %v2958
  %v3283 = vpack.c.b16 %v2965, %v2959
  %v3284 = vpack.c.b16 %v2966, %v2960
  %v3285 = vpack.c.b16 %v2967, %v2961
  %v3286 = vpack.c.b16 %v2974, %v2968
  %v3287 = vpack.c.b16 %v2975, %v2969
  %v3288 = vpack.c.b16 %v2976, %v2970
  %v3289 = vpack.c.b16 %v2977, %v2971
  %v3290 = vpack.c.b16 %v2978, %v2972
  %v3291 = vpack.c.b16 %v2979, %v2973
  %v3292 = vpack.c.b16 %v2986, %v2980
  %v3293 = vpack.c.b16 %v2987, %v2981
  %v3294 = vpack.c.b16 %v2988, %v2982
  %v3295 = vpack.c.b16 %v2989, %v2983
  %v3296 = vpack.c.b16 %v2990, %v2984
  %v3297 = vpack.c.b16 %v2991, %v2985
  %v3298 = vpack.c.b16 %v2998, %v2992
  %v3299 = vpack.c.b16 %v2999, %v2993
  %v3300 = vpack.c.b16 %v3000, %v2994
  %v3301 = vpack.c.b16 %v3001, %v2995
  %v3302 = vpack.c.b16 %v3002, %v2996
  %v3303 = vpack.c.b16 %v3003, %v2997
  %v3304 = vpack.c.b16 %v3010, %v3004
  %v3305 = vpack.c.b16 %v3011, %v3005
  %v3306 = vpack.c.b16 %v3012, %v3006
  %v3307 = vpack.c.b16 %v3013, %v3007
  %v3308 = vpack.c.b16 %v3014, %v3008
  %v3309 = vpack.c.b16 %v3015, %v3009
  %v3310 = vpack.c.b16 %v3022, %v3016
  %v3311 = vpack.c.b16 %v3023, %v3017
  %v3312 = vpack.c.b16 %v3024, %v3018
  %v3313 = vpack.c.b16 %v3025, %v3019
  %v3314 = vpack.c.b16 %v3026, %v3020
  %v3315 = vpack.c.b16 %v3027, %v3021
  %v3316 = vpack.c.b16 %v3034, %v3028
  %v3317 = vpack.c.b16 %v3035, %v3029
  %v3318 = vpack.c.b16 %v3036, %v3030
  %v3319 = vpack.c.b16 %v3037, %v3031
  %v3320 = vpack.c.b16 %v3038, %v3032
  %v3321 = vpack.c.b16 %v3039, %v3033
  %v3322 = vpack.c.b16 %v3046, %v3040
  %v3323 = vpack.c.b16 %v3047, %v3041
  %v3324 = vpack.c.b16 %v3048, %v3042
  %v3325 = vpack.c.b16 %v3049, %v3043
  %v3326 = vpack.c.b16 %v3050, %v3044
  %v3327 = vpack.c.b16 %v3051, %v3045
  %v3328 = vpack.c.b16 %v3058, %v3052
  %v3329 = vpack.c.b16 %v3059, %v3053
  %v3330 = vpack.c.b16 %v3060, %v3054
  %v3331 = vpack.c.b16 %v3061, %v3055
  %v3332 = vpack.c.b16 %v3062, %v3056
  %v3333 = vpack.c.b16 %v3063, %v3057
  %v3334 = vpack.c.b16 %v3070, %v3064
  %v3335 = vpack.c.b16 %v3071, %v3065
  %v3336 = vpack.c.b16 %v3072, %v3066
  %v3337 = vpack.c.b16 %v3073, %v3067
  %v3338 = vpack.c.b16 %v3074, %v3068
  %v3339 = vpack.c.b16 %v3075, %v3069
  %v3340 = vpack.c.b16 %v3082, %v3076
  %v3341 = vpack.c.b16 %v3083, %v3077
  %v3342 = vpack.c.b16 %v3084, %v3078
  %v3343 = vpack.c.b16 %v3085, %v3079
  %v3344 = vpack.c.b16 %v3086, %v3080
  %v3345 = vpack.c.b16 %v3087, %v3081
  %v3346 = vpack.c.b16 %v3094, %v3088
  %v3347 = vpack.c.b16 %v3095, %v3089
  %v3348 = vpack.c.b16 %v3096, %v3090
  %v3349 = vpack.c.b16 %v3097, %v3091
  %v3350 = vpack.c.b16 %v3098, %v3092
  %v3351 = vpack.c.b16 %v3099, %v3093
  %v3352 = vpack.c.b16 %v3106, %v3100
  %v3353 = vpack.c.b16 %v3107, %v3101
  %v3354 = vpack.c.b16 %v3108, %v3102
  %v3355 = vpack.c.b16 %v3109, %v3103
  %v3356 = vpack.c.b16 %v3110, %v3104
  %v3357 = vpack.c.b16 %v3111, %v3105
  %v3358 = vpack.c.b16 %v3118, %v3112
  %v3359 = vpack.c.b16 %v3119, %v3113
  %v3360 = vpack.c.b16 %v3120, %v3114
  %v3361 = vpack.c.b16 %v3121, %v3115
  %v3362 = vpack.c.b16 %v3122, %v3116
  %v3363 = vpack.c.b16 %v3123, %v3117
  %v3364 = vpack.c.b16 %v3130, %v3124
  %v3365 = vpack.c.b16 %v3131, %v3125
  %v3366 = vpack.c.b16 %v3132, %v3126
  %v3367 = vpack.c.b16 %v3133, %v3127
  %v3368 = vpack.c.b16 %v3134, %v3128
  %v3369 = vpack.c.b16 %v3135, %v3129
  %v3370 = vpack.c.b16 %v3142, %v3136
  %v3371 = vpack.c.b16 %v3143, %v3137
  %v3372 = vpack.c.b16 %v3144, %v3138
  %v3373 = vpack.c.b16 %v3145, %v3139
  %v3374 = vpack.c.b16 %v3146, %v3140
  %v3375 = vpack.c.b16 %v3147, %v3141
  %v3376 = vpack.c.b16 %v3154, %v3148
  %v3377 = vpack.c.b16 %v3155, %v3149
  %v3378 = vpack.c.b16 %v3156, %v3150
  %v3379 = vpack.c.b16 %v3157, %v3151
  %v3380 = vpack.c.b16 %v3158, %v3152
  %v3381 = vpack.c.b16 %v3159, %v3153
  %v3382 = vpack.c.b16 %v3166, %v3160
  %v3383 = vpack.c.b16 %v3167, %v3161
  %v3384 = vpack.c.b16 %v3168, %v3162
  %v3385 = vpack.c.b16 %v3169, %v3163
  %v3386 = vpack.c.b16 %v3170, %v3164
  %v3387 = vpack.c.b16 %v3171, %v3165
  %v3388 = vpack.c.b16 %v3178, %v3172
  %v3389 = vpack.c.b16 %v3179, %v3173
  %v3390 = vpack.c.b16 %v3180, %v3174
  %v3391 = vpack.c.b16 %v3181, %v3175
  %v3392 = vpack.c.b16 %v3182, %v3176
  %v3393 = vpack.c.b16 %v3183, %v3177
  %v3394 = vpack.c.b16 %v3190, %v3184
  %v3395 = vpack.c.b16 %v3191, %v3185
  %v3396 = vpack.c.b16 %v3192, %v3186
  %v3397 = vpack.c.b16 %v3193, %v3187
  %v3398 = vpack.c.b16 %v3194, %v3188
  %v3399 = vpack.c.b16 %v3195, %v3189
  %v3400 = vpack.c.b16 %v3202, %v3196
  %v3401 = vpack.c.b16 %v3203, %v3197
  %v3402 = vpack.c.b16 %v3204, %v3198
  %v3403 = vpack.c.b16 %v3205, %v3199
  %v3404 = vpack.c.b16 %v3206, %v3200
  %v3405 = vpack.c.b16 %v3207, %v3201
  %v3406 = vpack.c.b16 %v3214, %v3208
  %v3407 = vpack.c.b16 %v3215, %v3209
  %v3408 = vpack.c.b16 %v3216, %v3210
  %v3409 = vpack.c.b16 %v3217, %v3211
  %v3410 = vpack.c.b16 %v3218, %v3212
  %v3411 = vpack.c.b16 %v3219, %v3213
  %3604 = vmatprep.subr.bf16.mxu0 %v3263
  %3605 = vmatpush1.bf16.msra.mxu0 %v3262
  %3606 = vmatprep.subr.bf16.mxu0 %v3257
  %3607 = vmatpush1.bf16.msra.mxu0 %v3256
  %3608 = vmatprep.subr.bf16.mxu0 %v3251
  %3609 = vmatpush1.bf16.msra.mxu0 %v3250
  %3610 = vmatprep.subr.bf16.mxu0 %v3245
  %3611 = vmatpush1.bf16.msra.mxu0 %v3244
  %3612 = vmatprep.subr.bf16.mxu0 %v3239
  %3613 = vmatpush1.bf16.msra.mxu0 %v3238
  %3614 = vmatprep.subr.bf16.mxu0 %v3233
  %3615 = vmatpush1.bf16.msra.mxu0 %v3232
  %3616 = vmatprep.subr.bf16.mxu0 %v3227
  %3617 = vmatpush1.bf16.msra.mxu0 %v3226
  %3618 = vmatprep.subr.bf16.mxu0 %v3221
  %3619 = vmatpush1.bf16.msra.mxu0 %v3220
  %3620 = vmatprep.subr.bf16.mxu0 %v3311
  %3621 = vmatpush2.bf16.msra.mxu0 %v3310
  %3622 = vmatprep.subr.bf16.mxu0 %v3305
  %3623 = vmatpush2.bf16.msra.mxu0 %v3304
  %3624 = vmatprep.subr.bf16.mxu0 %v3299
  %3625 = vmatpush2.bf16.msra.mxu0 %v3298
  %3626 = vmatprep.subr.bf16.mxu0 %v3293
  %3627 = vmatpush2.bf16.msra.mxu0 %v3292
  %3628 = vmatprep.subr.bf16.mxu0 %v3287
  %3629 = vmatpush2.bf16.msra.mxu0 %v3286
  %3630 = vmatprep.subr.bf16.mxu0 %v3281
  %3631 = vmatpush2.bf16.msra.mxu0 %v3280
  %3632 = vmatprep.subr.bf16.mxu0 %v3275
  %3633 = vmatpush2.bf16.msra.mxu0 %v3274
  %3634 = vmatprep.subr.bf16.mxu0 %v3269
  %3635 = vmatpush2.bf16.msra.mxu0 %v3268
  %3636 = vmatprep.mubr.bf16.mxu0 %v2417
  %3637 = vmatmul.mubr.bf16.gmra.mxu0 %v2416
  %v3638 = vpop.f32.mrf.mxu0
  %v3639 = vadd.f32 %v2617, %v3638
  %v3640 = vpop.f32.mrf.mxu0
  %v3641 = vadd.f32 %v2621, %v3640
  %v3642 = vpop.f32.mrf.mxu0
  %v3643 = vpop.f32.mrf.mxu0
  %3644 = vdwg.mxu0
  %3645 = vmatprep.subr.bf16.mxu0 %v3359
  %3646 = vmatpush1.bf16.msra.mxu0 %v3358
  %3647 = vmatprep.subr.bf16.mxu0 %v3353
  %3648 = vmatpush1.bf16.msra.mxu0 %v3352
  %3649 = vmatprep.subr.bf16.mxu0 %v3347
  %3650 = vmatpush1.bf16.msra.mxu0 %v3346
  %3651 = vmatprep.subr.bf16.mxu0 %v3341
  %3652 = vmatpush1.bf16.msra.mxu0 %v3340
  %3653 = vmatprep.subr.bf16.mxu0 %v3335
  %3654 = vmatpush1.bf16.msra.mxu0 %v3334
  %3655 = vmatprep.subr.bf16.mxu0 %v3329
  %3656 = vmatpush1.bf16.msra.mxu0 %v3328
  %3657 = vmatprep.subr.bf16.mxu0 %v3323
  %3658 = vmatpush1.bf16.msra.mxu0 %v3322
  %3659 = vmatprep.subr.bf16.mxu0 %v3317
  %3660 = vmatpush1.bf16.msra.mxu0 %v3316
  %3661 = vmatprep.subr.bf16.mxu0 %v3407
  %3662 = vmatpush2.bf16.msra.mxu0 %v3406
  %3663 = vmatprep.subr.bf16.mxu0 %v3401
  %3664 = vmatpush2.bf16.msra.mxu0 %v3400
  %3665 = vmatprep.subr.bf16.mxu0 %v3395
  %3666 = vmatpush2.bf16.msra.mxu0 %v3394
  %3667 = vmatprep.subr.bf16.mxu0 %v3389
  %3668 = vmatpush2.bf16.msra.mxu0 %v3388
  %3669 = vmatprep.subr.bf16.mxu0 %v3383
  %3670 = vmatpush2.bf16.msra.mxu0 %v3382
  %3671 = vmatprep.subr.bf16.mxu0 %v3377
  %3672 = vmatpush2.bf16.msra.mxu0 %v3376
  %3673 = vmatprep.subr.bf16.mxu0 %v3371
  %3674 = vmatpush2.bf16.msra.mxu0 %v3370
  %3675 = vmatprep.subr.bf16.mxu0 %v3365
  %3676 = vmatpush2.bf16.msra.mxu0 %v3364
  %3677 = vmatprep.mubr.bf16.mxu0 %v2419
  %3678 = vmatmul.mubr.bf16.gmra.mxu0 %v2418
  %v3679 = vpop.f32.mrf.mxu0
  %v3680 = vadd.f32 %v3639, %v3679
  %v3681 = vpop.f32.mrf.mxu0
  %v3682 = vadd.f32 %v3641, %v3681
  %v3683 = vpop.f32.mrf.mxu0
  %v3684 = vpop.f32.mrf.mxu0
  %3685 = vdwg.mxu0
  %3686 = vmatprep.subr.bf16.mxu0 %v3265
  %3687 = vmatpush1.bf16.msra.mxu0 %v3264
  %3688 = vmatprep.subr.bf16.mxu0 %v3259
  %3689 = vmatpush1.bf16.msra.mxu0 %v3258
  %3690 = vmatprep.subr.bf16.mxu0 %v3253
  %3691 = vmatpush1.bf16.msra.mxu0 %v3252
  %3692 = vmatprep.subr.bf16.mxu0 %v3247
  %3693 = vmatpush1.bf16.msra.mxu0 %v3246
  %3694 = vmatprep.subr.bf16.mxu0 %v3241
  %3695 = vmatpush1.bf16.msra.mxu0 %v3240
  %3696 = vmatprep.subr.bf16.mxu0 %v3235
  %3697 = vmatpush1.bf16.msra.mxu0 %v3234
  %3698 = vmatprep.subr.bf16.mxu0 %v3229
  %3699 = vmatpush1.bf16.msra.mxu0 %v3228
  %3700 = vmatprep.subr.bf16.mxu0 %v3223
  %3701 = vmatpush1.bf16.msra.mxu0 %v3222
  %3702 = vmatprep.subr.bf16.mxu0 %v3313
  %3703 = vmatpush2.bf16.msra.mxu0 %v3312
  %3704 = vmatprep.subr.bf16.mxu0 %v3307
  %3705 = vmatpush2.bf16.msra.mxu0 %v3306
  %3706 = vmatprep.subr.bf16.mxu0 %v3301
  %3707 = vmatpush2.bf16.msra.mxu0 %v3300
  %3708 = vmatprep.subr.bf16.mxu0 %v3295
  %3709 = vmatpush2.bf16.msra.mxu0 %v3294
  %3710 = vmatprep.subr.bf16.mxu0 %v3289
  %3711 = vmatpush2.bf16.msra.mxu0 %v3288
  %3712 = vmatprep.subr.bf16.mxu0 %v3283
  %3713 = vmatpush2.bf16.msra.mxu0 %v3282
  %3714 = vmatprep.subr.bf16.mxu0 %v3277
  %3715 = vmatpush2.bf16.msra.mxu0 %v3276
  %3716 = vmatprep.subr.bf16.mxu0 %v3271
  %3717 = vmatpush2.bf16.msra.mxu0 %v3270
  %3718 = vmatprep.mubr.bf16.mxu0 %v2417
  %3719 = vmatmul.mubr.bf16.gmra.mxu0 %v2416
  %v3720 = vpop.f32.mrf.mxu0
  %v3721 = vadd.f32 %v2625, %v3720
  %v3722 = vpop.f32.mrf.mxu0
  %v3723 = vadd.f32 %v2629, %v3722
  %v3724 = vpop.f32.mrf.mxu0
  %v3725 = vpop.f32.mrf.mxu0
  %3726 = vdwg.mxu0
  %3727 = vmatprep.subr.bf16.mxu0 %v3361
  %3728 = vmatpush1.bf16.msra.mxu0 %v3360
  %3729 = vmatprep.subr.bf16.mxu0 %v3355
  %3730 = vmatpush1.bf16.msra.mxu0 %v3354
  %3731 = vmatprep.subr.bf16.mxu0 %v3349
  %3732 = vmatpush1.bf16.msra.mxu0 %v3348
  %3733 = vmatprep.subr.bf16.mxu0 %v3343
  %3734 = vmatpush1.bf16.msra.mxu0 %v3342
  %3735 = vmatprep.subr.bf16.mxu0 %v3337
  %3736 = vmatpush1.bf16.msra.mxu0 %v3336
  %3737 = vmatprep.subr.bf16.mxu0 %v3331
  %3738 = vmatpush1.bf16.msra.mxu0 %v3330
  %3739 = vmatprep.subr.bf16.mxu0 %v3325
  %3740 = vmatpush1.bf16.msra.mxu0 %v3324
  %3741 = vmatprep.subr.bf16.mxu0 %v3319
  %3742 = vmatpush1.bf16.msra.mxu0 %v3318
  %3743 = vmatprep.subr.bf16.mxu0 %v3409
  %3744 = vmatpush2.bf16.msra.mxu0 %v3408
  %3745 = vmatprep.subr.bf16.mxu0 %v3403
  %3746 = vmatpush2.bf16.msra.mxu0 %v3402
  %3747 = vmatprep.subr.bf16.mxu0 %v3397
  %3748 = vmatpush2.bf16.msra.mxu0 %v3396
  %3749 = vmatprep.subr.bf16.mxu0 %v3391
  %3750 = vmatpush2.bf16.msra.mxu0 %v3390
  %3751 = vmatprep.subr.bf16.mxu0 %v3385
  %3752 = vmatpush2.bf16.msra.mxu0 %v3384
  %3753 = vmatprep.subr.bf16.mxu0 %v3379
  %3754 = vmatpush2.bf16.msra.mxu0 %v3378
  %3755 = vmatprep.subr.bf16.mxu0 %v3373
  %3756 = vmatpush2.bf16.msra.mxu0 %v3372
  %3757 = vmatprep.subr.bf16.mxu0 %v3367
  %3758 = vmatpush2.bf16.msra.mxu0 %v3366
  %3759 = vmatprep.mubr.bf16.mxu0 %v2419
  %3760 = vmatmul.mubr.bf16.gmra.mxu0 %v2418
  %v3761 = vpop.f32.mrf.mxu0
  %v3762 = vadd.f32 %v3721, %v3761
  %v3763 = vpop.f32.mrf.mxu0
  %v3764 = vadd.f32 %v3723, %v3763
  %v3765 = vpop.f32.mrf.mxu0
  %v3766 = vpop.f32.mrf.mxu0
  %3767 = vdwg.mxu0
  %3768 = vmatprep.subr.bf16.mxu0 %v3267
  %3769 = vmatpush1.bf16.msra.mxu0 %v3266
  %3770 = vmatprep.subr.bf16.mxu0 %v3261
  %3771 = vmatpush1.bf16.msra.mxu0 %v3260
  %3772 = vmatprep.subr.bf16.mxu0 %v3255
  %3773 = vmatpush1.bf16.msra.mxu0 %v3254
  %3774 = vmatprep.subr.bf16.mxu0 %v3249
  %3775 = vmatpush1.bf16.msra.mxu0 %v3248
  %3776 = vmatprep.subr.bf16.mxu0 %v3243
  %3777 = vmatpush1.bf16.msra.mxu0 %v3242
  %3778 = vmatprep.subr.bf16.mxu0 %v3237
  %3779 = vmatpush1.bf16.msra.mxu0 %v3236
  %3780 = vmatprep.subr.bf16.mxu0 %v3231
  %3781 = vmatpush1.bf16.msra.mxu0 %v3230
  %3782 = vmatprep.subr.bf16.mxu0 %v3225
  %3783 = vmatpush1.bf16.msra.mxu0 %v3224
  %3784 = vmatprep.subr.bf16.mxu0 %v3315
  %3785 = vmatpush2.bf16.msra.mxu0 %v3314
  %3786 = vmatprep.subr.bf16.mxu0 %v3309
  %3787 = vmatpush2.bf16.msra.mxu0 %v3308
  %3788 = vmatprep.subr.bf16.mxu0 %v3303
  %3789 = vmatpush2.bf16.msra.mxu0 %v3302
  %3790 = vmatprep.subr.bf16.mxu0 %v3297
  %3791 = vmatpush2.bf16.msra.mxu0 %v3296
  %3792 = vmatprep.subr.bf16.mxu0 %v3291
  %3793 = vmatpush2.bf16.msra.mxu0 %v3290
  %3794 = vmatprep.subr.bf16.mxu0 %v3285
  %3795 = vmatpush2.bf16.msra.mxu0 %v3284
  %3796 = vmatprep.subr.bf16.mxu0 %v3279
  %3797 = vmatpush2.bf16.msra.mxu0 %v3278
  %3798 = vmatprep.subr.bf16.mxu0 %v3273
  %3799 = vmatpush2.bf16.msra.mxu0 %v3272
  %3800 = vmatprep.mubr.bf16.mxu0 %v2417
  %3801 = vmatmul.mubr.bf16.gmra.mxu0 %v2416
  %v3802 = vpop.f32.mrf.mxu0
  %v3803 = vadd.f32 %v2633, %v3802
  %v3804 = vpop.f32.mrf.mxu0
  %v3805 = vadd.f32 %v2637, %v3804
  %v3806 = vpop.f32.mrf.mxu0
  %v3807 = vpop.f32.mrf.mxu0
  %3808 = vdwg.mxu0
  %3809 = vmatprep.subr.bf16.mxu0 %v3363
  %3810 = vmatpush1.bf16.msra.mxu0 %v3362
  %3811 = vmatprep.subr.bf16.mxu0 %v3357
  %3812 = vmatpush1.bf16.msra.mxu0 %v3356
  %3813 = vmatprep.subr.bf16.mxu0 %v3351
  %3814 = vmatpush1.bf16.msra.mxu0 %v3350
  %3815 = vmatprep.subr.bf16.mxu0 %v3345
  %3816 = vmatpush1.bf16.msra.mxu0 %v3344
  %3817 = vmatprep.subr.bf16.mxu0 %v3339
  %3818 = vmatpush1.bf16.msra.mxu0 %v3338
  %3819 = vmatprep.subr.bf16.mxu0 %v3333
  %3820 = vmatpush1.bf16.msra.mxu0 %v3332
  %3821 = vmatprep.subr.bf16.mxu0 %v3327
  %3822 = vmatpush1.bf16.msra.mxu0 %v3326
  %3823 = vmatprep.subr.bf16.mxu0 %v3321
  %3824 = vmatpush1.bf16.msra.mxu0 %v3320
  %3825 = vmatprep.subr.bf16.mxu0 %v3411
  %3826 = vmatpush2.bf16.msra.mxu0 %v3410
  %3827 = vmatprep.subr.bf16.mxu0 %v3405
  %3828 = vmatpush2.bf16.msra.mxu0 %v3404
  %3829 = vmatprep.subr.bf16.mxu0 %v3399
  %3830 = vmatpush2.bf16.msra.mxu0 %v3398
  %3831 = vmatprep.subr.bf16.mxu0 %v3393
  %3832 = vmatpush2.bf16.msra.mxu0 %v3392
  %3833 = vmatprep.subr.bf16.mxu0 %v3387
  %3834 = vmatpush2.bf16.msra.mxu0 %v3386
  %3835 = vmatprep.subr.bf16.mxu0 %v3381
  %3836 = vmatpush2.bf16.msra.mxu0 %v3380
  %3837 = vmatprep.subr.bf16.mxu0 %v3375
  %3838 = vmatpush2.bf16.msra.mxu0 %v3374
  %3839 = vmatprep.subr.bf16.mxu0 %v3369
  %3840 = vmatpush2.bf16.msra.mxu0 %v3368
  %3841 = vmatprep.mubr.bf16.mxu0 %v2419
  %3842 = vmatmul.mubr.bf16.gmra.mxu0 %v2418
  %v3843 = vpop.f32.mrf.mxu0
  %v3844 = vadd.f32 %v3803, %v3843
  %v3845 = vpop.f32.mrf.mxu0
  %v3846 = vadd.f32 %v3805, %v3845
  %v3847 = vpop.f32.mrf.mxu0
  %v3848 = vpop.f32.mrf.mxu0
  %3849 = vdwg.mxu0
  %v3850 = vxor.u32 %v3680, 2147483648
  %v3851 = vxor.u32 %v3682, 2147483648
  %v3852 = vxor.u32 %v3762, 2147483648
  %v3853 = vxor.u32 %v3764, 2147483648
  %v3854 = vxor.u32 %v3844, 2147483648
  %v3855 = vxor.u32 %v3846, 2147483648
  %v3856 = vmul.f32 %v3850, 1.442695
  %v3857 = vpow.pop %v3856
  %v3858 = vmul.f32 %v3851, 1.442695
  %v3859 = vpow.pop %v3858
  %v3860 = vmul.f32 %v3852, 1.442695
  %v3861 = vpow.pop %v3860
  %v3862 = vmul.f32 %v3853, 1.442695
  %v3863 = vpow.pop %v3862
  %v3864 = vmul.f32 %v3854, 1.442695
  %v3865 = vpow.pop %v3864
  %v3866 = vmul.f32 %v3855, 1.442695
  %v3867 = vpow.pop %v3866
  %v3868 = vadd.f32 %v3857, 1.0
  %v3869 = vadd.f32 %v3859, 1.0
  %v3870 = vadd.f32 %v3861, 1.0
  %v3871 = vadd.f32 %v3863, 1.0
  %v3872 = vadd.f32 %v3865, 1.0
  %v3873 = vadd.f32 %v3867, 1.0
  %v3874 = vrcp.pop %v3868
  %v3875 = vmul.f32 1.0, %v3874
  %v3876 = vrcp.pop %v3869
  %v3877 = vmul.f32 1.0, %v3876
  %v3878 = vrcp.pop %v3870
  %v3879 = vmul.f32 1.0, %v3878
  %v3880 = vrcp.pop %v3871
  %v3881 = vmul.f32 1.0, %v3880
  %v3882 = vrcp.pop %v3872
  %v3883 = vmul.f32 1.0, %v3882
  %v3884 = vrcp.pop %v3873
  %v3885 = vmul.f32 1.0, %v3884
  %3886 = vst [vmem:[%s14] sm:$0xff] %v3875
  %3887 = vst [vmem:[%s14 + $0x8] sm:$0xff] %v3877
  %3888 = vst [vmem:[%s14 + $0x10] sm:$0xff] %v3879
  %3889 = vst [vmem:[%s14 + $0x18] sm:$0xff] %v3881
  %3890 = vst [vmem:[%s14 + $0x20] sm:$0xff] %v3883
  %3891 = vst [vmem:[%s14 + $0x28] sm:$0xff] %v3885
  %3892 = vst [vmem:[%s15] sm:$0xff] %v1990
  %3893 = vst [vmem:[%s15 + $0x8] sm:$0xff] %v1992
  // Predicated region
  $region58: #{vae_forward.1} parent=0 // pred_check
    _
  $region59: #{vae_forward.1} parent=0 // pred_check_branch
    %3895 = sbr.rel (0) target = $region61
  $region60: #{vae_forward.1} parent=0 // pred_region
    _
  $region61: #{vae_forward.1} parent=0 // pred_fallthru
    _
  // Predicated region
  $region62: #{vae_forward.1} parent=0 // pred_check
    _
  $region63: #{vae_forward.1} parent=0 // pred_check_branch
    %3897 = sbr.rel (0) target = $region65
  $region64: #{vae_forward.1} parent=0 // pred_region
    _
  $region65: #{vae_forward.1} parent=0 // pred_fallthru
    _
  // Predicated region
  $region66: #{vae_forward.1} parent=0 // pred_check
    _
  $region67: #{vae_forward.1} parent=0 // pred_check_branch
    %3899 = sbr.rel (0) target = $region69
  $region68: #{vae_forward.1} parent=0 // pred_region
    _
  $region69: #{vae_forward.1} parent=0 // pred_fallthru
    _
  // Predicated region
  $region70: #{vae_forward.1} parent=0 // pred_check
    _
  $region71: #{vae_forward.1} parent=0 // pred_check_branch
    %3901 = sbr.rel (0) target = $region73
  $region72: #{vae_forward.1} parent=0 // pred_region
    _
  $region73: #{vae_forward.1} parent=0 // pred_fallthru
    _

</llo_original>
